<compile_context>
chip_gen: v7x
topology: tpu7x:2x2x1
jax: 0.10.0
libtpu: 0.0.40
codegen_flags: <defaults>
</compile_context>

<pallas_src>
import math
import functools

import jax
import jax.numpy as jnp
from jax import lax
from jax.experimental import pallas as pl
from jax.experimental.pallas import tpu as pltpu


def _assigner_kernel(pd_scores_ref, pd_bboxes_t_ref, anc_t_ref, gt_labels_ref,
                     gt_bboxes_ref, mask_gt_ref, atan_gt_ref, atan_pd_ref,
                     tb_t_ref, ts_t_ref, pk_ref,
                     *, topk, eps, use_tri):
    f32 = jnp.float32
    b_tile, na, nc = pd_scores_ref.shape
    ngt = gt_bboxes_ref.shape[1]
    e = jnp.float32(1e-7)

    anc = anc_t_ref[...]                                   # (2, na)
    anc_x, anc_y = anc[0:1, :], anc[1:2, :]

    # grid-step invariants hoisted out of the per-batch loop
    row_iota = lax.broadcasted_iota(jnp.int32, (ngt, na), 0)
    cls_iota = lax.broadcasted_iota(jnp.int32, (ngt, nc), 1)
    pk_row = lax.broadcasted_iota(jnp.int32, (3, na), 0)
    if use_tri:
        # strict lower triangle: tri[i, j] = 1 iff i < j
        tri = (lax.broadcasted_iota(jnp.int32, (na, na), 0) <
               lax.broadcasted_iota(jnp.int32, (na, na), 1)).astype(f32)
    else:
        col_iota = lax.broadcasted_iota(jnp.int32, (ngt, na), 1)

    for bi in range(b_tile):
        pd_scores = pd_scores_ref[bi]                      # (na, nc)
        pd_b = pd_bboxes_t_ref[bi]                         # (4, na)  rows: x1,y1,x2,y2
        gt_labels = gt_labels_ref[bi]                      # (ngt, 1) int32
        gt_b = gt_bboxes_ref[bi]                           # (ngt, 4)
        mask_gt = mask_gt_ref[bi]                          # (ngt, 1)
        atan_gt = atan_gt_ref[bi]                          # (ngt, 1)
        atan_pd = atan_pd_ref[bi]                          # (1, na)

        # ---- bbox_scores = pd_scores gathered at gt class labels -> (ngt, na) -------
        gt_onehot = (cls_iota == gt_labels).astype(f32)                   # (ngt, nc)
        bbox_scores = lax.dot_general(gt_onehot, pd_scores,
                                      (((1,), (1,)), ((), ())),
                                      preferred_element_type=f32)         # (ngt, na)

        # ---- pairwise CIoU (bbox_iou, xywh=False, CIoU=True, eps=1e-7), clamp(0) ----
        b1_x1, b1_y1 = gt_b[:, 0:1], gt_b[:, 1:2]
        b1_x2, b1_y2 = gt_b[:, 2:3], gt_b[:, 3:4]                         # (ngt, 1)
        b2_x1, b2_y1 = pd_b[0:1, :], pd_b[1:2, :]
        b2_x2, b2_y2 = pd_b[2:3, :], pd_b[3:4, :]                         # (1, na)
        w1, h1 = b1_x2 - b1_x1, b1_y2 - b1_y1 + e
        w2, h2 = b2_x2 - b2_x1, b2_y2 - b2_y1 + e
        inter = (jnp.maximum(jnp.minimum(b1_x2, b2_x2) - jnp.maximum(b1_x1, b2_x1), 0.0) *
                 jnp.maximum(jnp.minimum(b1_y2, b2_y2) - jnp.maximum(b1_y1, b2_y1), 0.0))
        union = w1 * h1 + w2 * h2 - inter + e
        iou = inter / union
        cw = jnp.maximum(b1_x2, b2_x2) - jnp.minimum(b1_x1, b2_x1)
        ch = jnp.maximum(b1_y2, b2_y2) - jnp.minimum(b1_y1, b2_y1)
        c2 = cw * cw + ch * ch + e
        rho2 = ((b2_x1 + b2_x2 - b1_x1 - b1_x2) ** 2 +
                (b2_y1 + b2_y2 - b1_y1 - b1_y2) ** 2) / 4.0
        # TODO(synk): atan has no guaranteed Mosaic lowering; per-box arctan(w/h) is
        # precomputed in the JAX wrapper (O(na+ngt)); the pairwise CIoU stays in-kernel.
        v = (4.0 / (math.pi ** 2)) * (atan_pd - atan_gt) ** 2             # (ngt, na)
        alpha_ciou = v / (v - iou + (1.0 + e))
        ciou = iou - (rho2 / c2 + v * alpha_ciou)
        overlaps = jnp.maximum(ciou, 0.0)                                 # (ngt, na)

        # ---- align_metric = scores^alpha * overlaps^beta (alpha=1, beta=6) ----------
        ov2 = overlaps * overlaps
        align_metric = bbox_scores * (ov2 * ov2 * ov2)

        # ---- select_candidates_in_gts (eps=1e-9) -------------------------------------
        dmin = jnp.minimum(jnp.minimum(anc_x - b1_x1, anc_y - b1_y1),
                           jnp.minimum(b1_x2 - anc_x, b1_y2 - anc_y))
        mask_in_gts = (dmin > 1e-9).astype(f32)                           # (ngt, na)

        # ---- select_topk_candidates: unrolled iterative argmax over anchor axis -----
        metrics = align_metric * mask_in_gts

        def topk_body(_, carry):
            work, sel_acc = carry
            row_max = jnp.max(work, axis=1, keepdims=True)     # 1 XLU reduction / iter
            if use_tri:
                is_max = (work == row_max).astype(f32)
                # cum[g, j] = #(max hits at lanes < j), computed on the MXU so no
                # second cross-lane reduction; keeps the lowest-index tie-break.
                cum = lax.dot_general(is_max, tri, (((1,), (0,)), ((), ())),
                                      preferred_element_type=f32)
                hit = is_max * (cum < 0.5).astype(f32)
            else:
                idx = jnp.min(jnp.where(work == row_max, col_iota, na),
                              axis=1, keepdims=True)
                hit = (col_iota == idx).astype(f32)
            return jnp.where(hit > 0, jnp.float32(-1e30), work), sel_acc + hit

        _, is_in_topk = lax.fori_loop(0, topk, topk_body,
                                      (metrics, jnp.zeros_like(metrics)),
                                      unroll=True)
        # topk_mask = mask_gt.repeat(topk).bool(): masked gt rows collapse to all-zero
        is_in_topk = is_in_topk * (mask_gt != 0).astype(f32)

        mask_pos = is_in_topk * mask_in_gts * mask_gt                     # (ngt, na)

        # ---- select_highest_overlaps --------------------------------------------------
        fg = jnp.sum(mask_pos, axis=0, keepdims=True)                     # (1, na)
        ov_max = jnp.max(overlaps, axis=0, keepdims=True)
        ov_arg = jnp.min(jnp.where(overlaps == ov_max, row_iota, ngt),
                         axis=0, keepdims=True)                           # first argmax
        is_max_over = (row_iota == ov_arg).astype(f32)
        mask_pos = jnp.where(fg > 1, is_max_over, mask_pos)
        fg = jnp.sum(mask_pos, axis=0, keepdims=True)                     # (1, na)
        mp_max = jnp.max(mask_pos, axis=0, keepdims=True)
        tgt_idx = jnp.min(jnp.where(mask_pos == mp_max, row_iota, ngt),
                          axis=0, keepdims=True)                          # (1, na) int32

        # ---- get_targets (lane-dense: anchors stay on the 128-lane axis) ------------
        sel = (row_iota == tgt_idx).astype(f32)                           # (ngt, na)
        target_labels = jnp.sum(sel * gt_labels.astype(f32),
                                axis=0, keepdims=True)                    # (1, na)
        tb_t_ref[bi] = lax.dot_general(gt_b, sel, (((0,), (0,)), ((), ())),
                                       preferred_element_type=f32)        # (4, na)

        # ---- normalisation of target_scores ------------------------------------------
        am = align_metric * mask_pos
        pos_align = jnp.max(am, axis=1, keepdims=True)                    # (ngt, 1)
        pos_over = jnp.max(overlaps * mask_pos, axis=1, keepdims=True)    # (ngt, 1)
        norm = jnp.max(am * pos_over / (pos_align + eps),
                       axis=0, keepdims=True)                             # (1, na)

        # target_scores^T = one_hot(label)^T gated by fg and scaled by norm; fold the
        # per-anchor scalars into the gt-selection matrix, then one lane-dense matmul.
        sel_scaled = sel * jnp.where(fg > 0, 1.0, 0.0) * norm             # (ngt, na)
        ts_t_ref[bi] = lax.dot_general(gt_onehot, sel_scaled,
                                       (((0,), (0,)), ((), ())),
                                       preferred_element_type=f32)        # (nc, na)

        # ---- packed thin rows: [target_labels; fg; target_gt_idx] as one int32 tile --
        labels_i = jnp.round(target_labels).astype(jnp.int32)             # (1, na)
        fg_i = jnp.round(fg).astype(jnp.int32)                            # (1, na)
        pk_ref[bi] = jnp.where(pk_row == 0, labels_i,
                               jnp.where(pk_row == 1, fg_i, tgt_idx))     # (3, na)


def task_aligned_assigner(pd_scores, pd_bboxes, anc_points, gt_labels, gt_bboxes,
                          mask_gt, *, topk=13, num_classes=80, alpha=1.0, beta=6.0,
                          eps=1e-9, b_tile=None):
    """JAX/Pallas equivalent of TaskAlignedAssigner.forward (roll_out_thr=0 path)."""
    bs, na, nc = pd_scores.shape
    ngt = gt_bboxes.shape[1]
    assert nc == num_classes
    assert alpha == 1.0 and beta == 6.0, "kernel specialises pow() to alpha=1, beta=6"
    assert 1 <= topk <= na

    if ngt == 0:  # degenerate no-gt path (plain JAX, matches the torch early-return)
        return (jnp.full((bs, na), num_classes, jnp.int32),
                jnp.zeros_like(pd_bboxes),
                jnp.zeros_like(pd_scores),
                jnp.zeros((bs, na), bool),
                jnp.zeros((bs, na), jnp.int32))

    # Batch tile: amortize per-grid-step overhead but keep >=2 grid steps when bs>=2
    # so the "parallel" batch axis can be sharded across v7x's two TensorCores.
    if b_tile is None:
        b_tile = 1
        for cand in (4, 2, 1):
            if bs % cand == 0 and bs // cand >= min(2, bs):
                b_tile = cand
                break
    assert bs % b_tile == 0, "b_tile must divide the batch size"
    # TODO(synk): at production sizes (na ~ 8400, nc padded) re-derive b_tile against
    # vmem_limit_bytes (v7x: 64 MiB physical / 32 MiB scoped VMEM, not 128 MiB).

    pd_scores = pd_scores.astype(jnp.float32)
    pd_bboxes = pd_bboxes.astype(jnp.float32)
    gt_bboxes = gt_bboxes.astype(jnp.float32)
    mask_gt = mask_gt.astype(jnp.float32)
    gt_labels_i = gt_labels.astype(jnp.int32).reshape(bs, ngt, 1)

    # glue: layout transforms + per-box arctan (see TODO in kernel)
    pd_bboxes_t = jnp.transpose(pd_bboxes, (0, 2, 1))                     # (bs, 4, na)
    anc_t = jnp.transpose(anc_points.astype(jnp.float32), (1, 0))         # (2, na)
    gw = gt_bboxes[..., 2] - gt_bboxes[..., 0]
    gh = gt_bboxes[..., 3] - gt_bboxes[..., 1] + 1e-7
    atan_gt = jnp.arctan(gw / gh)[..., None]                              # (bs, ngt, 1)
    pw = pd_bboxes[..., 2] - pd_bboxes[..., 0]
    ph = pd_bboxes[..., 3] - pd_bboxes[..., 1] + 1e-7
    atan_pd = jnp.arctan(pw / ph)[:, None, :]                             # (bs, 1, na)

    # strict-lower-tri first-hit trick only while the (na, na) f32 constant is cheap
    use_tri = na <= 512

    kernel = functools.partial(_assigner_kernel, topk=topk, eps=eps, use_tri=use_tri)

    out_shapes = (
        jax.ShapeDtypeStruct((bs, 4, na), jnp.float32),    # target_bboxes^T (lane-dense)
        jax.ShapeDtypeStruct((bs, nc, na), jnp.float32),   # target_scores^T (lane-dense)
        jax.ShapeDtypeStruct((bs, 3, na), jnp.int32),      # packed [labels; fg; gt_idx]
    )

    grid_spec = pltpu.PrefetchScalarGridSpec(
        num_scalar_prefetch=0,
        grid=(bs // b_tile,),
        in_specs=[
            pl.BlockSpec((b_tile, na, nc), lambda b: (b, 0, 0)),   # pd_scores
            pl.BlockSpec((b_tile, 4, na), lambda b: (b, 0, 0)),    # pd_bboxes_t
            pl.BlockSpec((2, na), lambda b: (0, 0)),               # anc_t (shared)
            pl.BlockSpec((b_tile, ngt, 1), lambda b: (b, 0, 0)),   # gt_labels
            pl.BlockSpec((b_tile, ngt, 4), lambda b: (b, 0, 0)),   # gt_bboxes
            pl.BlockSpec((b_tile, ngt, 1), lambda b: (b, 0, 0)),   # mask_gt
            pl.BlockSpec((b_tile, ngt, 1), lambda b: (b, 0, 0)),   # atan_gt
            pl.BlockSpec((b_tile, 1, na), lambda b: (b, 0, 0)),    # atan_pd
        ],
        out_specs=[
            pl.BlockSpec((b_tile, 4, na), lambda b: (b, 0, 0)),
            pl.BlockSpec((b_tile, nc, na), lambda b: (b, 0, 0)),
            pl.BlockSpec((b_tile, 3, na), lambda b: (b, 0, 0)),
        ],
    )

    tb_t, ts_t, pk = pl.pallas_call(
        kernel,
        out_shape=out_shapes,
        grid_spec=grid_spec,
        # batch steps are fully independent -> parallel semantics (v7x 2-TC sharding)
        compiler_params=pltpu.CompilerParams(dimension_semantics=("parallel",)),
    )(pd_scores, pd_bboxes_t, anc_t, gt_labels_i, gt_bboxes, mask_gt, atan_gt, atan_pd)

    # Note: for background anchors (fg_mask False) target_labels/target_gt_idx fall back
    # to gt row 0 (same as the torch non-degenerate path) -- callers must gate on fg_mask.
    target_labels = pk[:, 0, :]                         # (bs, na) int32 (torch: int64)
    target_bboxes = jnp.transpose(tb_t, (0, 2, 1))      # (bs, na, 4)
    target_scores = jnp.transpose(ts_t, (0, 2, 1))      # (bs, na, nc)
    fg_mask = pk[:, 1, :] > 0                           # (bs, na) bool
    target_gt_idx = pk[:, 2, :]                         # (bs, na) int32
    return target_labels, target_bboxes, target_scores, fg_mask, target_gt_idx


if __name__ == "__main__":
    key = jax.random.PRNGKey(0)
    bs, na, ngt, nc, topk = 2, 128, 8, 80, 13   # anchors = 8x16 grid, stride 8
    k0, k1, k2, k3, k4 = jax.random.split(key, 5)

    # class scores in (0, 1)
    pd_scores = jax.nn.sigmoid(jax.random.normal(k0, (bs, na, nc), jnp.float32))

    # anchor centres on an 8x16 grid with stride 8
    ys, xs = jnp.meshgrid(jnp.arange(8, dtype=jnp.float32) + 0.5,
                          jnp.arange(16, dtype=jnp.float32) + 0.5, indexing="ij")
    anc_points = jnp.stack([xs.reshape(-1), ys.reshape(-1)], axis=-1) * 8.0  # (128, 2)

    # predicted boxes (xyxy) around anchor centres
    off = jax.random.uniform(k1, (bs, na, 4), jnp.float32, 2.0, 14.0)
    pd_bboxes = jnp.concatenate([anc_points[None] - off[..., :2],
                                 anc_points[None] + off[..., 2:]], axis=-1)

    # ground-truth boxes (xyxy), labels, validity mask
    ctr = jax.random.uniform(k2, (bs, ngt, 2), jnp.float32, 16.0, 112.0)
    wh = jax.random.uniform(k3, (bs, ngt, 2), jnp.float32, 8.0, 48.0)
    gt_bboxes = jnp.concatenate([ctr - wh / 2, ctr + wh / 2], axis=-1)
    gt_labels = jax.random.randint(k4, (bs, ngt, 1), 0, nc).astype(jnp.int32)
    num_valid = jnp.array([5, 8])
    mask_gt = (jnp.arange(ngt)[None, :] < num_valid[:, None]).astype(jnp.float32)[..., None]

    outs = task_aligned_assigner(pd_scores, pd_bboxes, anc_points, gt_labels,
                                 gt_bboxes, mask_gt, topk=topk, num_classes=nc)
    jax.block_until_ready(outs)

    tl, tb, ts, fgm, tgi = outs
    assert tl.shape == (bs, na) and tb.shape == (bs, na, 4)
    assert ts.shape == (bs, na, nc) and fgm.shape == (bs, na) and tgi.shape == (bs, na)
    print("KERNEL_OK")
</pallas_src>

<mosaic_0001>
module attributes {stable_mosaic.version = 11 : i64} {
  func.func @_assigner_kernel(%arg0: i32, %arg1: memref<1x128x80xf32, #tpu.memory_space<vmem>>, %arg2: memref<1x4x128xf32, #tpu.memory_space<vmem>>, %arg3: memref<2x128xf32, #tpu.memory_space<vmem>>, %arg4: memref<1x8x1xi32, #tpu.memory_space<vmem>>, %arg5: memref<1x8x4xf32, #tpu.memory_space<vmem>>, %arg6: memref<1x8x1xf32, #tpu.memory_space<vmem>>, %arg7: memref<1x8x1xf32, #tpu.memory_space<vmem>>, %arg8: memref<1x1x128xf32, #tpu.memory_space<vmem>>, %arg9: memref<1x4x128xf32, #tpu.memory_space<vmem>>, %arg10: memref<1x80x128xf32, #tpu.memory_space<vmem>>, %arg11: memref<1x3x128xi32, #tpu.memory_space<vmem>>) attributes {dimension_semantics = [#tpu.dimension_semantics<parallel>], iteration_bounds = array<i64: 2>, scalar_prefetch = 0 : i64, scratch_operands = 0 : i64, tpu.core_type = #tpu.core_type<tc>, window_params = [{transform_indices = @transform_0, window_bounds = array<i64: 1, 128, 80>}, {transform_indices = @transform_1, window_bounds = array<i64: 1, 4, 128>}, {pipeline_mode = #tpu.pipeline_mode<synchronous>, transform_indices = @transform_2, window_bounds = array<i64: 2, 128>}, {transform_indices = @transform_3, window_bounds = array<i64: 1, 8, 1>}, {transform_indices = @transform_4, window_bounds = array<i64: 1, 8, 4>}, {transform_indices = @transform_5, window_bounds = array<i64: 1, 8, 1>}, {transform_indices = @transform_6, window_bounds = array<i64: 1, 8, 1>}, {transform_indices = @transform_7, window_bounds = array<i64: 1, 1, 128>}, {transform_indices = @transform_8, window_bounds = array<i64: 1, 4, 128>}, {transform_indices = @transform_9, window_bounds = array<i64: 1, 80, 128>}, {transform_indices = @transform_10, window_bounds = array<i64: 1, 3, 128>}]} {
    %c0 = arith.constant 0 : index
    %c0_0 = arith.constant 0 : index
    %0 = vector.load %arg3[%c0, %c0_0] : memref<2x128xf32, #tpu.memory_space<vmem>>, vector<2x128xf32>
    %1 = vector.extract_strided_slice %0 {offsets = [0, 0], sizes = [1, 128], strides = [1, 1]} : vector<2x128xf32> to vector<1x128xf32>
    %2 = vector.extract_strided_slice %0 {offsets = [1, 0], sizes = [1, 128], strides = [1, 1]} : vector<2x128xf32> to vector<1x128xf32>
    %3 = tpu.iota {dimensions = array<i32: 0>} : vector<8x128xi32>
    %4 = tpu.iota {dimensions = array<i32: 1>} : vector<8x80xi32>
    %5 = tpu.iota {dimensions = array<i32: 0>} : vector<3x128xi32>
    %6 = tpu.iota {dimensions = array<i32: 0>} : vector<128x128xi32>
    %7 = tpu.iota {dimensions = array<i32: 1>} : vector<128x128xi32>
    %8 = arith.cmpi slt, %6, %7 : vector<128x128xi32>
    %9 = arith.extui %8 : vector<128x128xi1> to vector<128x128xi32>
    %10 = arith.sitofp %9 : vector<128x128xi32> to vector<128x128xf32>
    %c0_1 = arith.constant 0 : index
    %c0_2 = arith.constant 0 : index
    %c0_3 = arith.constant 0 : index
    %11 = vector.load %arg1[%c0_1, %c0_2, %c0_3] : memref<1x128x80xf32, #tpu.memory_space<vmem>>, vector<1x128x80xf32>
    %12 = vector.shape_cast %11 : vector<1x128x80xf32> to vector<128x80xf32>
    %c0_4 = arith.constant 0 : index
    %c0_5 = arith.constant 0 : index
    %c0_6 = arith.constant 0 : index
    %13 = vector.load %arg2[%c0_4, %c0_5, %c0_6] : memref<1x4x128xf32, #tpu.memory_space<vmem>>, vector<1x4x128xf32>
    %14 = vector.shape_cast %13 : vector<1x4x128xf32> to vector<4x128xf32>
    %c0_7 = arith.constant 0 : index
    %c0_8 = arith.constant 0 : index
    %c0_9 = arith.constant 0 : index
    %15 = vector.load %arg4[%c0_7, %c0_8, %c0_9] : memref<1x8x1xi32, #tpu.memory_space<vmem>>, vector<1x8x1xi32>
    %16 = vector.shape_cast %15 : vector<1x8x1xi32> to vector<8x1xi32>
    %c0_10 = arith.constant 0 : index
    %c0_11 = arith.constant 0 : index
    %c0_12 = arith.constant 0 : index
    %17 = vector.load %arg5[%c0_10, %c0_11, %c0_12] : memref<1x8x4xf32, #tpu.memory_space<vmem>>, vector<1x8x4xf32>
    %18 = vector.shape_cast %17 : vector<1x8x4xf32> to vector<8x4xf32>
    %c0_13 = arith.constant 0 : index
    %c0_14 = arith.constant 0 : index
    %c0_15 = arith.constant 0 : index
    %19 = vector.load %arg6[%c0_13, %c0_14, %c0_15] : memref<1x8x1xf32, #tpu.memory_space<vmem>>, vector<1x8x1xf32>
    %20 = vector.shape_cast %19 : vector<1x8x1xf32> to vector<8x1xf32>
    %c0_16 = arith.constant 0 : index
    %c0_17 = arith.constant 0 : index
    %c0_18 = arith.constant 0 : index
    %21 = vector.load %arg7[%c0_16, %c0_17, %c0_18] : memref<1x8x1xf32, #tpu.memory_space<vmem>>, vector<1x8x1xf32>
    %22 = vector.shape_cast %21 : vector<1x8x1xf32> to vector<8x1xf32>
    %c0_19 = arith.constant 0 : index
    %c0_20 = arith.constant 0 : index
    %c0_21 = arith.constant 0 : index
    %23 = vector.load %arg8[%c0_19, %c0_20, %c0_21] : memref<1x1x128xf32, #tpu.memory_space<vmem>>, vector<1x1x128xf32>
    %24 = vector.shape_cast %23 : vector<1x1x128xf32> to vector<1x128xf32>
    %25 = vector.broadcast %16 : vector<8x1xi32> to vector<8x80xi32>
    %26 = arith.cmpi eq, %4, %25 : vector<8x80xi32>
    %27 = arith.extui %26 : vector<8x80xi1> to vector<8x80xi32>
    %28 = arith.sitofp %27 : vector<8x80xi32> to vector<8x80xf32>
    %cst = arith.constant dense<0.000000e+00> : vector<8x128xf32>
    %29 = tpu.matmul %28, %12, %cst {dimension_numbers = #tpu.dot_dimension_numbers<[1], [1], [0], [0], [0, 0, 1, 0], [], []>} : vector<8x80xf32>, vector<128x80xf32>, vector<8x128xf32> -> vector<8x128xf32>
    %30 = vector.extract_strided_slice %18 {offsets = [0, 0], sizes = [8, 1], strides = [1, 1]} : vector<8x4xf32> to vector<8x1xf32>
    %31 = vector.extract_strided_slice %18 {offsets = [0, 1], sizes = [8, 1], strides = [1, 1]} : vector<8x4xf32> to vector<8x1xf32>
    %32 = vector.extract_strided_slice %18 {offsets = [0, 2], sizes = [8, 1], strides = [1, 1]} : vector<8x4xf32> to vector<8x1xf32>
    %33 = vector.extract_strided_slice %18 {offsets = [0, 3], sizes = [8, 1], strides = [1, 1]} : vector<8x4xf32> to vector<8x1xf32>
    %34 = vector.extract_strided_slice %14 {offsets = [0, 0], sizes = [1, 128], strides = [1, 1]} : vector<4x128xf32> to vector<1x128xf32>
    %35 = vector.extract_strided_slice %14 {offsets = [1, 0], sizes = [1, 128], strides = [1, 1]} : vector<4x128xf32> to vector<1x128xf32>
    %36 = vector.extract_strided_slice %14 {offsets = [2, 0], sizes = [1, 128], strides = [1, 1]} : vector<4x128xf32> to vector<1x128xf32>
    %37 = vector.extract_strided_slice %14 {offsets = [3, 0], sizes = [1, 128], strides = [1, 1]} : vector<4x128xf32> to vector<1x128xf32>
    %38 = arith.subf %32, %30 : vector<8x1xf32>
    %39 = arith.subf %33, %31 : vector<8x1xf32>
    %cst_22 = arith.constant 1.000000e-07 : f32
    %40 = vector.broadcast %cst_22 : f32 to vector<8x1xf32>
    %41 = arith.addf %39, %40 : vector<8x1xf32>
    %42 = arith.subf %36, %34 : vector<1x128xf32>
    %43 = arith.subf %37, %35 : vector<1x128xf32>
    %cst_23 = arith.constant 1.000000e-07 : f32
    %44 = vector.broadcast %cst_23 : f32 to vector<1x128xf32>
    %45 = arith.addf %43, %44 : vector<1x128xf32>
    %46 = vector.broadcast %32 : vector<8x1xf32> to vector<8x128xf32>
    %47 = vector.broadcast %36 : vector<1x128xf32> to vector<8x128xf32>
    %48 = arith.minimumf %46, %47 : vector<8x128xf32>
    %49 = vector.broadcast %30 : vector<8x1xf32> to vector<8x128xf32>
    %50 = vector.broadcast %34 : vector<1x128xf32> to vector<8x128xf32>
    %51 = arith.maximumf %49, %50 : vector<8x128xf32>
    %52 = arith.subf %48, %51 : vector<8x128xf32>
    %cst_24 = arith.constant 0.000000e+00 : f32
    %53 = vector.broadcast %cst_24 : f32 to vector<8x128xf32>
    %54 = arith.maximumf %52, %53 : vector<8x128xf32>
    %55 = vector.broadcast %33 : vector<8x1xf32> to vector<8x128xf32>
    %56 = vector.broadcast %37 : vector<1x128xf32> to vector<8x128xf32>
    %57 = arith.minimumf %55, %56 : vector<8x128xf32>
    %58 = vector.broadcast %31 : vector<8x1xf32> to vector<8x128xf32>
    %59 = vector.broadcast %35 : vector<1x128xf32> to vector<8x128xf32>
    %60 = arith.maximumf %58, %59 : vector<8x128xf32>
    %61 = arith.subf %57, %60 : vector<8x128xf32>
    %cst_25 = arith.constant 0.000000e+00 : f32
    %62 = vector.broadcast %cst_25 : f32 to vector<8x128xf32>
    %63 = arith.maximumf %61, %62 : vector<8x128xf32>
    %64 = arith.mulf %54, %63 : vector<8x128xf32>
    %65 = arith.mulf %38, %41 : vector<8x1xf32>
    %66 = arith.mulf %42, %45 : vector<1x128xf32>
    %67 = vector.broadcast %65 : vector<8x1xf32> to vector<8x128xf32>
    %68 = vector.broadcast %66 : vector<1x128xf32> to vector<8x128xf32>
    %69 = arith.addf %67, %68 : vector<8x128xf32>
    %70 = arith.subf %69, %64 : vector<8x128xf32>
    %cst_26 = arith.constant 1.000000e-07 : f32
    %71 = vector.broadcast %cst_26 : f32 to vector<8x128xf32>
    %72 = arith.addf %70, %71 : vector<8x128xf32>
    %73 = arith.divf %64, %72 : vector<8x128xf32>
    %74 = vector.broadcast %32 : vector<8x1xf32> to vector<8x128xf32>
    %75 = vector.broadcast %36 : vector<1x128xf32> to vector<8x128xf32>
    %76 = arith.maximumf %74, %75 : vector<8x128xf32>
    %77 = vector.broadcast %30 : vector<8x1xf32> to vector<8x128xf32>
    %78 = vector.broadcast %34 : vector<1x128xf32> to vector<8x128xf32>
    %79 = arith.minimumf %77, %78 : vector<8x128xf32>
    %80 = arith.subf %76, %79 : vector<8x128xf32>
    %81 = vector.broadcast %33 : vector<8x1xf32> to vector<8x128xf32>
    %82 = vector.broadcast %37 : vector<1x128xf32> to vector<8x128xf32>
    %83 = arith.maximumf %81, %82 : vector<8x128xf32>
    %84 = vector.broadcast %31 : vector<8x1xf32> to vector<8x128xf32>
    %85 = vector.broadcast %35 : vector<1x128xf32> to vector<8x128xf32>
    %86 = arith.minimumf %84, %85 : vector<8x128xf32>
    %87 = arith.subf %83, %86 : vector<8x128xf32>
    %88 = arith.mulf %80, %80 : vector<8x128xf32>
    %89 = arith.mulf %87, %87 : vector<8x128xf32>
    %90 = arith.addf %88, %89 : vector<8x128xf32>
    %cst_27 = arith.constant 1.000000e-07 : f32
    %91 = vector.broadcast %cst_27 : f32 to vector<8x128xf32>
    %92 = arith.addf %90, %91 : vector<8x128xf32>
    %93 = arith.addf %34, %36 : vector<1x128xf32>
    %94 = vector.broadcast %93 : vector<1x128xf32> to vector<8x128xf32>
    %95 = vector.broadcast %30 : vector<8x1xf32> to vector<8x128xf32>
    %96 = arith.subf %94, %95 : vector<8x128xf32>
    %97 = vector.broadcast %32 : vector<8x1xf32> to vector<8x128xf32>
    %98 = arith.subf %96, %97 : vector<8x128xf32>
    %99 = arith.mulf %98, %98 : vector<8x128xf32>
    %100 = arith.addf %35, %37 : vector<1x128xf32>
    %101 = vector.broadcast %100 : vector<1x128xf32> to vector<8x128xf32>
    %102 = vector.broadcast %31 : vector<8x1xf32> to vector<8x128xf32>
    %103 = arith.subf %101, %102 : vector<8x128xf32>
    %104 = vector.broadcast %33 : vector<8x1xf32> to vector<8x128xf32>
    %105 = arith.subf %103, %104 : vector<8x128xf32>
    %106 = arith.mulf %105, %105 : vector<8x128xf32>
    %107 = arith.addf %99, %106 : vector<8x128xf32>
    %cst_28 = arith.constant 4.000000e+00 : f32
    %108 = vector.broadcast %cst_28 : f32 to vector<8x128xf32>
    %109 = arith.divf %107, %108 : vector<8x128xf32>
    %110 = vector.broadcast %24 : vector<1x128xf32> to vector<8x128xf32>
    %111 = vector.broadcast %22 : vector<8x1xf32> to vector<8x128xf32>
    %112 = arith.subf %110, %111 : vector<8x128xf32>
    %113 = arith.mulf %112, %112 : vector<8x128xf32>
    %cst_29 = arith.constant 0.405284733 : f32
    %114 = vector.broadcast %cst_29 : f32 to vector<8x128xf32>
    %115 = arith.mulf %114, %113 : vector<8x128xf32>
    %116 = arith.subf %115, %73 : vector<8x128xf32>
    %cst_30 = arith.constant 1.000000e+00 : f32
    %cst_31 = arith.constant 1.000000e-07 : f32
    %117 = arith.addf %cst_30, %cst_31 : f32
    %118 = vector.broadcast %117 : f32 to vector<8x128xf32>
    %119 = arith.addf %116, %118 : vector<8x128xf32>
    %120 = arith.divf %115, %119 : vector<8x128xf32>
    %121 = arith.divf %109, %92 : vector<8x128xf32>
    %122 = arith.mulf %115, %120 : vector<8x128xf32>
    %123 = arith.addf %121, %122 : vector<8x128xf32>
    %124 = arith.subf %73, %123 : vector<8x128xf32>
    %cst_32 = arith.constant 0.000000e+00 : f32
    %125 = vector.broadcast %cst_32 : f32 to vector<8x128xf32>
    %126 = arith.maximumf %124, %125 : vector<8x128xf32>
    %127 = arith.mulf %126, %126 : vector<8x128xf32>
    %128 = arith.mulf %127, %127 : vector<8x128xf32>
    %129 = arith.mulf %128, %127 : vector<8x128xf32>
    %130 = arith.mulf %29, %129 : vector<8x128xf32>
    %131 = vector.broadcast %1 : vector<1x128xf32> to vector<8x128xf32>
    %132 = vector.broadcast %30 : vector<8x1xf32> to vector<8x128xf32>
    %133 = arith.subf %131, %132 : vector<8x128xf32>
    %134 = vector.broadcast %2 : vector<1x128xf32> to vector<8x128xf32>
    %135 = vector.broadcast %31 : vector<8x1xf32> to vector<8x128xf32>
    %136 = arith.subf %134, %135 : vector<8x128xf32>
    %137 = arith.minimumf %133, %136 : vector<8x128xf32>
    %138 = vector.broadcast %32 : vector<8x1xf32> to vector<8x128xf32>
    %139 = vector.broadcast %1 : vector<1x128xf32> to vector<8x128xf32>
    %140 = arith.subf %138, %139 : vector<8x128xf32>
    %141 = vector.broadcast %33 : vector<8x1xf32> to vector<8x128xf32>
    %142 = vector.broadcast %2 : vector<1x128xf32> to vector<8x128xf32>
    %143 = arith.subf %141, %142 : vector<8x128xf32>
    %144 = arith.minimumf %140, %143 : vector<8x128xf32>
    %145 = arith.minimumf %137, %144 : vector<8x128xf32>
    %cst_33 = arith.constant 9.99999971E-10 : f32
    %146 = vector.broadcast %cst_33 : f32 to vector<8x128xf32>
    %147 = arith.cmpf ogt, %145, %146 : vector<8x128xf32>
    %148 = arith.extui %147 : vector<8x128xi1> to vector<8x128xi32>
    %149 = arith.sitofp %148 : vector<8x128xi32> to vector<8x128xf32>
    %150 = arith.mulf %130, %149 : vector<8x128xf32>
    %cst_34 = arith.constant 0.000000e+00 : f32
    %151 = vector.broadcast %cst_34 : f32 to vector<8x128xf32>
    %c0_i32 = arith.constant 0 : i32
    %cst_35 = arith.constant dense<0xFF800000> : vector<8xf32>
    %152 = vector.multi_reduction <maximumf>, %150, %cst_35 [1] : vector<8x128xf32> to vector<8xf32>
    %153 = vector.shape_cast %152 : vector<8xf32> to vector<8x1xf32>
    %154 = vector.broadcast %153 : vector<8x1xf32> to vector<8x128xf32>
    %155 = arith.cmpf oeq, %150, %154 : vector<8x128xf32>
    %156 = arith.extui %155 : vector<8x128xi1> to vector<8x128xi32>
    %157 = arith.sitofp %156 : vector<8x128xi32> to vector<8x128xf32>
    %cst_36 = arith.constant dense<0.000000e+00> : vector<8x128xf32>
    %158 = tpu.matmul %157, %10, %cst_36 {dimension_numbers = #tpu.dot_dimension_numbers<[1], [0], [0], [1], [0, 0, 1, 1], [], []>} : vector<8x128xf32>, vector<128x128xf32>, vector<8x128xf32> -> vector<8x128xf32>
    %cst_37 = arith.constant 5.000000e-01 : f32
    %159 = vector.broadcast %cst_37 : f32 to vector<8x128xf32>
    %160 = arith.cmpf olt, %158, %159 : vector<8x128xf32>
    %161 = arith.extui %160 : vector<8x128xi1> to vector<8x128xi32>
    %162 = arith.sitofp %161 : vector<8x128xi32> to vector<8x128xf32>
    %163 = arith.mulf %157, %162 : vector<8x128xf32>
    %cst_38 = arith.constant 0.000000e+00 : f32
    %164 = vector.broadcast %cst_38 : f32 to vector<8x128xf32>
    %165 = arith.cmpf ogt, %163, %164 : vector<8x128xf32>
    %cst_39 = arith.constant -1.000000e+30 : f32
    %166 = vector.broadcast %cst_39 : f32 to vector<8x128xf32>
    %167 = arith.select %165, %166, %150 : vector<8x128xi1>, vector<8x128xf32>
    %168 = arith.addf %151, %163 : vector<8x128xf32>
    %c1_i32 = arith.constant 1 : i32
    %cst_40 = arith.constant dense<0xFF800000> : vector<8xf32>
    %169 = vector.multi_reduction <maximumf>, %167, %cst_40 [1] : vector<8x128xf32> to vector<8xf32>
    %170 = vector.shape_cast %169 : vector<8xf32> to vector<8x1xf32>
    %171 = vector.broadcast %170 : vector<8x1xf32> to vector<8x128xf32>
    %172 = arith.cmpf oeq, %167, %171 : vector<8x128xf32>
    %173 = arith.extui %172 : vector<8x128xi1> to vector<8x128xi32>
    %174 = arith.sitofp %173 : vector<8x128xi32> to vector<8x128xf32>
    %cst_41 = arith.constant dense<0.000000e+00> : vector<8x128xf32>
    %175 = tpu.matmul %174, %10, %cst_41 {dimension_numbers = #tpu.dot_dimension_numbers<[1], [0], [0], [1], [0, 0, 1, 1], [], []>} : vector<8x128xf32>, vector<128x128xf32>, vector<8x128xf32> -> vector<8x128xf32>
    %cst_42 = arith.constant 5.000000e-01 : f32
    %176 = vector.broadcast %cst_42 : f32 to vector<8x128xf32>
    %177 = arith.cmpf olt, %175, %176 : vector<8x128xf32>
    %178 = arith.extui %177 : vector<8x128xi1> to vector<8x128xi32>
    %179 = arith.sitofp %178 : vector<8x128xi32> to vector<8x128xf32>
    %180 = arith.mulf %174, %179 : vector<8x128xf32>
    %cst_43 = arith.constant 0.000000e+00 : f32
    %181 = vector.broadcast %cst_43 : f32 to vector<8x128xf32>
    %182 = arith.cmpf ogt, %180, %181 : vector<8x128xf32>
    %cst_44 = arith.constant -1.000000e+30 : f32
    %183 = vector.broadcast %cst_44 : f32 to vector<8x128xf32>
    %184 = arith.select %182, %183, %167 : vector<8x128xi1>, vector<8x128xf32>
    %185 = arith.addf %168, %180 : vector<8x128xf32>
    %c2_i32 = arith.constant 2 : i32
    %cst_45 = arith.constant dense<0xFF800000> : vector<8xf32>
    %186 = vector.multi_reduction <maximumf>, %184, %cst_45 [1] : vector<8x128xf32> to vector<8xf32>
    %187 = vector.shape_cast %186 : vector<8xf32> to vector<8x1xf32>
    %188 = vector.broadcast %187 : vector<8x1xf32> to vector<8x128xf32>
    %189 = arith.cmpf oeq, %184, %188 : vector<8x128xf32>
    %190 = arith.extui %189 : vector<8x128xi1> to vector<8x128xi32>
    %191 = arith.sitofp %190 : vector<8x128xi32> to vector<8x128xf32>
    %cst_46 = arith.constant dense<0.000000e+00> : vector<8x128xf32>
    %192 = tpu.matmul %191, %10, %cst_46 {dimension_numbers = #tpu.dot_dimension_numbers<[1], [0], [0], [1], [0, 0, 1, 1], [], []>} : vector<8x128xf32>, vector<128x128xf32>, vector<8x128xf32> -> vector<8x128xf32>
    %cst_47 = arith.constant 5.000000e-01 : f32
    %193 = vector.broadcast %cst_47 : f32 to vector<8x128xf32>
    %194 = arith.cmpf olt, %192, %193 : vector<8x128xf32>
    %195 = arith.extui %194 : vector<8x128xi1> to vector<8x128xi32>
    %196 = arith.sitofp %195 : vector<8x128xi32> to vector<8x128xf32>
    %197 = arith.mulf %191, %196 : vector<8x128xf32>
    %cst_48 = arith.constant 0.000000e+00 : f32
    %198 = vector.broadcast %cst_48 : f32 to vector<8x128xf32>
    %199 = arith.cmpf ogt, %197, %198 : vector<8x128xf32>
    %cst_49 = arith.constant -1.000000e+30 : f32
    %200 = vector.broadcast %cst_49 : f32 to vector<8x128xf32>
    %201 = arith.select %199, %200, %184 : vector<8x128xi1>, vector<8x128xf32>
    %202 = arith.addf %185, %197 : vector<8x128xf32>
    %c3_i32 = arith.constant 3 : i32
    %cst_50 = arith.constant dense<0xFF800000> : vector<8xf32>
    %203 = vector.multi_reduction <maximumf>, %201, %cst_50 [1] : vector<8x128xf32> to vector<8xf32>
    %204 = vector.shape_cast %203 : vector<8xf32> to vector<8x1xf32>
    %205 = vector.broadcast %204 : vector<8x1xf32> to vector<8x128xf32>
    %206 = arith.cmpf oeq, %201, %205 : vector<8x128xf32>
    %207 = arith.extui %206 : vector<8x128xi1> to vector<8x128xi32>
    %208 = arith.sitofp %207 : vector<8x128xi32> to vector<8x128xf32>
    %cst_51 = arith.constant dense<0.000000e+00> : vector<8x128xf32>
    %209 = tpu.matmul %208, %10, %cst_51 {dimension_numbers = #tpu.dot_dimension_numbers<[1], [0], [0], [1], [0, 0, 1, 1], [], []>} : vector<8x128xf32>, vector<128x128xf32>, vector<8x128xf32> -> vector<8x128xf32>
    %cst_52 = arith.constant 5.000000e-01 : f32
    %210 = vector.broadcast %cst_52 : f32 to vector<8x128xf32>
    %211 = arith.cmpf olt, %209, %210 : vector<8x128xf32>
    %212 = arith.extui %211 : vector<8x128xi1> to vector<8x128xi32>
    %213 = arith.sitofp %212 : vector<8x128xi32> to vector<8x128xf32>
    %214 = arith.mulf %208, %213 : vector<8x128xf32>
    %cst_53 = arith.constant 0.000000e+00 : f32
    %215 = vector.broadcast %cst_53 : f32 to vector<8x128xf32>
    %216 = arith.cmpf ogt, %214, %215 : vector<8x128xf32>
    %cst_54 = arith.constant -1.000000e+30 : f32
    %217 = vector.broadcast %cst_54 : f32 to vector<8x128xf32>
    %218 = arith.select %216, %217, %201 : vector<8x128xi1>, vector<8x128xf32>
    %219 = arith.addf %202, %214 : vector<8x128xf32>
    %c4_i32 = arith.constant 4 : i32
    %cst_55 = arith.constant dense<0xFF800000> : vector<8xf32>
    %220 = vector.multi_reduction <maximumf>, %218, %cst_55 [1] : vector<8x128xf32> to vector<8xf32>
    %221 = vector.shape_cast %220 : vector<8xf32> to vector<8x1xf32>
    %222 = vector.broadcast %221 : vector<8x1xf32> to vector<8x128xf32>
    %223 = arith.cmpf oeq, %218, %222 : vector<8x128xf32>
    %224 = arith.extui %223 : vector<8x128xi1> to vector<8x128xi32>
    %225 = arith.sitofp %224 : vector<8x128xi32> to vector<8x128xf32>
    %cst_56 = arith.constant dense<0.000000e+00> : vector<8x128xf32>
    %226 = tpu.matmul %225, %10, %cst_56 {dimension_numbers = #tpu.dot_dimension_numbers<[1], [0], [0], [1], [0, 0, 1, 1], [], []>} : vector<8x128xf32>, vector<128x128xf32>, vector<8x128xf32> -> vector<8x128xf32>
    %cst_57 = arith.constant 5.000000e-01 : f32
    %227 = vector.broadcast %cst_57 : f32 to vector<8x128xf32>
    %228 = arith.cmpf olt, %226, %227 : vector<8x128xf32>
    %229 = arith.extui %228 : vector<8x128xi1> to vector<8x128xi32>
    %230 = arith.sitofp %229 : vector<8x128xi32> to vector<8x128xf32>
    %231 = arith.mulf %225, %230 : vector<8x128xf32>
    %cst_58 = arith.constant 0.000000e+00 : f32
    %232 = vector.broadcast %cst_58 : f32 to vector<8x128xf32>
    %233 = arith.cmpf ogt, %231, %232 : vector<8x128xf32>
    %cst_59 = arith.constant -1.000000e+30 : f32
    %234 = vector.broadcast %cst_59 : f32 to vector<8x128xf32>
    %235 = arith.select %233, %234, %218 : vector<8x128xi1>, vector<8x128xf32>
    %236 = arith.addf %219, %231 : vector<8x128xf32>
    %c5_i32 = arith.constant 5 : i32
    %cst_60 = arith.constant dense<0xFF800000> : vector<8xf32>
    %237 = vector.multi_reduction <maximumf>, %235, %cst_60 [1] : vector<8x128xf32> to vector<8xf32>
    %238 = vector.shape_cast %237 : vector<8xf32> to vector<8x1xf32>
    %239 = vector.broadcast %238 : vector<8x1xf32> to vector<8x128xf32>
    %240 = arith.cmpf oeq, %235, %239 : vector<8x128xf32>
    %241 = arith.extui %240 : vector<8x128xi1> to vector<8x128xi32>
    %242 = arith.sitofp %241 : vector<8x128xi32> to vector<8x128xf32>
    %cst_61 = arith.constant dense<0.000000e+00> : vector<8x128xf32>
    %243 = tpu.matmul %242, %10, %cst_61 {dimension_numbers = #tpu.dot_dimension_numbers<[1], [0], [0], [1], [0, 0, 1, 1], [], []>} : vector<8x128xf32>, vector<128x128xf32>, vector<8x128xf32> -> vector<8x128xf32>
    %cst_62 = arith.constant 5.000000e-01 : f32
    %244 = vector.broadcast %cst_62 : f32 to vector<8x128xf32>
    %245 = arith.cmpf olt, %243, %244 : vector<8x128xf32>
    %246 = arith.extui %245 : vector<8x128xi1> to vector<8x128xi32>
    %247 = arith.sitofp %246 : vector<8x128xi32> to vector<8x128xf32>
    %248 = arith.mulf %242, %247 : vector<8x128xf32>
    %cst_63 = arith.constant 0.000000e+00 : f32
    %249 = vector.broadcast %cst_63 : f32 to vector<8x128xf32>
    %250 = arith.cmpf ogt, %248, %249 : vector<8x128xf32>
    %cst_64 = arith.constant -1.000000e+30 : f32
    %251 = vector.broadcast %cst_64 : f32 to vector<8x128xf32>
    %252 = arith.select %250, %251, %235 : vector<8x128xi1>, vector<8x128xf32>
    %253 = arith.addf %236, %248 : vector<8x128xf32>
    %c6_i32 = arith.constant 6 : i32
    %cst_65 = arith.constant dense<0xFF800000> : vector<8xf32>
    %254 = vector.multi_reduction <maximumf>, %252, %cst_65 [1] : vector<8x128xf32> to vector<8xf32>
    %255 = vector.shape_cast %254 : vector<8xf32> to vector<8x1xf32>
    %256 = vector.broadcast %255 : vector<8x1xf32> to vector<8x128xf32>
    %257 = arith.cmpf oeq, %252, %256 : vector<8x128xf32>
    %258 = arith.extui %257 : vector<8x128xi1> to vector<8x128xi32>
    %259 = arith.sitofp %258 : vector<8x128xi32> to vector<8x128xf32>
    %cst_66 = arith.constant dense<0.000000e+00> : vector<8x128xf32>
    %260 = tpu.matmul %259, %10, %cst_66 {dimension_numbers = #tpu.dot_dimension_numbers<[1], [0], [0], [1], [0, 0, 1, 1], [], []>} : vector<8x128xf32>, vector<128x128xf32>, vector<8x128xf32> -> vector<8x128xf32>
    %cst_67 = arith.constant 5.000000e-01 : f32
    %261 = vector.broadcast %cst_67 : f32 to vector<8x128xf32>
    %262 = arith.cmpf olt, %260, %261 : vector<8x128xf32>
    %263 = arith.extui %262 : vector<8x128xi1> to vector<8x128xi32>
    %264 = arith.sitofp %263 : vector<8x128xi32> to vector<8x128xf32>
    %265 = arith.mulf %259, %264 : vector<8x128xf32>
    %cst_68 = arith.constant 0.000000e+00 : f32
    %266 = vector.broadcast %cst_68 : f32 to vector<8x128xf32>
    %267 = arith.cmpf ogt, %265, %266 : vector<8x128xf32>
    %cst_69 = arith.constant -1.000000e+30 : f32
    %268 = vector.broadcast %cst_69 : f32 to vector<8x128xf32>
    %269 = arith.select %267, %268, %252 : vector<8x128xi1>, vector<8x128xf32>
    %270 = arith.addf %253, %265 : vector<8x128xf32>
    %c7_i32 = arith.constant 7 : i32
    %cst_70 = arith.constant dense<0xFF800000> : vector<8xf32>
    %271 = vector.multi_reduction <maximumf>, %269, %cst_70 [1] : vector<8x128xf32> to vector<8xf32>
    %272 = vector.shape_cast %271 : vector<8xf32> to vector<8x1xf32>
    %273 = vector.broadcast %272 : vector<8x1xf32> to vector<8x128xf32>
    %274 = arith.cmpf oeq, %269, %273 : vector<8x128xf32>
    %275 = arith.extui %274 : vector<8x128xi1> to vector<8x128xi32>
    %276 = arith.sitofp %275 : vector<8x128xi32> to vector<8x128xf32>
    %cst_71 = arith.constant dense<0.000000e+00> : vector<8x128xf32>
    %277 = tpu.matmul %276, %10, %cst_71 {dimension_numbers = #tpu.dot_dimension_numbers<[1], [0], [0], [1], [0, 0, 1, 1], [], []>} : vector<8x128xf32>, vector<128x128xf32>, vector<8x128xf32> -> vector<8x128xf32>
    %cst_72 = arith.constant 5.000000e-01 : f32
    %278 = vector.broadcast %cst_72 : f32 to vector<8x128xf32>
    %279 = arith.cmpf olt, %277, %278 : vector<8x128xf32>
    %280 = arith.extui %279 : vector<8x128xi1> to vector<8x128xi32>
    %281 = arith.sitofp %280 : vector<8x128xi32> to vector<8x128xf32>
    %282 = arith.mulf %276, %281 : vector<8x128xf32>
    %cst_73 = arith.constant 0.000000e+00 : f32
    %283 = vector.broadcast %cst_73 : f32 to vector<8x128xf32>
    %284 = arith.cmpf ogt, %282, %283 : vector<8x128xf32>
    %cst_74 = arith.constant -1.000000e+30 : f32
    %285 = vector.broadcast %cst_74 : f32 to vector<8x128xf32>
    %286 = arith.select %284, %285, %269 : vector<8x128xi1>, vector<8x128xf32>
    %287 = arith.addf %270, %282 : vector<8x128xf32>
    %c8_i32 = arith.constant 8 : i32
    %cst_75 = arith.constant dense<0xFF800000> : vector<8xf32>
    %288 = vector.multi_reduction <maximumf>, %286, %cst_75 [1] : vector<8x128xf32> to vector<8xf32>
    %289 = vector.shape_cast %288 : vector<8xf32> to vector<8x1xf32>
    %290 = vector.broadcast %289 : vector<8x1xf32> to vector<8x128xf32>
    %291 = arith.cmpf oeq, %286, %290 : vector<8x128xf32>
    %292 = arith.extui %291 : vector<8x128xi1> to vector<8x128xi32>
    %293 = arith.sitofp %292 : vector<8x128xi32> to vector<8x128xf32>
    %cst_76 = arith.constant dense<0.000000e+00> : vector<8x128xf32>
    %294 = tpu.matmul %293, %10, %cst_76 {dimension_numbers = #tpu.dot_dimension_numbers<[1], [0], [0], [1], [0, 0, 1, 1], [], []>} : vector<8x128xf32>, vector<128x128xf32>, vector<8x128xf32> -> vector<8x128xf32>
    %cst_77 = arith.constant 5.000000e-01 : f32
    %295 = vector.broadcast %cst_77 : f32 to vector<8x128xf32>
    %296 = arith.cmpf olt, %294, %295 : vector<8x128xf32>
    %297 = arith.extui %296 : vector<8x128xi1> to vector<8x128xi32>
    %298 = arith.sitofp %297 : vector<8x128xi32> to vector<8x128xf32>
    %299 = arith.mulf %293, %298 : vector<8x128xf32>
    %cst_78 = arith.constant 0.000000e+00 : f32
    %300 = vector.broadcast %cst_78 : f32 to vector<8x128xf32>
    %301 = arith.cmpf ogt, %299, %300 : vector<8x128xf32>
    %cst_79 = arith.constant -1.000000e+30 : f32
    %302 = vector.broadcast %cst_79 : f32 to vector<8x128xf32>
    %303 = arith.select %301, %302, %286 : vector<8x128xi1>, vector<8x128xf32>
    %304 = arith.addf %287, %299 : vector<8x128xf32>
    %c9_i32 = arith.constant 9 : i32
    %cst_80 = arith.constant dense<0xFF800000> : vector<8xf32>
    %305 = vector.multi_reduction <maximumf>, %303, %cst_80 [1] : vector<8x128xf32> to vector<8xf32>
    %306 = vector.shape_cast %305 : vector<8xf32> to vector<8x1xf32>
    %307 = vector.broadcast %306 : vector<8x1xf32> to vector<8x128xf32>
    %308 = arith.cmpf oeq, %303, %307 : vector<8x128xf32>
    %309 = arith.extui %308 : vector<8x128xi1> to vector<8x128xi32>
    %310 = arith.sitofp %309 : vector<8x128xi32> to vector<8x128xf32>
    %cst_81 = arith.constant dense<0.000000e+00> : vector<8x128xf32>
    %311 = tpu.matmul %310, %10, %cst_81 {dimension_numbers = #tpu.dot_dimension_numbers<[1], [0], [0], [1], [0, 0, 1, 1], [], []>} : vector<8x128xf32>, vector<128x128xf32>, vector<8x128xf32> -> vector<8x128xf32>
    %cst_82 = arith.constant 5.000000e-01 : f32
    %312 = vector.broadcast %cst_82 : f32 to vector<8x128xf32>
    %313 = arith.cmpf olt, %311, %312 : vector<8x128xf32>
    %314 = arith.extui %313 : vector<8x128xi1> to vector<8x128xi32>
    %315 = arith.sitofp %314 : vector<8x128xi32> to vector<8x128xf32>
    %316 = arith.mulf %310, %315 : vector<8x128xf32>
    %cst_83 = arith.constant 0.000000e+00 : f32
    %317 = vector.broadcast %cst_83 : f32 to vector<8x128xf32>
    %318 = arith.cmpf ogt, %316, %317 : vector<8x128xf32>
    %cst_84 = arith.constant -1.000000e+30 : f32
    %319 = vector.broadcast %cst_84 : f32 to vector<8x128xf32>
    %320 = arith.select %318, %319, %303 : vector<8x128xi1>, vector<8x128xf32>
    %321 = arith.addf %304, %316 : vector<8x128xf32>
    %c10_i32 = arith.constant 10 : i32
    %cst_85 = arith.constant dense<0xFF800000> : vector<8xf32>
    %322 = vector.multi_reduction <maximumf>, %320, %cst_85 [1] : vector<8x128xf32> to vector<8xf32>
    %323 = vector.shape_cast %322 : vector<8xf32> to vector<8x1xf32>
    %324 = vector.broadcast %323 : vector<8x1xf32> to vector<8x128xf32>
    %325 = arith.cmpf oeq, %320, %324 : vector<8x128xf32>
    %326 = arith.extui %325 : vector<8x128xi1> to vector<8x128xi32>
    %327 = arith.sitofp %326 : vector<8x128xi32> to vector<8x128xf32>
    %cst_86 = arith.constant dense<0.000000e+00> : vector<8x128xf32>
    %328 = tpu.matmul %327, %10, %cst_86 {dimension_numbers = #tpu.dot_dimension_numbers<[1], [0], [0], [1], [0, 0, 1, 1], [], []>} : vector<8x128xf32>, vector<128x128xf32>, vector<8x128xf32> -> vector<8x128xf32>
    %cst_87 = arith.constant 5.000000e-01 : f32
    %329 = vector.broadcast %cst_87 : f32 to vector<8x128xf32>
    %330 = arith.cmpf olt, %328, %329 : vector<8x128xf32>
    %331 = arith.extui %330 : vector<8x128xi1> to vector<8x128xi32>
    %332 = arith.sitofp %331 : vector<8x128xi32> to vector<8x128xf32>
    %333 = arith.mulf %327, %332 : vector<8x128xf32>
    %cst_88 = arith.constant 0.000000e+00 : f32
    %334 = vector.broadcast %cst_88 : f32 to vector<8x128xf32>
    %335 = arith.cmpf ogt, %333, %334 : vector<8x128xf32>
    %cst_89 = arith.constant -1.000000e+30 : f32
    %336 = vector.broadcast %cst_89 : f32 to vector<8x128xf32>
    %337 = arith.select %335, %336, %320 : vector<8x128xi1>, vector<8x128xf32>
    %338 = arith.addf %321, %333 : vector<8x128xf32>
    %c11_i32 = arith.constant 11 : i32
    %cst_90 = arith.constant dense<0xFF800000> : vector<8xf32>
    %339 = vector.multi_reduction <maximumf>, %337, %cst_90 [1] : vector<8x128xf32> to vector<8xf32>
    %340 = vector.shape_cast %339 : vector<8xf32> to vector<8x1xf32>
    %341 = vector.broadcast %340 : vector<8x1xf32> to vector<8x128xf32>
    %342 = arith.cmpf oeq, %337, %341 : vector<8x128xf32>
    %343 = arith.extui %342 : vector<8x128xi1> to vector<8x128xi32>
    %344 = arith.sitofp %343 : vector<8x128xi32> to vector<8x128xf32>
    %cst_91 = arith.constant dense<0.000000e+00> : vector<8x128xf32>
    %345 = tpu.matmul %344, %10, %cst_91 {dimension_numbers = #tpu.dot_dimension_numbers<[1], [0], [0], [1], [0, 0, 1, 1], [], []>} : vector<8x128xf32>, vector<128x128xf32>, vector<8x128xf32> -> vector<8x128xf32>
    %cst_92 = arith.constant 5.000000e-01 : f32
    %346 = vector.broadcast %cst_92 : f32 to vector<8x128xf32>
    %347 = arith.cmpf olt, %345, %346 : vector<8x128xf32>
    %348 = arith.extui %347 : vector<8x128xi1> to vector<8x128xi32>
    %349 = arith.sitofp %348 : vector<8x128xi32> to vector<8x128xf32>
    %350 = arith.mulf %344, %349 : vector<8x128xf32>
    %cst_93 = arith.constant 0.000000e+00 : f32
    %351 = vector.broadcast %cst_93 : f32 to vector<8x128xf32>
    %352 = arith.cmpf ogt, %350, %351 : vector<8x128xf32>
    %cst_94 = arith.constant -1.000000e+30 : f32
    %353 = vector.broadcast %cst_94 : f32 to vector<8x128xf32>
    %354 = arith.select %352, %353, %337 : vector<8x128xi1>, vector<8x128xf32>
    %355 = arith.addf %338, %350 : vector<8x128xf32>
    %c12_i32 = arith.constant 12 : i32
    %cst_95 = arith.constant dense<0xFF800000> : vector<8xf32>
    %356 = vector.multi_reduction <maximumf>, %354, %cst_95 [1] : vector<8x128xf32> to vector<8xf32>
    %357 = vector.shape_cast %356 : vector<8xf32> to vector<8x1xf32>
    %358 = vector.broadcast %357 : vector<8x1xf32> to vector<8x128xf32>
    %359 = arith.cmpf oeq, %354, %358 : vector<8x128xf32>
    %360 = arith.extui %359 : vector<8x128xi1> to vector<8x128xi32>
    %361 = arith.sitofp %360 : vector<8x128xi32> to vector<8x128xf32>
    %cst_96 = arith.constant dense<0.000000e+00> : vector<8x128xf32>
    %362 = tpu.matmul %361, %10, %cst_96 {dimension_numbers = #tpu.dot_dimension_numbers<[1], [0], [0], [1], [0, 0, 1, 1], [], []>} : vector<8x128xf32>, vector<128x128xf32>, vector<8x128xf32> -> vector<8x128xf32>
    %cst_97 = arith.constant 5.000000e-01 : f32
    %363 = vector.broadcast %cst_97 : f32 to vector<8x128xf32>
    %364 = arith.cmpf olt, %362, %363 : vector<8x128xf32>
    %365 = arith.extui %364 : vector<8x128xi1> to vector<8x128xi32>
    %366 = arith.sitofp %365 : vector<8x128xi32> to vector<8x128xf32>
    %367 = arith.mulf %361, %366 : vector<8x128xf32>
    %cst_98 = arith.constant 0.000000e+00 : f32
    %368 = vector.broadcast %cst_98 : f32 to vector<8x128xf32>
    %369 = arith.cmpf ogt, %367, %368 : vector<8x128xf32>
    %cst_99 = arith.constant -1.000000e+30 : f32
    %370 = vector.broadcast %cst_99 : f32 to vector<8x128xf32>
    %371 = arith.select %369, %370, %354 : vector<8x128xi1>, vector<8x128xf32>
    %372 = arith.addf %355, %367 : vector<8x128xf32>
    %cst_100 = arith.constant 0.000000e+00 : f32
    %373 = vector.broadcast %cst_100 : f32 to vector<8x1xf32>
    %374 = arith.cmpf one, %20, %373 : vector<8x1xf32>
    %375 = arith.extui %374 : vector<8x1xi1> to vector<8x1xi32>
    %376 = arith.sitofp %375 : vector<8x1xi32> to vector<8x1xf32>
    %377 = vector.broadcast %376 : vector<8x1xf32> to vector<8x128xf32>
    %378 = arith.mulf %372, %377 : vector<8x128xf32>
    %379 = arith.mulf %378, %149 : vector<8x128xf32>
    %380 = vector.broadcast %20 : vector<8x1xf32> to vector<8x128xf32>
    %381 = arith.mulf %379, %380 : vector<8x128xf32>
    %cst_101 = arith.constant dense<0.000000e+00> : vector<128xf32>
    %382 = vector.multi_reduction <add>, %381, %cst_101 [0] : vector<8x128xf32> to vector<128xf32>
    %383 = vector.shape_cast %382 : vector<128xf32> to vector<1x128xf32>
    %cst_102 = arith.constant dense<0xFF800000> : vector<128xf32>
    %384 = vector.multi_reduction <maximumf>, %126, %cst_102 [0] : vector<8x128xf32> to vector<128xf32>
    %385 = vector.shape_cast %384 : vector<128xf32> to vector<1x128xf32>
    %386 = vector.broadcast %385 : vector<1x128xf32> to vector<8x128xf32>
    %387 = arith.cmpf oeq, %126, %386 : vector<8x128xf32>
    %c8_i32_103 = arith.constant 8 : i32
    %388 = vector.broadcast %c8_i32_103 : i32 to vector<8x128xi32>
    %389 = arith.select %387, %3, %388 : vector<8x128xi1>, vector<8x128xi32>
    %cst_104 = arith.constant dense<2147483647> : vector<128xi32>
    %390 = vector.multi_reduction <minsi>, %389, %cst_104 [0] : vector<8x128xi32> to vector<128xi32>
    %391 = vector.shape_cast %390 : vector<128xi32> to vector<1x128xi32>
    %392 = vector.broadcast %391 : vector<1x128xi32> to vector<8x128xi32>
    %393 = arith.cmpi eq, %3, %392 : vector<8x128xi32>
    %394 = arith.extui %393 : vector<8x128xi1> to vector<8x128xi32>
    %395 = arith.sitofp %394 : vector<8x128xi32> to vector<8x128xf32>
    %cst_105 = arith.constant 1.000000e+00 : f32
    %396 = vector.broadcast %cst_105 : f32 to vector<1x128xf32>
    %397 = arith.cmpf ogt, %383, %396 : vector<1x128xf32>
    %398 = vector.shape_cast %397 : vector<1x128xi1> to vector<1x128xi1>
    %399 = vector.broadcast %398 : vector<1x128xi1> to vector<8x128xi1>
    %400 = arith.select %399, %395, %381 : vector<8x128xi1>, vector<8x128xf32>
    %cst_106 = arith.constant dense<0.000000e+00> : vector<128xf32>
    %401 = vector.multi_reduction <add>, %400, %cst_106 [0] : vector<8x128xf32> to vector<128xf32>
    %402 = vector.shape_cast %401 : vector<128xf32> to vector<1x128xf32>
    %cst_107 = arith.constant dense<0xFF800000> : vector<128xf32>
    %403 = vector.multi_reduction <maximumf>, %400, %cst_107 [0] : vector<8x128xf32> to vector<128xf32>
    %404 = vector.shape_cast %403 : vector<128xf32> to vector<1x128xf32>
    %405 = vector.broadcast %404 : vector<1x128xf32> to vector<8x128xf32>
    %406 = arith.cmpf oeq, %400, %405 : vector<8x128xf32>
    %c8_i32_108 = arith.constant 8 : i32
    %407 = vector.broadcast %c8_i32_108 : i32 to vector<8x128xi32>
    %408 = arith.select %406, %3, %407 : vector<8x128xi1>, vector<8x128xi32>
    %cst_109 = arith.constant dense<2147483647> : vector<128xi32>
    %409 = vector.multi_reduction <minsi>, %408, %cst_109 [0] : vector<8x128xi32> to vector<128xi32>
    %410 = vector.shape_cast %409 : vector<128xi32> to vector<1x128xi32>
    %411 = vector.broadcast %410 : vector<1x128xi32> to vector<8x128xi32>
    %412 = arith.cmpi eq, %3, %411 : vector<8x128xi32>
    %413 = arith.extui %412 : vector<8x128xi1> to vector<8x128xi32>
    %414 = arith.sitofp %413 : vector<8x128xi32> to vector<8x128xf32>
    %415 = arith.sitofp %16 : vector<8x1xi32> to vector<8x1xf32>
    %416 = vector.broadcast %415 : vector<8x1xf32> to vector<8x128xf32>
    %417 = arith.mulf %414, %416 : vector<8x128xf32>
    %cst_110 = arith.constant dense<0.000000e+00> : vector<128xf32>
    %418 = vector.multi_reduction <add>, %417, %cst_110 [0] : vector<8x128xf32> to vector<128xf32>
    %419 = vector.shape_cast %418 : vector<128xf32> to vector<1x128xf32>
    %cst_111 = arith.constant dense<0.000000e+00> : vector<4x128xf32>
    %420 = tpu.matmul %18, %414, %cst_111 {dimension_numbers = #tpu.dot_dimension_numbers<[0], [0], [1], [1], [0, 1, 1, 1], [], []>} : vector<8x4xf32>, vector<8x128xf32>, vector<4x128xf32> -> vector<4x128xf32>
    %c0_112 = arith.constant 0 : index
    %c0_113 = arith.constant 0 : index
    %c0_114 = arith.constant 0 : index
    %421 = vector.load %arg9[%c0_112, %c0_113, %c0_114] : memref<1x4x128xf32, #tpu.memory_space<vmem>>, vector<1x4x128xf32>
    %422 = vector.shape_cast %421 : vector<1x4x128xf32> to vector<4x128xf32>
    %423 = vector.shape_cast %420 : vector<4x128xf32> to vector<1x4x128xf32>
    tpu.vector_store %arg9[%c0_112, %c0_113, %c0_114], %423 {strides = array<i32>} : memref<1x4x128xf32, #tpu.memory_space<vmem>>, vector<1x4x128xf32>,
    %424 = arith.mulf %130, %400 : vector<8x128xf32>
    %cst_115 = arith.constant dense<0xFF800000> : vector<8xf32>
    %425 = vector.multi_reduction <maximumf>, %424, %cst_115 [1] : vector<8x128xf32> to vector<8xf32>
    %426 = vector.shape_cast %425 : vector<8xf32> to vector<8x1xf32>
    %427 = arith.mulf %126, %400 : vector<8x128xf32>
    %cst_116 = arith.constant dense<0xFF800000> : vector<8xf32>
    %428 = vector.multi_reduction <maximumf>, %427, %cst_116 [1] : vector<8x128xf32> to vector<8xf32>
    %429 = vector.shape_cast %428 : vector<8xf32> to vector<8x1xf32>
    %430 = vector.broadcast %429 : vector<8x1xf32> to vector<8x128xf32>
    %431 = arith.mulf %424, %430 : vector<8x128xf32>
    %cst_117 = arith.constant 9.99999971E-10 : f32
    %432 = vector.broadcast %cst_117 : f32 to vector<8x1xf32>
    %433 = arith.addf %426, %432 : vector<8x1xf32>
    %434 = vector.broadcast %433 : vector<8x1xf32> to vector<8x128xf32>
    %435 = arith.divf %431, %434 : vector<8x128xf32>
    %cst_118 = arith.constant dense<0xFF800000> : vector<128xf32>
    %436 = vector.multi_reduction <maximumf>, %435, %cst_118 [0] : vector<8x128xf32> to vector<128xf32>
    %437 = vector.shape_cast %436 : vector<128xf32> to vector<1x128xf32>
    %cst_119 = arith.constant 0.000000e+00 : f32
    %438 = vector.broadcast %cst_119 : f32 to vector<1x128xf32>
    %439 = arith.cmpf ogt, %402, %438 : vector<1x128xf32>
    %cst_120 = arith.constant 1.000000e+00 : f32
    %cst_121 = arith.constant 0.000000e+00 : f32
    %440 = vector.broadcast %cst_120 : f32 to vector<1x128xf32>
    %441 = vector.broadcast %cst_121 : f32 to vector<1x128xf32>
    %442 = arith.select %439, %440, %441 : vector<1x128xi1>, vector<1x128xf32>
    %443 = vector.broadcast %442 : vector<1x128xf32> to vector<8x128xf32>
    %444 = arith.mulf %414, %443 : vector<8x128xf32>
    %445 = vector.broadcast %437 : vector<1x128xf32> to vector<8x128xf32>
    %446 = arith.mulf %444, %445 : vector<8x128xf32>
    %cst_122 = arith.constant dense<0.000000e+00> : vector<80x128xf32>
    %447 = tpu.matmul %28, %446, %cst_122 {dimension_numbers = #tpu.dot_dimension_numbers<[0], [0], [1], [1], [0, 1, 1, 1], [], []>} : vector<8x80xf32>, vector<8x128xf32>, vector<80x128xf32> -> vector<80x128xf32>
    %c0_123 = arith.constant 0 : index
    %c0_124 = arith.constant 0 : index
    %c0_125 = arith.constant 0 : index
    %448 = vector.load %arg10[%c0_123, %c0_124, %c0_125] : memref<1x80x128xf32, #tpu.memory_space<vmem>>, vector<1x80x128xf32>
    %449 = vector.shape_cast %448 : vector<1x80x128xf32> to vector<80x128xf32>
    %450 = vector.shape_cast %447 : vector<80x128xf32> to vector<1x80x128xf32>
    tpu.vector_store %arg10[%c0_123, %c0_124, %c0_125], %450 {strides = array<i32>} : memref<1x80x128xf32, #tpu.memory_space<vmem>>, vector<1x80x128xf32>,
    %451 = math.roundeven %419 : vector<1x128xf32>
    %452 = arith.fptosi %451 : vector<1x128xf32> to vector<1x128xi32>
    %453 = math.roundeven %402 : vector<1x128xf32>
    %454 = arith.fptosi %453 : vector<1x128xf32> to vector<1x128xi32>
    %c0_i32_126 = arith.constant 0 : i32
    %455 = vector.broadcast %c0_i32_126 : i32 to vector<3x128xi32>
    %456 = arith.cmpi eq, %5, %455 : vector<3x128xi32>
    %c1_i32_127 = arith.constant 1 : i32
    %457 = vector.broadcast %c1_i32_127 : i32 to vector<3x128xi32>
    %458 = arith.cmpi eq, %5, %457 : vector<3x128xi32>
    %459 = vector.shape_cast %454 : vector<1x128xi32> to vector<1x128xi32>
    %460 = vector.broadcast %459 : vector<1x128xi32> to vector<3x128xi32>
    %461 = vector.shape_cast %410 : vector<1x128xi32> to vector<1x128xi32>
    %462 = vector.broadcast %461 : vector<1x128xi32> to vector<3x128xi32>
    %463 = arith.select %458, %460, %462 : vector<3x128xi1>, vector<3x128xi32>
    %464 = vector.shape_cast %452 : vector<1x128xi32> to vector<1x128xi32>
    %465 = vector.broadcast %464 : vector<1x128xi32> to vector<3x128xi32>
    %466 = arith.select %456, %465, %463 : vector<3x128xi1>, vector<3x128xi32>
    %c0_128 = arith.constant 0 : index
    %c0_129 = arith.constant 0 : index
    %c0_130 = arith.constant 0 : index
    %467 = vector.load %arg11[%c0_128, %c0_129, %c0_130] : memref<1x3x128xi32, #tpu.memory_space<vmem>>, vector<1x3x128xi32>
    %468 = vector.shape_cast %467 : vector<1x3x128xi32> to vector<3x128xi32>
    %469 = vector.shape_cast %466 : vector<3x128xi32> to vector<1x3x128xi32>
    tpu.vector_store %arg11[%c0_128, %c0_129, %c0_130], %469 {strides = array<i32>} : memref<1x3x128xi32, #tpu.memory_space<vmem>>, vector<1x3x128xi32>,
    return
  }
  func.func @transform_0(%arg0: i32) -> (i32, i32, i32) {
    %c0_i32 = arith.constant 0 : i32
    %c0_i32_0 = arith.constant 0 : i32
    %c0_i32_1 = arith.constant 0 : i32
    return %arg0, %c0_i32, %c0_i32_0 : i32, i32, i32
  }
  func.func @transform_1(%arg0: i32) -> (i32, i32, i32) {
    %c0_i32 = arith.constant 0 : i32
    %c0_i32_0 = arith.constant 0 : i32
    %c0_i32_1 = arith.constant 0 : i32
    return %arg0, %c0_i32, %c0_i32_0 : i32, i32, i32
  }
  func.func @transform_2(%arg0: i32) -> (i32, i32) {
    %c0_i32 = arith.constant 0 : i32
    %c0_i32_0 = arith.constant 0 : i32
    %c0_i32_1 = arith.constant 0 : i32
    return %c0_i32, %c0_i32_0 : i32, i32
  }
  func.func @transform_3(%arg0: i32) -> (i32, i32, i32) {
    %c0_i32 = arith.constant 0 : i32
    %c0_i32_0 = arith.constant 0 : i32
    %c0_i32_1 = arith.constant 0 : i32
    return %arg0, %c0_i32, %c0_i32_0 : i32, i32, i32
  }
  func.func @transform_4(%arg0: i32) -> (i32, i32, i32) {
    %c0_i32 = arith.constant 0 : i32
    %c0_i32_0 = arith.constant 0 : i32
    %c0_i32_1 = arith.constant 0 : i32
    return %arg0, %c0_i32, %c0_i32_0 : i32, i32, i32
  }
  func.func @transform_5(%arg0: i32) -> (i32, i32, i32) {
    %c0_i32 = arith.constant 0 : i32
    %c0_i32_0 = arith.constant 0 : i32
    %c0_i32_1 = arith.constant 0 : i32
    return %arg0, %c0_i32, %c0_i32_0 : i32, i32, i32
  }
  func.func @transform_6(%arg0: i32) -> (i32, i32, i32) {
    %c0_i32 = arith.constant 0 : i32
    %c0_i32_0 = arith.constant 0 : i32
    %c0_i32_1 = arith.constant 0 : i32
    return %arg0, %c0_i32, %c0_i32_0 : i32, i32, i32
  }
  func.func @transform_7(%arg0: i32) -> (i32, i32, i32) {
    %c0_i32 = arith.constant 0 : i32
    %c0_i32_0 = arith.constant 0 : i32
    %c0_i32_1 = arith.constant 0 : i32
    return %arg0, %c0_i32, %c0_i32_0 : i32, i32, i32
  }
  func.func @transform_8(%arg0: i32) -> (i32, i32, i32) {
    %c0_i32 = arith.constant 0 : i32
    %c0_i32_0 = arith.constant 0 : i32
    %c0_i32_1 = arith.constant 0 : i32
    return %arg0, %c0_i32, %c0_i32_0 : i32, i32, i32
  }
  func.func @transform_9(%arg0: i32) -> (i32, i32, i32) {
    %c0_i32 = arith.constant 0 : i32
    %c0_i32_0 = arith.constant 0 : i32
    %c0_i32_1 = arith.constant 0 : i32
    return %arg0, %c0_i32, %c0_i32_0 : i32, i32, i32
  }
  func.func @transform_10(%arg0: i32) -> (i32, i32, i32) {
    %c0_i32 = arith.constant 0 : i32
    %c0_i32_0 = arith.constant 0 : i32
    %c0_i32_1 = arith.constant 0 : i32
    return %arg0, %c0_i32, %c0_i32_0 : i32, i32, i32
  }
}

</mosaic_0001>

<llo_original>
// kernel: tpu_custom_call.1
$region0: #{tpu_custom_call.1}
  #allocation0 [shape = 'u32[]', space=smem, size = 0x4, offset = 0x4, fixed_abs, tag = 'smem constant byte address 0x4 - core index']
  #allocation1 [shape = 'u32[144,128]{1,0:T(1,128)}', space=vmem, size = 0x12000, scoped, tag = 'internal scratch']
  %s0 = inlined_call_operand.vmem [shape: f32[2,128,80], index: 0, kind: input, shape index: {}]
  %s1 = inlined_call_operand.vmem [shape: f32[2,4,128], index: 1, kind: input, shape index: {}]
  %s2 = inlined_call_operand.vmem [shape: f32[2,128], index: 2, kind: input, shape index: {}]
  %s3 = inlined_call_operand.vmem [shape: s32[2,8,1], index: 3, kind: input, shape index: {}]
  %s4 = inlined_call_operand.vmem [shape: f32[2,8,4], index: 4, kind: input, shape index: {}]
  %s5 = inlined_call_operand.vmem [shape: f32[2,8,1], index: 5, kind: input, shape index: {}]
  %s6 = inlined_call_operand.vmem [shape: f32[2,8,1], index: 6, kind: input, shape index: {}]
  %s7 = inlined_call_operand.vmem [shape: f32[2,1,128], index: 7, kind: input, shape index: {}]
  %s8 = inlined_call_operand.hbm [shape: f32[2,4,128], index: 8, kind: output, shape index: {0}]
  %s9 = inlined_call_operand.hbm [shape: f32[2,80,128], index: 9, kind: output, shape index: {1}]
  %s10 = inlined_call_operand.vmem [shape: s32[2,3,128], index: 10, kind: output, shape index: {2}]
  %11 = xla_tuple %s8, %s9, %s10
  %s12 = sld [smem:[#allocation0]]
  $region81: #{tpu_custom_call.1} parent=0
    _
  %s14 = ssub.s32 1, %s12
  %s15 = scalar_select 0, %s14, %s12
  $region1: #{tpu_custom_call.1} parent=0
    #allocation2 [shape = 'u8[4096]{0}', space=vmem, size = 0x1000, scoped, tag = 'output window, operand 0']
    #allocation3 [shape = 's32[2]{0}', space=sflag, size = 0x8, scoped, tag = 'scoped memory for tpu_custom_call.1']
    #allocation4 [shape = 'u8[81920]{0}', space=vmem, size = 0x14000, scoped, tag = 'output window, operand 1']
    #allocation5 [shape = 's32[2]{0}', space=sflag, size = 0x8, scoped, tag = 'scoped memory for tpu_custom_call.1']
    %16 = vsyncpa [#allocation3], 0
    %s17 = scalar_lea.sflag [#allocation3], 1
    %18 = vsyncpa %s17, 0
    %19 = vsyncpa [#allocation5], 0
    %s20 = scalar_lea.sflag [#allocation5], 1
    %21 = vsyncpa %s20, 0
    loop: start=0, step=1, limit=4
    $region2: #{tpu_custom_call.1} parent=1 // loop_pre_header
      _
    $region3: #{tpu_custom_call.1} parent=1 // loop_header
      %s23 = sphi 0, %s27
      %p24 = scmp.ge.s32.totalorder %s23, 4
      %s33 = sphi 0, %s35
      %s36 = sphi 0, %s33
      %s37 = sphi 0, %s36
      %s53 = sphi 0, %s37
      %s59 = sphi 0, %s61
      %s62 = sphi 0, %s59
      %s63 = sphi 0, %s62
      %s79 = sphi 0, %s63
      %s83 = sphi 0, %s83
      %s85 = sphi 0, %s83
      %s86 = sphi 0, %s85
      %s100 = sphi 0, %s86
      %s106 = sphi 0, %s108
      %s109 = sphi 0, %s106
      %s110 = sphi 0, %s109
      %s126 = sphi 0, %s110
      %s132 = sphi 0, %s134
      %s135 = sphi 0, %s132
      %s136 = sphi 0, %s135
      %s152 = sphi 0, %s136
      %s158 = sphi 0, %s160
      %s161 = sphi 0, %s158
      %s162 = sphi 0, %s161
      %s178 = sphi 0, %s162
      %s184 = sphi 0, %s186
      %s187 = sphi 0, %s184
      %s188 = sphi 0, %s187
      %s204 = sphi 0, %s188
      %s210 = sphi 0, %s212
      %s213 = sphi 0, %s210
      %s214 = sphi 0, %s213
      %s230 = sphi 0, %s214
      %s236 = sphi 0, %s238
      %s239 = sphi 0, %s236
      %s240 = sphi 0, %s239
      %s256 = sphi 0, %s240
      %s262 = sphi 0, %s264
      %s265 = sphi 0, %s262
      %s266 = sphi 0, %s265
      %s282 = sphi 0, %s266
      %s288 = sphi 0, %s290
      %s291 = sphi 0, %s288
      %s292 = sphi 0, %s291
      %s308 = sphi 0, %s292
    $region4: #{tpu_custom_call.1} parent=1 // loop_header_branch
      %26 = sbr.rel (%p24) target = $region8
    $region5: #{tpu_custom_call.1} parent=1 // loop_body
      %s28 = ssub.s32 %s23, 1
      %s29 = ssub.s32 %s23, 2
      %s30 = sadd.s32 %s23, 1
      %s31 = ssub.s32 %s23, %s30
      %p32 = scmp.eq.s32.totalorder %s31, 0
      %s34 = sadd.s32 %s33, 1
      %s35 = scalar_select %p32, %s33, %s34
      %p38 = pneg %p32
      %p39 = scmp.eq.s32.totalorder %s23, 1
      %p40 = por %p38, %p39
      %p41 = scmp.ne.s32.totalorder %s33, %s36
      %p42 = scmp.eq.s32.totalorder %s23, 0
      %p43 = por %p41, %p42
      %p44 = scmp.ne.s32.totalorder %s33, %s36
      %p45 = scmp.eq.s32.totalorder %s28, 1
      %p46 = por %p44, %p45
      %p47 = scmp.ne.s32.totalorder %s36, %s37
      %p48 = scmp.eq.s32.totalorder %s28, 0
      %p49 = por %p47, %p48
      %p50 = scmp.ne.s32.totalorder %s36, %s37
      %p51 = scmp.eq.s32.totalorder %s29, 1
      %p52 = por %p50, %p51
      %p54 = scmp.ne.s32.totalorder %s37, %s53
      %p55 = scmp.eq.s32.totalorder %s29, 0
      %p56 = por %p54, %p55
      %s57 = ssub.s32 %s23, %s30
      %p58 = scmp.eq.s32.totalorder %s57, 0
      %s60 = sadd.s32 %s59, 1
      %s61 = scalar_select %p58, %s59, %s60
      %p64 = pneg %p58
      %p65 = scmp.eq.s32.totalorder %s23, 1
      %p66 = por %p64, %p65
      %p67 = scmp.ne.s32.totalorder %s59, %s62
      %p68 = scmp.eq.s32.totalorder %s23, 0
      %p69 = por %p67, %p68
      %p70 = scmp.ne.s32.totalorder %s59, %s62
      %p71 = scmp.eq.s32.totalorder %s28, 1
      %p72 = por %p70, %p71
      %p73 = scmp.ne.s32.totalorder %s62, %s63
      %p74 = scmp.eq.s32.totalorder %s28, 0
      %p75 = por %p73, %p74
      %p76 = scmp.ne.s32.totalorder %s62, %s63
      %p77 = scmp.eq.s32.totalorder %s29, 1
      %p78 = por %p76, %p77
      %p80 = scmp.ne.s32.totalorder %s63, %s79
      %p81 = scmp.eq.s32.totalorder %s29, 0
      %p82 = por %p80, %p81
      %s84 = sadd.s32 %s83, 1
      %p87 = scmp.eq.s32.totalorder %s23, 1
      %p88 = scmp.ne.s32.totalorder %s83, %s85
      %p89 = scmp.eq.s32.totalorder %s23, 0
      %p90 = por %p88, %p89
      %p91 = scmp.ne.s32.totalorder %s83, %s85
      %p92 = scmp.eq.s32.totalorder %s28, 1
      %p93 = por %p91, %p92
      %p94 = scmp.ne.s32.totalorder %s85, %s86
      %p95 = scmp.eq.s32.totalorder %s28, 0
      %p96 = por %p94, %p95
      %p97 = scmp.ne.s32.totalorder %s85, %s86
      %p98 = scmp.eq.s32.totalorder %s29, 1
      %p99 = por %p97, %p98
      %p101 = scmp.ne.s32.totalorder %s86, %s100
      %p102 = scmp.eq.s32.totalorder %s29, 0
      %p103 = por %p101, %p102
      %s104 = ssub.s32 %s23, %s30
      %p105 = scmp.eq.s32.totalorder %s104, 0
      %s107 = sadd.s32 %s106, 1
      %s108 = scalar_select %p105, %s106, %s107
      %p111 = pneg %p105
      %p112 = scmp.eq.s32.totalorder %s23, 1
      %p113 = por %p111, %p112
      %p114 = scmp.ne.s32.totalorder %s106, %s109
      %p115 = scmp.eq.s32.totalorder %s23, 0
      %p116 = por %p114, %p115
      %p117 = scmp.ne.s32.totalorder %s106, %s109
      %p118 = scmp.eq.s32.totalorder %s28, 1
      %p119 = por %p117, %p118
      %p120 = scmp.ne.s32.totalorder %s109, %s110
      %p121 = scmp.eq.s32.totalorder %s28, 0
      %p122 = por %p120, %p121
      %p123 = scmp.ne.s32.totalorder %s109, %s110
      %p124 = scmp.eq.s32.totalorder %s29, 1
      %p125 = por %p123, %p124
      %p127 = scmp.ne.s32.totalorder %s110, %s126
      %p128 = scmp.eq.s32.totalorder %s29, 0
      %p129 = por %p127, %p128
      %s130 = ssub.s32 %s23, %s30
      %p131 = scmp.eq.s32.totalorder %s130, 0
      %s133 = sadd.s32 %s132, 1
      %s134 = scalar_select %p131, %s132, %s133
      %p137 = pneg %p131
      %p138 = scmp.eq.s32.totalorder %s23, 1
      %p139 = por %p137, %p138
      %p140 = scmp.ne.s32.totalorder %s132, %s135
      %p141 = scmp.eq.s32.totalorder %s23, 0
      %p142 = por %p140, %p141
      %p143 = scmp.ne.s32.totalorder %s132, %s135
      %p144 = scmp.eq.s32.totalorder %s28, 1
      %p145 = por %p143, %p144
      %p146 = scmp.ne.s32.totalorder %s135, %s136
      %p147 = scmp.eq.s32.totalorder %s28, 0
      %p148 = por %p146, %p147
      %p149 = scmp.ne.s32.totalorder %s135, %s136
      %p150 = scmp.eq.s32.totalorder %s29, 1
      %p151 = por %p149, %p150
      %p153 = scmp.ne.s32.totalorder %s136, %s152
      %p154 = scmp.eq.s32.totalorder %s29, 0
      %p155 = por %p153, %p154
      %s156 = ssub.s32 %s23, %s30
      %p157 = scmp.eq.s32.totalorder %s156, 0
      %s159 = sadd.s32 %s158, 1
      %s160 = scalar_select %p157, %s158, %s159
      %p163 = pneg %p157
      %p164 = scmp.eq.s32.totalorder %s23, 1
      %p165 = por %p163, %p164
      %p166 = scmp.ne.s32.totalorder %s158, %s161
      %p167 = scmp.eq.s32.totalorder %s23, 0
      %p168 = por %p166, %p167
      %p169 = scmp.ne.s32.totalorder %s158, %s161
      %p170 = scmp.eq.s32.totalorder %s28, 1
      %p171 = por %p169, %p170
      %p172 = scmp.ne.s32.totalorder %s161, %s162
      %p173 = scmp.eq.s32.totalorder %s28, 0
      %p174 = por %p172, %p173
      %p175 = scmp.ne.s32.totalorder %s161, %s162
      %p176 = scmp.eq.s32.totalorder %s29, 1
      %p177 = por %p175, %p176
      %p179 = scmp.ne.s32.totalorder %s162, %s178
      %p180 = scmp.eq.s32.totalorder %s29, 0
      %p181 = por %p179, %p180
      %s182 = ssub.s32 %s23, %s30
      %p183 = scmp.eq.s32.totalorder %s182, 0
      %s185 = sadd.s32 %s184, 1
      %s186 = scalar_select %p183, %s184, %s185
      %p189 = pneg %p183
      %p190 = scmp.eq.s32.totalorder %s23, 1
      %p191 = por %p189, %p190
      %p192 = scmp.ne.s32.totalorder %s184, %s187
      %p193 = scmp.eq.s32.totalorder %s23, 0
      %p194 = por %p192, %p193
      %p195 = scmp.ne.s32.totalorder %s184, %s187
      %p196 = scmp.eq.s32.totalorder %s28, 1
      %p197 = por %p195, %p196
      %p198 = scmp.ne.s32.totalorder %s187, %s188
      %p199 = scmp.eq.s32.totalorder %s28, 0
      %p200 = por %p198, %p199
      %p201 = scmp.ne.s32.totalorder %s187, %s188
      %p202 = scmp.eq.s32.totalorder %s29, 1
      %p203 = por %p201, %p202
      %p205 = scmp.ne.s32.totalorder %s188, %s204
      %p206 = scmp.eq.s32.totalorder %s29, 0
      %p207 = por %p205, %p206
      %s208 = ssub.s32 %s23, %s30
      %p209 = scmp.eq.s32.totalorder %s208, 0
      %s211 = sadd.s32 %s210, 1
      %s212 = scalar_select %p209, %s210, %s211
      %p215 = pneg %p209
      %p216 = scmp.eq.s32.totalorder %s23, 1
      %p217 = por %p215, %p216
      %p218 = scmp.ne.s32.totalorder %s210, %s213
      %p219 = scmp.eq.s32.totalorder %s23, 0
      %p220 = por %p218, %p219
      %p221 = scmp.ne.s32.totalorder %s210, %s213
      %p222 = scmp.eq.s32.totalorder %s28, 1
      %p223 = por %p221, %p222
      %p224 = scmp.ne.s32.totalorder %s213, %s214
      %p225 = scmp.eq.s32.totalorder %s28, 0
      %p226 = por %p224, %p225
      %p227 = scmp.ne.s32.totalorder %s213, %s214
      %p228 = scmp.eq.s32.totalorder %s29, 1
      %p229 = por %p227, %p228
      %p231 = scmp.ne.s32.totalorder %s214, %s230
      %p232 = scmp.eq.s32.totalorder %s29, 0
      %p233 = por %p231, %p232
      %s234 = ssub.s32 %s23, %s30
      %p235 = scmp.eq.s32.totalorder %s234, 0
      %s237 = sadd.s32 %s236, 1
      %s238 = scalar_select %p235, %s236, %s237
      %p241 = pneg %p235
      %p242 = scmp.eq.s32.totalorder %s23, 1
      %p243 = por %p241, %p242
      %p244 = scmp.ne.s32.totalorder %s236, %s239
      %p245 = scmp.eq.s32.totalorder %s23, 0
      %p246 = por %p244, %p245
      %p247 = scmp.ne.s32.totalorder %s236, %s239
      %p248 = scmp.eq.s32.totalorder %s28, 1
      %p249 = por %p247, %p248
      %p250 = scmp.ne.s32.totalorder %s239, %s240
      %p251 = scmp.eq.s32.totalorder %s28, 0
      %p252 = por %p250, %p251
      %p253 = scmp.ne.s32.totalorder %s239, %s240
      %p254 = scmp.eq.s32.totalorder %s29, 1
      %p255 = por %p253, %p254
      %p257 = scmp.ne.s32.totalorder %s240, %s256
      %p258 = scmp.eq.s32.totalorder %s29, 0
      %p259 = por %p257, %p258
      %s260 = ssub.s32 %s23, %s30
      %p261 = scmp.eq.s32.totalorder %s260, 0
      %s263 = sadd.s32 %s262, 1
      %s264 = scalar_select %p261, %s262, %s263
      %p267 = pneg %p261
      %p268 = scmp.eq.s32.totalorder %s23, 1
      %p269 = por %p267, %p268
      %p270 = scmp.ne.s32.totalorder %s262, %s265
      %p271 = scmp.eq.s32.totalorder %s23, 0
      %p272 = por %p270, %p271
      %p273 = scmp.ne.s32.totalorder %s262, %s265
      %p274 = scmp.eq.s32.totalorder %s28, 1
      %p275 = por %p273, %p274
      %p276 = scmp.ne.s32.totalorder %s265, %s266
      %p277 = scmp.eq.s32.totalorder %s28, 0
      %p278 = por %p276, %p277
      %p279 = scmp.ne.s32.totalorder %s265, %s266
      %p280 = scmp.eq.s32.totalorder %s29, 1
      %p281 = por %p279, %p280
      %p283 = scmp.ne.s32.totalorder %s266, %s282
      %p284 = scmp.eq.s32.totalorder %s29, 0
      %p285 = por %p283, %p284
      %s286 = ssub.s32 %s23, %s30
      %p287 = scmp.eq.s32.totalorder %s286, 0
      %s289 = sadd.s32 %s288, 1
      %s290 = scalar_select %p287, %s288, %s289
      %p293 = pneg %p287
      %p294 = scmp.eq.s32.totalorder %s23, 1
      %p295 = por %p293, %p294
      %p296 = scmp.ne.s32.totalorder %s288, %s291
      %p297 = scmp.eq.s32.totalorder %s23, 0
      %p298 = por %p296, %p297
      %p299 = scmp.ne.s32.totalorder %s288, %s291
      %p300 = scmp.eq.s32.totalorder %s28, 1
      %p301 = por %p299, %p300
      %p302 = scmp.ne.s32.totalorder %s291, %s292
      %p303 = scmp.eq.s32.totalorder %s28, 0
      %p304 = por %p302, %p303
      %p305 = scmp.ne.s32.totalorder %s291, %s292
      %p306 = scmp.eq.s32.totalorder %s29, 1
      %p307 = por %p305, %p306
      %p309 = scmp.ne.s32.totalorder %s292, %s308
      %p310 = scmp.eq.s32.totalorder %s29, 0
      %p311 = por %p309, %p310
      %p312 = scmp.le.s32.totalorder 1, %s23
      %p313 = scmp.lt.s32.totalorder %s23, 3
      %p314 = pnand %p312, %p313
      %p315 = pneg %p314
      // Predicated region
      $region9: #{tpu_custom_call.1} parent=5 // pred_check
        _
      $region10: #{tpu_custom_call.1} parent=5 // pred_check_branch
        %317 = sbr.rel (%p314) target = $region12
      $region11: #{tpu_custom_call.1} parent=5 // pred_region
        %s318 = ssub.s32 %s23, 1
        // Predicated region
        $region13: #{tpu_custom_call.1} parent=11 // pred_check
          %p319 = pneg %p96
        $region14: #{tpu_custom_call.1} parent=11 // pred_check_branch
          %321 = sbr.rel (%p319) target = $region16
        $region15: #{tpu_custom_call.1} parent=11 // pred_region
          _
        $region16: #{tpu_custom_call.1} parent=11 // pred_fallthru
          _
      $region12: #{tpu_custom_call.1} parent=5 // pred_fallthru
        _
      %p322 = scmp.lt.s32.totalorder %s23, 2
      // Predicated region
      $region17: #{tpu_custom_call.1} parent=5 // pred_check
        %p323 = pneg %p322
      $region18: #{tpu_custom_call.1} parent=5 // pred_check_branch
        %325 = sbr.rel (%p323) target = $region20
      $region19: #{tpu_custom_call.1} parent=5 // pred_region
        // Predicated region
        $region21: #{tpu_custom_call.1} parent=19 // pred_check
          %p326 = pneg %p43
        $region22: #{tpu_custom_call.1} parent=19 // pred_check_branch
          %328 = sbr.rel (%p326) target = $region24
        $region23: #{tpu_custom_call.1} parent=19 // pred_region
          %p329 = scmp.lt.s32.totalorder %s23, 1
          %s330 = scalar_select %p329, %s23, 1
          %s331 = smul.addr %s330, 16
          %s332 = smul.addr %s331, 8
          %s333 = scalar_lea.vmem %s0, %s332
        $region24: #{tpu_custom_call.1} parent=19 // pred_fallthru
          _
        // Predicated region
        $region25: #{tpu_custom_call.1} parent=19 // pred_check
          %p334 = pneg %p69
        $region26: #{tpu_custom_call.1} parent=19 // pred_check_branch
          %336 = sbr.rel (%p334) target = $region28
        $region27: #{tpu_custom_call.1} parent=19 // pred_region
          %p337 = scmp.lt.s32.totalorder %s23, 1
          %s338 = scalar_select %p337, %s23, 1
          %s339 = smul.addr %s338, 4
          %s340 = scalar_lea.vmem %s1, %s339
        $region28: #{tpu_custom_call.1} parent=19 // pred_fallthru
          _
        // Predicated region
        $region29: #{tpu_custom_call.1} parent=19 // pred_check
          %p341 = pneg %p116
        $region30: #{tpu_custom_call.1} parent=19 // pred_check_branch
          %343 = sbr.rel (%p341) target = $region32
        $region31: #{tpu_custom_call.1} parent=19 // pred_region
          %p344 = scmp.lt.s32.totalorder %s23, 1
          %s345 = scalar_select %p344, %s23, 1
          %s346 = smul.addr %s345, 8
          %s347 = scalar_lea.vmem %s3, %s346
        $region32: #{tpu_custom_call.1} parent=19 // pred_fallthru
          _
        // Predicated region
        $region33: #{tpu_custom_call.1} parent=19 // pred_check
          %p348 = pneg %p142
        $region34: #{tpu_custom_call.1} parent=19 // pred_check_branch
          %350 = sbr.rel (%p348) target = $region36
        $region35: #{tpu_custom_call.1} parent=19 // pred_region
          %p351 = scmp.lt.s32.totalorder %s23, 1
          %s352 = scalar_select %p351, %s23, 1
          %s353 = smul.addr %s352, 8
          %s354 = scalar_lea.vmem %s4, %s353
        $region36: #{tpu_custom_call.1} parent=19 // pred_fallthru
          _
        // Predicated region
        $region37: #{tpu_custom_call.1} parent=19 // pred_check
          %p355 = pneg %p168
        $region38: #{tpu_custom_call.1} parent=19 // pred_check_branch
          %357 = sbr.rel (%p355) target = $region40
        $region39: #{tpu_custom_call.1} parent=19 // pred_region
          %p358 = scmp.lt.s32.totalorder %s23, 1
          %s359 = scalar_select %p358, %s23, 1
          %s360 = smul.addr %s359, 8
          %s361 = scalar_lea.vmem %s5, %s360
        $region40: #{tpu_custom_call.1} parent=19 // pred_fallthru
          _
        // Predicated region
        $region41: #{tpu_custom_call.1} parent=19 // pred_check
          %p362 = pneg %p194
        $region42: #{tpu_custom_call.1} parent=19 // pred_check_branch
          %364 = sbr.rel (%p362) target = $region44
        $region43: #{tpu_custom_call.1} parent=19 // pred_region
          %p365 = scmp.lt.s32.totalorder %s23, 1
          %s366 = scalar_select %p365, %s23, 1
          %s367 = smul.addr %s366, 8
          %s368 = scalar_lea.vmem %s6, %s367
        $region44: #{tpu_custom_call.1} parent=19 // pred_fallthru
          _
        // Predicated region
        $region45: #{tpu_custom_call.1} parent=19 // pred_check
          %p369 = pneg %p220
        $region46: #{tpu_custom_call.1} parent=19 // pred_check_branch
          %371 = sbr.rel (%p369) target = $region48
        $region47: #{tpu_custom_call.1} parent=19 // pred_region
          %p372 = scmp.lt.s32.totalorder %s23, 1
          %s373 = scalar_select %p372, %s23, 1
          %s374 = scalar_lea.vmem %s7, %s373
        $region48: #{tpu_custom_call.1} parent=19 // pred_fallthru
          _
      $region20: #{tpu_custom_call.1} parent=5 // pred_fallthru
        _
      %p375 = scmp.le.s32.totalorder 1, %s23
      %p376 = scmp.lt.s32.totalorder %s23, 3
      %p377 = pnand %p375, %p376
      %p378 = pneg %p377
      // Predicated region
      $region49: #{tpu_custom_call.1} parent=5 // pred_check
        _
      $region50: #{tpu_custom_call.1} parent=5 // pred_check_branch
        %380 = sbr.rel (%p377) target = $region52
      $region51: #{tpu_custom_call.1} parent=5 // pred_region
        %s381 = ssub.s32 %s23, 1
        %p382 = scmp.lt.s32.totalorder %s28, 1
        %s383 = scalar_select %p382, %s28, 1
        %s384 = smul.addr %s383, 16
        %s385 = smul.addr %s384, 8
        %s386 = scalar_lea.vmem %s0, %s385
        %p387 = pneg %p49
        %p388 = pneg %p46
        %p389 = scmp.lt.s32.totalorder %s28, 1
        %s390 = scalar_select %p389, %s28, 1
        %s391 = smul.addr %s390, 4
        %s392 = scalar_lea.vmem %s1, %s391
        %p393 = pneg %p75
        %p394 = pneg %p72
        %p395 = pneg %p96
        %p396 = pneg %p93
        %p397 = scmp.lt.s32.totalorder %s28, 1
        %s398 = scalar_select %p397, %s28, 1
        %s399 = smul.addr %s398, 8
        %s400 = scalar_lea.vmem %s3, %s399
        %p401 = pneg %p122
        %p402 = pneg %p119
        %p403 = scmp.lt.s32.totalorder %s28, 1
        %s404 = scalar_select %p403, %s28, 1
        %s405 = smul.addr %s404, 8
        %s406 = scalar_lea.vmem %s4, %s405
        %p407 = pneg %p148
        %p408 = pneg %p145
        %p409 = scmp.lt.s32.totalorder %s28, 1
        %s410 = scalar_select %p409, %s28, 1
        %s411 = smul.addr %s410, 8
        %s412 = scalar_lea.vmem %s5, %s411
        %p413 = pneg %p174
        %p414 = pneg %p171
        %p415 = scmp.lt.s32.totalorder %s28, 1
        %s416 = scalar_select %p415, %s28, 1
        %s417 = smul.addr %s416, 8
        %s418 = scalar_lea.vmem %s6, %s417
        %p419 = pneg %p200
        %p420 = pneg %p197
        %p421 = scmp.lt.s32.totalorder %s28, 1
        %s422 = scalar_select %p421, %s28, 1
        %s423 = scalar_lea.vmem %s7, %s422
        %p424 = pneg %p226
        %p425 = pneg %p223
        %p426 = pneg %p252
        %p427 = pneg %p249
        %s428 = sand.u32 %s239, 1
        %s429 = scalar_lea.sflag [#allocation3], %s428
        %s430 = sand.u32 %s239, 1
        %s431 = smul.addr %s430, 4
        %s432 = scalar_lea.vmem [#allocation2], %s431
        %p433 = pneg %p278
        %p434 = pneg %p275
        %s435 = sand.u32 %s265, 1
        %s436 = scalar_lea.sflag [#allocation5], %s435
        %s437 = sand.u32 %s265, 1
        %s438 = smul.addr %s437, 80
        %s439 = scalar_lea.vmem [#allocation4], %s438
        %p440 = pneg %p304
        %p441 = pneg %p301
        %p442 = scmp.lt.s32.totalorder %s28, 1
        %s443 = scalar_select %p442, %s28, 1
        %s444 = smul.addr %s443, 4
        %s445 = scalar_lea.vmem %s10, %s444
        %p446 = scmp.lt.s32.totalorder %s28, 1
        %s447 = scalar_select %p446, %s28, 1
        %s448 = smul.addr %s447, 16
        %s449 = smul.addr %s448, 8
        %s450 = scalar_lea.vmem %s0, %s449
        %p451 = scmp.lt.s32.totalorder %s28, 1
        %s452 = scalar_select %p451, %s28, 1
        %s453 = smul.addr %s452, 4
        %s454 = scalar_lea.vmem %s1, %s453
        %p455 = scmp.lt.s32.totalorder %s28, 1
        %s456 = scalar_select %p455, %s28, 1
        %s457 = smul.addr %s456, 8
        %s458 = scalar_lea.vmem %s3, %s457
        %p459 = scmp.lt.s32.totalorder %s28, 1
        %s460 = scalar_select %p459, %s28, 1
        %s461 = smul.addr %s460, 8
        %s462 = scalar_lea.vmem %s4, %s461
        %p463 = scmp.lt.s32.totalorder %s28, 1
        %s464 = scalar_select %p463, %s28, 1
        %s465 = smul.addr %s464, 8
        %s466 = scalar_lea.vmem %s5, %s465
        %p467 = scmp.lt.s32.totalorder %s28, 1
        %s468 = scalar_select %p467, %s28, 1
        %s469 = smul.addr %s468, 8
        %s470 = scalar_lea.vmem %s6, %s469
        %p471 = scmp.lt.s32.totalorder %s28, 1
        %s472 = scalar_select %p471, %s28, 1
        %s473 = scalar_lea.vmem %s7, %s472
        %p474 = scmp.lt.s32.totalorder %s28, 1
        %s475 = scalar_select %p474, %s28, 1
        %s476 = smul.addr %s475, 4
        %s477 = scalar_lea.vmem %s10, %s476
        %v478 = vld [vmem:[%s2] sm:$0x3]
        %v479 = vlaneseq
        %v480 = vshrl.u32 %v479, 7
        %v481 = vlaneseq
        %v482 = vand.u32 %v481, 127
        %v483 = vadd.s32 %v480, 8
        %v484 = vadd.s32 %v480, 16
        %v485 = vadd.s32 %v480, 24
        %v486 = vadd.s32 %v480, 32
        %v487 = vadd.s32 %v480, 40
        %v488 = vadd.s32 %v480, 48
        %v489 = vadd.s32 %v480, 56
        %v490 = vadd.s32 %v480, 64
        %v491 = vadd.s32 %v480, 72
        %v492 = vadd.s32 %v480, 80
        %v493 = vadd.s32 %v480, 88
        %v494 = vadd.s32 %v480, 96
        %v495 = vadd.s32 %v480, 104
        %v496 = vadd.s32 %v480, 112
        %v497 = vadd.s32 %v480, 120
        %vm498 = vcmp.lt.s32.totalorder %v480, %v482
        %vm499 = vcmp.lt.s32.totalorder %v483, %v482
        %vm500 = vcmp.lt.s32.totalorder %v484, %v482
        %vm501 = vcmp.lt.s32.totalorder %v485, %v482
        %vm502 = vcmp.lt.s32.totalorder %v486, %v482
        %vm503 = vcmp.lt.s32.totalorder %v487, %v482
        %vm504 = vcmp.lt.s32.totalorder %v488, %v482
        %vm505 = vcmp.lt.s32.totalorder %v489, %v482
        %vm506 = vcmp.lt.s32.totalorder %v490, %v482
        %vm507 = vcmp.lt.s32.totalorder %v491, %v482
        %vm508 = vcmp.lt.s32.totalorder %v492, %v482
        %vm509 = vcmp.lt.s32.totalorder %v493, %v482
        %vm510 = vcmp.lt.s32.totalorder %v494, %v482
        %vm511 = vcmp.lt.s32.totalorder %v495, %v482
        %vm512 = vcmp.lt.s32.totalorder %v496, %v482
        %vm513 = vcmp.lt.s32.totalorder %v497, %v482
        %v514 = vsel %vm498, 1, 0
        %v515 = vsel %vm499, 1, 0
        %v516 = vsel %vm500, 1, 0
        %v517 = vsel %vm501, 1, 0
        %v518 = vsel %vm502, 1, 0
        %v519 = vsel %vm503, 1, 0
        %v520 = vsel %vm504, 1, 0
        %v521 = vsel %vm505, 1, 0
        %v522 = vsel %vm506, 1, 0
        %v523 = vsel %vm507, 1, 0
        %v524 = vsel %vm508, 1, 0
        %v525 = vsel %vm509, 1, 0
        %v526 = vsel %vm510, 1, 0
        %v527 = vsel %vm511, 1, 0
        %v528 = vsel %vm512, 1, 0
        %v529 = vsel %vm513, 1, 0
        %v530 = vcvt.s32.f32 %v514
        %v531 = vcvt.s32.f32 %v515
        %v532 = vcvt.s32.f32 %v516
        %v533 = vcvt.s32.f32 %v517
        %v534 = vcvt.s32.f32 %v518
        %v535 = vcvt.s32.f32 %v519
        %v536 = vcvt.s32.f32 %v520
        %v537 = vcvt.s32.f32 %v521
        %v538 = vcvt.s32.f32 %v522
        %v539 = vcvt.s32.f32 %v523
        %v540 = vcvt.s32.f32 %v524
        %v541 = vcvt.s32.f32 %v525
        %v542 = vcvt.s32.f32 %v526
        %v543 = vcvt.s32.f32 %v527
        %v544 = vcvt.s32.f32 %v528
        %v545 = vcvt.s32.f32 %v529
        %v546 = vld [vmem:[%s450] sm:$0xff]
        %v547 = vld [vmem:[%s450 + $0x8] sm:$0xff]
        %v548 = vld [vmem:[%s450 + $0x10] sm:$0xff]
        %v549 = vld [vmem:[%s450 + $0x18] sm:$0xff]
        %v550 = vld [vmem:[%s450 + $0x20] sm:$0xff]
        %v551 = vld [vmem:[%s450 + $0x28] sm:$0xff]
        %v552 = vld [vmem:[%s450 + $0x30] sm:$0xff]
        %v553 = vld [vmem:[%s450 + $0x38] sm:$0xff]
        %v554 = vld [vmem:[%s450 + $0x40] sm:$0xff]
        %v555 = vld [vmem:[%s450 + $0x48] sm:$0xff]
        %v556 = vld [vmem:[%s450 + $0x50] sm:$0xff]
        %v557 = vld [vmem:[%s450 + $0x58] sm:$0xff]
        %v558 = vld [vmem:[%s450 + $0x60] sm:$0xff]
        %v559 = vld [vmem:[%s450 + $0x68] sm:$0xff]
        %v560 = vld [vmem:[%s450 + $0x70] sm:$0xff]
        %v561 = vld [vmem:[%s450 + $0x78] sm:$0xff]
        %v562 = vld [vmem:[%s454] sm:$0xf]
        %v563 = vld [vmem:[%s458] sm:$0xff]
        %v564 = vld [vmem:[%s462] sm:$0xff]
        %v565 = vld [vmem:[%s466] sm:$0xff]
        %v566 = vld [vmem:[%s470] sm:$0xff]
        %v567 = vld [vmem:[%s473] sm:$0x1]
        %568 = vset.pattern.permute.xlu0 0
        %569 = vperm.xlu0 %568, %v563
        %v570 = vpop.permute.xlu0 %569
        %vm571 = vcmp.eq.s32.totalorder %v482, %v570
        %v572 = vsel %vm571, 1, 0
        %v573 = vcvt.s32.f32 %v572
        %vm574 = vcmask 654336
        %v576 = vsel %vm574, %v573, 0
        %v579 = vsel %vm574, %v546, 0
        %v582 = vsel %vm574, %v547, 0
        %v585 = vsel %vm574, %v548, 0
        %v588 = vsel %vm574, %v549, 0
        %v591 = vsel %vm574, %v550, 0
        %v594 = vsel %vm574, %v551, 0
        %v597 = vsel %vm574, %v552, 0
        %v600 = vsel %vm574, %v553, 0
        %v603 = vsel %vm574, %v554, 0
        %v606 = vsel %vm574, %v555, 0
        %v609 = vsel %vm574, %v556, 0
        %v612 = vsel %vm574, %v557, 0
        %v615 = vsel %vm574, %v558, 0
        %v618 = vsel %vm574, %v559, 0
        %v621 = vsel %vm574, %v560, 0
        %v624 = vsel %vm574, %v561, 0
        %626 = vmatprep.subr.mxu0 0.0
        %627 = vmatpush1.xpose.msra.mxu0 %v579
        %628 = vmatprep.subr.mxu0 0.0
        %629 = vmatpush1.xpose.msra.mxu0 %v582
        %630 = vmatprep.subr.mxu0 0.0
        %631 = vmatpush1.xpose.msra.mxu0 %v585
        %632 = vmatprep.subr.mxu0 0.0
        %633 = vmatpush1.xpose.msra.mxu0 %v588
        %634 = vmatprep.subr.mxu0 0.0
        %635 = vmatpush1.xpose.msra.mxu0 %v591
        %636 = vmatprep.subr.mxu0 0.0
        %637 = vmatpush1.xpose.msra.mxu0 %v594
        %638 = vmatprep.subr.mxu0 0.0
        %639 = vmatpush1.xpose.msra.mxu0 %v597
        %640 = vmatprep.subr.mxu0 0.0
        %641 = vmatpush1.xpose.msra.mxu0 %v600
        %642 = vmatprep.subr.mxu0 0.0
        %643 = vmatpush1.xpose.msra.mxu0 %v603
        %644 = vmatprep.subr.mxu0 0.0
        %645 = vmatpush1.xpose.msra.mxu0 %v606
        %646 = vmatprep.subr.mxu0 0.0
        %647 = vmatpush1.xpose.msra.mxu0 %v609
        %648 = vmatprep.subr.mxu0 0.0
        %649 = vmatpush1.xpose.msra.mxu0 %v612
        %650 = vmatprep.subr.mxu0 0.0
        %651 = vmatpush1.xpose.msra.mxu0 %v615
        %652 = vmatprep.subr.mxu0 0.0
        %653 = vmatpush1.xpose.msra.mxu0 %v618
        %654 = vmatprep.subr.mxu0 0.0
        %655 = vmatpush1.xpose.msra.mxu0 %v621
        %656 = vmatprep.subr.mxu0 0.0
        %657 = vmatpush1.xpose.msra.mxu0 %v624
        %658 = vmatprep.subr.mxu0 0.0
        %659 = vmatpush1.xpose.msra.mxu0 0.0
        %660 = vmatprep.subr.mxu0 0.0
        %661 = vmatpush1.xpose.msra.mxu0 0.0
        %662 = vmatprep.subr.mxu0 0.0
        %663 = vmatpush1.xpose.msra.mxu0 0.0
        %664 = vmatprep.subr.mxu0 0.0
        %665 = vmatpush1.xpose.msra.mxu0 0.0
        %666 = vmatprep.subr.mxu0 0.0
        %667 = vmatpush1.xpose.msra.mxu0 0.0
        %668 = vmatprep.subr.mxu0 0.0
        %669 = vmatpush1.xpose.msra.mxu0 0.0
        %670 = vmatprep.subr.mxu0 0.0
        %671 = vmatpush1.xpose.msra.mxu0 0.0
        %672 = vmatprep.subr.mxu0 0.0
        %673 = vmatpush1.xpose.msra.mxu0 0.0
        %674 = vmatprep.subr.mxu0 0.0
        %675 = vmatpush1.xpose.msra.mxu0 0.0
        %676 = vmatprep.subr.mxu0 0.0
        %677 = vmatpush1.xpose.msra.mxu0 0.0
        %678 = vmatprep.subr.mxu0 0.0
        %679 = vmatpush1.xpose.msra.mxu0 0.0
        %680 = vmatprep.subr.mxu0 0.0
        %681 = vmatpush1.xpose.msra.mxu0 0.0
        %682 = vmatprep.subr.mxu0 0.0
        %683 = vmatpush1.xpose.msra.mxu0 0.0
        %684 = vmatprep.subr.mxu0 0.0
        %685 = vmatpush1.xpose.msra.mxu0 0.0
        %686 = vmatprep.subr.mxu0 0.0
        %687 = vmatpush1.xpose.msra.mxu0 0.0
        %688 = vmatprep.subr.mxu0 0.0
        %689 = vmatpush1.xpose.msra.mxu0 0.0
        %690 = vmatprep.mubr.f32.mxu0 0.0
        %691 = vmatmul.mubr.f32.gmra.mrb[0].mxu0 %v576
        %v692 = vpop.f32.mrb[0].mxu0
        %v693 = vadd.f32 0.0, %v692
        %v694 = vpop.f32.mrb[0].mxu0
        %695 = vdwg.mxu0
        %697 = vrot.lane.b32.xlu0 %v564, 2
        %v698 = vpop.permute.xlu0 %697
        %v700 = vsub.f32 %v564, %v698
        %v701 = vadd.f32 %v700, 1e-07
        %v703 = vrot.slane %v562, 6
        %v705 = vsub.f32 %v562, %v703
        %v706 = vadd.f32 %v705, 1e-07
        %707 = vset.pattern.permute.xlu0 2
        %708 = vperm.xlu0 %707, %v564
        %v709 = vpop.permute.xlu0 %708
        %v711 = vlaneseq
        %v712 = vshrl.u32 %v711, 7
        %v713 = vsub.s32 2, %v712
        %v714 = vrot.slane %v562, %v713
        %v715 = vmin.f32 %v709, %v714
        %716 = vset.pattern.permute.xlu0 0
        %717 = vperm.xlu0 %716, %v564
        %v718 = vpop.permute.xlu0 %717
        %v720 = vlaneseq
        %v721 = vshrl.u32 %v720, 7
        %v722 = vsub.s32 0, %v721
        %v723 = vrot.slane %v562, %v722
        %v724 = vmax.f32 %v718, %v723
        %v725 = vsub.f32 %v715, %v724
        %v726 = vmax.f32 %v725, 0.0
        %727 = vset.pattern.permute.xlu0 3
        %728 = vperm.xlu0 %727, %v564
        %v729 = vpop.permute.xlu0 %728
        %v731 = vlaneseq
        %v732 = vshrl.u32 %v731, 7
        %v733 = vsub.s32 3, %v732
        %v734 = vrot.slane %v562, %v733
        %v735 = vmin.f32 %v729, %v734
        %736 = vset.pattern.permute.xlu0 1
        %737 = vperm.xlu0 %736, %v564
        %v738 = vpop.permute.xlu0 %737
        %v740 = vlaneseq
        %v741 = vshrl.u32 %v740, 7
        %v742 = vsub.s32 1, %v741
        %v743 = vrot.slane %v562, %v742
        %v744 = vmax.f32 %v738, %v743
        %v745 = vsub.f32 %v735, %v744
        %v746 = vmax.f32 %v745, 0.0
        %v747 = vmul.f32 %v726, %v746
        %749 = vrot.lane.b32.xlu0 %v701, 127
        %v750 = vpop.permute.xlu0 %749
        %v752 = vmul.f32 %v700, %v750
        %v754 = vrot.slane %v706, 1
        %v756 = vmul.f32 %v705, %v754
        %758 = vset.pattern.permute.xlu0 2
        %759 = vperm.xlu0 %758, %v752
        %v760 = vpop.permute.xlu0 %759
        %v762 = vlaneseq
        %v763 = vshrl.u32 %v762, 7
        %v764 = vsub.s32 2, %v763
        %v765 = vrot.slane %v756, %v764
        %v766 = vadd.f32 %v760, %v765
        %v767 = vsub.f32 %v766, %v747
        %v768 = vadd.f32 %v767, 1e-07
        %v769 = vrcp.pop %v768
        %v770 = vmul.f32 %v747, %v769
        %v771 = vmax.f32 %v709, %v714
        %v772 = vmin.f32 %v718, %v723
        %v773 = vsub.f32 %v771, %v772
        %v774 = vmax.f32 %v729, %v734
        %v775 = vmin.f32 %v738, %v743
        %v776 = vsub.f32 %v774, %v775
        %v777 = vmul.f32 %v773, %v773
        %v778 = vmul.f32 %v776, %v776
        %v779 = vadd.f32 %v777, %v778
        %v780 = vadd.f32 %v779, 1e-07
        %v781 = vrot.slane %v562, 2
        %v783 = vadd.f32 %v562, %v781
        %v784 = vlaneseq
        %v785 = vshrl.u32 %v784, 7
        %v786 = vsub.s32 0, %v785
        %v787 = vrot.slane %v783, %v786
        %v788 = vsub.f32 %v787, %v718
        %v789 = vsub.f32 %v788, %v709
        %v790 = vmul.f32 %v789, %v789
        %v791 = vlaneseq
        %v792 = vshrl.u32 %v791, 7
        %v793 = vsub.s32 1, %v792
        %v794 = vrot.slane %v783, %v793
        %v795 = vsub.f32 %v794, %v738
        %v796 = vsub.f32 %v795, %v729
        %v797 = vmul.f32 %v796, %v796
        %v798 = vadd.f32 %v790, %v797
        %v799 = vrcp.pop 4.0
        %v800 = vmul.f32 %v798, %v799
        %v802 = vlaneseq
        %v803 = vshrl.u32 %v802, 7
        %v804 = vsub.s32 0, %v803
        %v805 = vrot.slane %v567, %v804
        %808 = vset.pattern.permute.xlu0 0
        %809 = vperm.xlu0 %808, %v566
        %v810 = vpop.permute.xlu0 %809
        %v812 = vsub.f32 %v805, %v810
        %v813 = vmul.f32 %v812, %v812
        %v814 = vmul.f32 %v813, 0.40528473
        %v815 = vsub.f32 %v814, %v770
        %v816 = vadd.f32 %v815, 1.0000001
        %v817 = vrcp.pop %v816
        %v818 = vmul.f32 %v814, %v817
        %v819 = vrcp.pop %v780
        %v820 = vmul.f32 %v800, %v819
        %v821 = vmul.f32 %v814, %v818
        %v822 = vadd.f32 %v820, %v821
        %v823 = vsub.f32 %v770, %v822
        %v824 = vmax.f32 %v823, 0.0
        %v825 = vmul.f32 %v824, %v824
        %v826 = vmul.f32 %v825, %v825
        %v827 = vmul.f32 %v826, %v825
        %v828 = vmul.f32 %v693, %v827
        %v829 = vlaneseq
        %v830 = vshrl.u32 %v829, 7
        %v831 = vsub.s32 0, %v830
        %v832 = vrot.slane %v478, %v831
        %v833 = vsub.f32 %v832, %v718
        %v834 = vlaneseq
        %v835 = vshrl.u32 %v834, 7
        %v836 = vsub.s32 1, %v835
        %v837 = vrot.slane %v478, %v836
        %v838 = vsub.f32 %v837, %v738
        %v839 = vmin.f32 %v833, %v838
        %v840 = vsub.f32 %v709, %v832
        %v841 = vsub.f32 %v729, %v837
        %v842 = vmin.f32 %v840, %v841
        %v843 = vmin.f32 %v839, %v842
        %vm844 = vcmp.gt.f32.partialorder %v843, 1e-09
        %v845 = vsel %vm844, 1, 0
        %v846 = vcvt.s32.f32 %v845
        %v847 = vmul.f32 %v828, %v846
        %848 = vmax.xlane.f32.xlu0 %v847
        %v849 = vpop.xlane.xlu0 %848
        %vm850 = vcmp.eq.f32.partialorder %v847, %v849
        %v851 = vsel %vm850, 1, 0
        %v852 = vcvt.s32.f32 %v851
        %853 = vmatprep.subr.mxu0 0.0
        %854 = vmatpush1.msra.mxu0 %v530
        %855 = vmatprep.subr.mxu0 0.0
        %856 = vmatpush1.msra.mxu0 %v531
        %857 = vmatprep.subr.mxu0 0.0
        %858 = vmatpush1.msra.mxu0 %v532
        %859 = vmatprep.subr.mxu0 0.0
        %860 = vmatpush1.msra.mxu0 %v533
        %861 = vmatprep.subr.mxu0 0.0
        %862 = vmatpush1.msra.mxu0 %v534
        %863 = vmatprep.subr.mxu0 0.0
        %864 = vmatpush1.msra.mxu0 %v535
        %865 = vmatprep.subr.mxu0 0.0
        %866 = vmatpush1.msra.mxu0 %v536
        %867 = vmatprep.subr.mxu0 0.0
        %868 = vmatpush1.msra.mxu0 %v537
        %869 = vmatprep.subr.mxu0 0.0
        %870 = vmatpush1.msra.mxu0 %v538
        %871 = vmatprep.subr.mxu0 0.0
        %872 = vmatpush1.msra.mxu0 %v539
        %873 = vmatprep.subr.mxu0 0.0
        %874 = vmatpush1.msra.mxu0 %v540
        %875 = vmatprep.subr.mxu0 0.0
        %876 = vmatpush1.msra.mxu0 %v541
        %877 = vmatprep.subr.mxu0 0.0
        %878 = vmatpush1.msra.mxu0 %v542
        %879 = vmatprep.subr.mxu0 0.0
        %880 = vmatpush1.msra.mxu0 %v543
        %881 = vmatprep.subr.mxu0 0.0
        %882 = vmatpush1.msra.mxu0 %v544
        %883 = vmatprep.subr.mxu0 0.0
        %884 = vmatpush1.msra.mxu0 %v545
        %885 = vmatprep.subr.mxu0 0.0
        %886 = vmatpush1.msra.mxu0 0.0
        %887 = vmatprep.subr.mxu0 0.0
        %888 = vmatpush1.msra.mxu0 0.0
        %889 = vmatprep.subr.mxu0 0.0
        %890 = vmatpush1.msra.mxu0 0.0
        %891 = vmatprep.subr.mxu0 0.0
        %892 = vmatpush1.msra.mxu0 0.0
        %893 = vmatprep.subr.mxu0 0.0
        %894 = vmatpush1.msra.mxu0 0.0
        %895 = vmatprep.subr.mxu0 0.0
        %896 = vmatpush1.msra.mxu0 0.0
        %897 = vmatprep.subr.mxu0 0.0
        %898 = vmatpush1.msra.mxu0 0.0
        %899 = vmatprep.subr.mxu0 0.0
        %900 = vmatpush1.msra.mxu0 0.0
        %901 = vmatprep.subr.mxu0 0.0
        %902 = vmatpush1.msra.mxu0 0.0
        %903 = vmatprep.subr.mxu0 0.0
        %904 = vmatpush1.msra.mxu0 0.0
        %905 = vmatprep.subr.mxu0 0.0
        %906 = vmatpush1.msra.mxu0 0.0
        %907 = vmatprep.subr.mxu0 0.0
        %908 = vmatpush1.msra.mxu0 0.0
        %909 = vmatprep.subr.mxu0 0.0
        %910 = vmatpush1.msra.mxu0 0.0
        %911 = vmatprep.subr.mxu0 0.0
        %912 = vmatpush1.msra.mxu0 0.0
        %913 = vmatprep.subr.mxu0 0.0
        %914 = vmatpush1.msra.mxu0 0.0
        %915 = vmatprep.subr.mxu0 0.0
        %916 = vmatpush1.msra.mxu0 0.0
        %917 = vmatprep.mubr.f32.mxu0 0.0
        %918 = vmatmul.mubr.f32.gmra.mrb[0].mxu0 %v852
        %v919 = vpop.f32.mrb[0].mxu0
        %v920 = vadd.f32 0.0, %v919
        %v921 = vpop.f32.mrb[0].mxu0
        %922 = vdwg.mxu0
        %vm923 = vcmp.lt.f32.partialorder %v920, 0.5
        %v924 = vsel %vm923, 1, 0
        %v925 = vcvt.s32.f32 %v924
        %v926 = vmul.f32 %v852, %v925
        %vm927 = vcmp.gt.f32.partialorder %v926, 0.0
        %v928 = vsel %vm927, -1e+30, %v847
        %v929 = vadd.f32 %v926, 0.0
        %930 = vmax.xlane.f32.xlu0 %v928
        %v931 = vpop.xlane.xlu0 %930
        %vm932 = vcmp.eq.f32.partialorder %v928, %v931
        %v933 = vsel %vm932, 1, 0
        %v934 = vcvt.s32.f32 %v933
        %935 = vmatprep.subr.mxu0 0.0
        %936 = vmatpush1.msra.mxu0 %v530
        %937 = vmatprep.subr.mxu0 0.0
        %938 = vmatpush1.msra.mxu0 %v531
        %939 = vmatprep.subr.mxu0 0.0
        %940 = vmatpush1.msra.mxu0 %v532
        %941 = vmatprep.subr.mxu0 0.0
        %942 = vmatpush1.msra.mxu0 %v533
        %943 = vmatprep.subr.mxu0 0.0
        %944 = vmatpush1.msra.mxu0 %v534
        %945 = vmatprep.subr.mxu0 0.0
        %946 = vmatpush1.msra.mxu0 %v535
        %947 = vmatprep.subr.mxu0 0.0
        %948 = vmatpush1.msra.mxu0 %v536
        %949 = vmatprep.subr.mxu0 0.0
        %950 = vmatpush1.msra.mxu0 %v537
        %951 = vmatprep.subr.mxu0 0.0
        %952 = vmatpush1.msra.mxu0 %v538
        %953 = vmatprep.subr.mxu0 0.0
        %954 = vmatpush1.msra.mxu0 %v539
        %955 = vmatprep.subr.mxu0 0.0
        %956 = vmatpush1.msra.mxu0 %v540
        %957 = vmatprep.subr.mxu0 0.0
        %958 = vmatpush1.msra.mxu0 %v541
        %959 = vmatprep.subr.mxu0 0.0
        %960 = vmatpush1.msra.mxu0 %v542
        %961 = vmatprep.subr.mxu0 0.0
        %962 = vmatpush1.msra.mxu0 %v543
        %963 = vmatprep.subr.mxu0 0.0
        %964 = vmatpush1.msra.mxu0 %v544
        %965 = vmatprep.subr.mxu0 0.0
        %966 = vmatpush1.msra.mxu0 %v545
        %967 = vmatprep.subr.mxu0 0.0
        %968 = vmatpush1.msra.mxu0 0.0
        %969 = vmatprep.subr.mxu0 0.0
        %970 = vmatpush1.msra.mxu0 0.0
        %971 = vmatprep.subr.mxu0 0.0
        %972 = vmatpush1.msra.mxu0 0.0
        %973 = vmatprep.subr.mxu0 0.0
        %974 = vmatpush1.msra.mxu0 0.0
        %975 = vmatprep.subr.mxu0 0.0
        %976 = vmatpush1.msra.mxu0 0.0
        %977 = vmatprep.subr.mxu0 0.0
        %978 = vmatpush1.msra.mxu0 0.0
        %979 = vmatprep.subr.mxu0 0.0
        %980 = vmatpush1.msra.mxu0 0.0
        %981 = vmatprep.subr.mxu0 0.0
        %982 = vmatpush1.msra.mxu0 0.0
        %983 = vmatprep.subr.mxu0 0.0
        %984 = vmatpush1.msra.mxu0 0.0
        %985 = vmatprep.subr.mxu0 0.0
        %986 = vmatpush1.msra.mxu0 0.0
        %987 = vmatprep.subr.mxu0 0.0
        %988 = vmatpush1.msra.mxu0 0.0
        %989 = vmatprep.subr.mxu0 0.0
        %990 = vmatpush1.msra.mxu0 0.0
        %991 = vmatprep.subr.mxu0 0.0
        %992 = vmatpush1.msra.mxu0 0.0
        %993 = vmatprep.subr.mxu0 0.0
        %994 = vmatpush1.msra.mxu0 0.0
        %995 = vmatprep.subr.mxu0 0.0
        %996 = vmatpush1.msra.mxu0 0.0
        %997 = vmatprep.subr.mxu0 0.0
        %998 = vmatpush1.msra.mxu0 0.0
        %999 = vmatprep.mubr.f32.mxu0 0.0
        %1000 = vmatmul.mubr.f32.gmra.mrb[0].mxu0 %v934
        %v1001 = vpop.f32.mrb[0].mxu0
        %v1002 = vadd.f32 0.0, %v1001
        %v1003 = vpop.f32.mrb[0].mxu0
        %1004 = vdwg.mxu0
        %vm1005 = vcmp.lt.f32.partialorder %v1002, 0.5
        %v1006 = vsel %vm1005, 1, 0
        %v1007 = vcvt.s32.f32 %v1006
        %v1008 = vmul.f32 %v934, %v1007
        %vm1009 = vcmp.gt.f32.partialorder %v1008, 0.0
        %v1010 = vsel %vm1009, -1e+30, %v928
        %v1011 = vadd.f32 %v929, %v1008
        %1012 = vmax.xlane.f32.xlu0 %v1010
        %v1013 = vpop.xlane.xlu0 %1012
        %vm1014 = vcmp.eq.f32.partialorder %v1010, %v1013
        %v1015 = vsel %vm1014, 1, 0
        %v1016 = vcvt.s32.f32 %v1015
        %1017 = vmatprep.subr.mxu0 0.0
        %1018 = vmatpush1.msra.mxu0 %v530
        %1019 = vmatprep.subr.mxu0 0.0
        %1020 = vmatpush1.msra.mxu0 %v531
        %1021 = vmatprep.subr.mxu0 0.0
        %1022 = vmatpush1.msra.mxu0 %v532
        %1023 = vmatprep.subr.mxu0 0.0
        %1024 = vmatpush1.msra.mxu0 %v533
        %1025 = vmatprep.subr.mxu0 0.0
        %1026 = vmatpush1.msra.mxu0 %v534
        %1027 = vmatprep.subr.mxu0 0.0
        %1028 = vmatpush1.msra.mxu0 %v535
        %1029 = vmatprep.subr.mxu0 0.0
        %1030 = vmatpush1.msra.mxu0 %v536
        %1031 = vmatprep.subr.mxu0 0.0
        %1032 = vmatpush1.msra.mxu0 %v537
        %1033 = vmatprep.subr.mxu0 0.0
        %1034 = vmatpush1.msra.mxu0 %v538
        %1035 = vmatprep.subr.mxu0 0.0
        %1036 = vmatpush1.msra.mxu0 %v539
        %1037 = vmatprep.subr.mxu0 0.0
        %1038 = vmatpush1.msra.mxu0 %v540
        %1039 = vmatprep.subr.mxu0 0.0
        %1040 = vmatpush1.msra.mxu0 %v541
        %1041 = vmatprep.subr.mxu0 0.0
        %1042 = vmatpush1.msra.mxu0 %v542
        %1043 = vmatprep.subr.mxu0 0.0
        %1044 = vmatpush1.msra.mxu0 %v543
        %1045 = vmatprep.subr.mxu0 0.0
        %1046 = vmatpush1.msra.mxu0 %v544
        %1047 = vmatprep.subr.mxu0 0.0
        %1048 = vmatpush1.msra.mxu0 %v545
        %1049 = vmatprep.subr.mxu0 0.0
        %1050 = vmatpush1.msra.mxu0 0.0
        %1051 = vmatprep.subr.mxu0 0.0
        %1052 = vmatpush1.msra.mxu0 0.0
        %1053 = vmatprep.subr.mxu0 0.0
        %1054 = vmatpush1.msra.mxu0 0.0
        %1055 = vmatprep.subr.mxu0 0.0
        %1056 = vmatpush1.msra.mxu0 0.0
        %1057 = vmatprep.subr.mxu0 0.0
        %1058 = vmatpush1.msra.mxu0 0.0
        %1059 = vmatprep.subr.mxu0 0.0
        %1060 = vmatpush1.msra.mxu0 0.0
        %1061 = vmatprep.subr.mxu0 0.0
        %1062 = vmatpush1.msra.mxu0 0.0
        %1063 = vmatprep.subr.mxu0 0.0
        %1064 = vmatpush1.msra.mxu0 0.0
        %1065 = vmatprep.subr.mxu0 0.0
        %1066 = vmatpush1.msra.mxu0 0.0
        %1067 = vmatprep.subr.mxu0 0.0
        %1068 = vmatpush1.msra.mxu0 0.0
        %1069 = vmatprep.subr.mxu0 0.0
        %1070 = vmatpush1.msra.mxu0 0.0
        %1071 = vmatprep.subr.mxu0 0.0
        %1072 = vmatpush1.msra.mxu0 0.0
        %1073 = vmatprep.subr.mxu0 0.0
        %1074 = vmatpush1.msra.mxu0 0.0
        %1075 = vmatprep.subr.mxu0 0.0
        %1076 = vmatpush1.msra.mxu0 0.0
        %1077 = vmatprep.subr.mxu0 0.0
        %1078 = vmatpush1.msra.mxu0 0.0
        %1079 = vmatprep.subr.mxu0 0.0
        %1080 = vmatpush1.msra.mxu0 0.0
        %1081 = vmatprep.mubr.f32.mxu0 0.0
        %1082 = vmatmul.mubr.f32.gmra.mrb[0].mxu0 %v1016
        %v1083 = vpop.f32.mrb[0].mxu0
        %v1084 = vadd.f32 0.0, %v1083
        %v1085 = vpop.f32.mrb[0].mxu0
        %1086 = vdwg.mxu0
        %vm1087 = vcmp.lt.f32.partialorder %v1084, 0.5
        %v1088 = vsel %vm1087, 1, 0
        %v1089 = vcvt.s32.f32 %v1088
        %v1090 = vmul.f32 %v1016, %v1089
        %vm1091 = vcmp.gt.f32.partialorder %v1090, 0.0
        %v1092 = vsel %vm1091, -1e+30, %v1010
        %v1093 = vadd.f32 %v1011, %v1090
        %1094 = vmax.xlane.f32.xlu0 %v1092
        %v1095 = vpop.xlane.xlu0 %1094
        %vm1096 = vcmp.eq.f32.partialorder %v1092, %v1095
        %v1097 = vsel %vm1096, 1, 0
        %v1098 = vcvt.s32.f32 %v1097
        %1099 = vmatprep.subr.mxu0 0.0
        %1100 = vmatpush1.msra.mxu0 %v530
        %1101 = vmatprep.subr.mxu0 0.0
        %1102 = vmatpush1.msra.mxu0 %v531
        %1103 = vmatprep.subr.mxu0 0.0
        %1104 = vmatpush1.msra.mxu0 %v532
        %1105 = vmatprep.subr.mxu0 0.0
        %1106 = vmatpush1.msra.mxu0 %v533
        %1107 = vmatprep.subr.mxu0 0.0
        %1108 = vmatpush1.msra.mxu0 %v534
        %1109 = vmatprep.subr.mxu0 0.0
        %1110 = vmatpush1.msra.mxu0 %v535
        %1111 = vmatprep.subr.mxu0 0.0
        %1112 = vmatpush1.msra.mxu0 %v536
        %1113 = vmatprep.subr.mxu0 0.0
        %1114 = vmatpush1.msra.mxu0 %v537
        %1115 = vmatprep.subr.mxu0 0.0
        %1116 = vmatpush1.msra.mxu0 %v538
        %1117 = vmatprep.subr.mxu0 0.0
        %1118 = vmatpush1.msra.mxu0 %v539
        %1119 = vmatprep.subr.mxu0 0.0
        %1120 = vmatpush1.msra.mxu0 %v540
        %1121 = vmatprep.subr.mxu0 0.0
        %1122 = vmatpush1.msra.mxu0 %v541
        %1123 = vmatprep.subr.mxu0 0.0
        %1124 = vmatpush1.msra.mxu0 %v542
        %1125 = vmatprep.subr.mxu0 0.0
        %1126 = vmatpush1.msra.mxu0 %v543
        %1127 = vmatprep.subr.mxu0 0.0
        %1128 = vmatpush1.msra.mxu0 %v544
        %1129 = vmatprep.subr.mxu0 0.0
        %1130 = vmatpush1.msra.mxu0 %v545
        %1131 = vmatprep.subr.mxu0 0.0
        %1132 = vmatpush1.msra.mxu0 0.0
        %1133 = vmatprep.subr.mxu0 0.0
        %1134 = vmatpush1.msra.mxu0 0.0
        %1135 = vmatprep.subr.mxu0 0.0
        %1136 = vmatpush1.msra.mxu0 0.0
        %1137 = vmatprep.subr.mxu0 0.0
        %1138 = vmatpush1.msra.mxu0 0.0
        %1139 = vmatprep.subr.mxu0 0.0
        %1140 = vmatpush1.msra.mxu0 0.0
        %1141 = vmatprep.subr.mxu0 0.0
        %1142 = vmatpush1.msra.mxu0 0.0
        %1143 = vmatprep.subr.mxu0 0.0
        %1144 = vmatpush1.msra.mxu0 0.0
        %1145 = vmatprep.subr.mxu0 0.0
        %1146 = vmatpush1.msra.mxu0 0.0
        %1147 = vmatprep.subr.mxu0 0.0
        %1148 = vmatpush1.msra.mxu0 0.0
        %1149 = vmatprep.subr.mxu0 0.0
        %1150 = vmatpush1.msra.mxu0 0.0
        %1151 = vmatprep.subr.mxu0 0.0
        %1152 = vmatpush1.msra.mxu0 0.0
        %1153 = vmatprep.subr.mxu0 0.0
        %1154 = vmatpush1.msra.mxu0 0.0
        %1155 = vmatprep.subr.mxu0 0.0
        %1156 = vmatpush1.msra.mxu0 0.0
        %1157 = vmatprep.subr.mxu0 0.0
        %1158 = vmatpush1.msra.mxu0 0.0
        %1159 = vmatprep.subr.mxu0 0.0
        %1160 = vmatpush1.msra.mxu0 0.0
        %1161 = vmatprep.subr.mxu0 0.0
        %1162 = vmatpush1.msra.mxu0 0.0
        %1163 = vmatprep.mubr.f32.mxu0 0.0
        %1164 = vmatmul.mubr.f32.gmra.mrb[0].mxu0 %v1098
        %v1165 = vpop.f32.mrb[0].mxu0
        %v1166 = vadd.f32 0.0, %v1165
        %v1167 = vpop.f32.mrb[0].mxu0
        %1168 = vdwg.mxu0
        %vm1169 = vcmp.lt.f32.partialorder %v1166, 0.5
        %v1170 = vsel %vm1169, 1, 0
        %v1171 = vcvt.s32.f32 %v1170
        %v1172 = vmul.f32 %v1098, %v1171
        %vm1173 = vcmp.gt.f32.partialorder %v1172, 0.0
        %v1174 = vsel %vm1173, -1e+30, %v1092
        %v1175 = vadd.f32 %v1093, %v1172
        %1176 = vmax.xlane.f32.xlu0 %v1174
        %v1177 = vpop.xlane.xlu0 %1176
        %vm1178 = vcmp.eq.f32.partialorder %v1174, %v1177
        %v1179 = vsel %vm1178, 1, 0
        %v1180 = vcvt.s32.f32 %v1179
        %1181 = vmatprep.subr.mxu0 0.0
        %1182 = vmatpush1.msra.mxu0 %v530
        %1183 = vmatprep.subr.mxu0 0.0
        %1184 = vmatpush1.msra.mxu0 %v531
        %1185 = vmatprep.subr.mxu0 0.0
        %1186 = vmatpush1.msra.mxu0 %v532
        %1187 = vmatprep.subr.mxu0 0.0
        %1188 = vmatpush1.msra.mxu0 %v533
        %1189 = vmatprep.subr.mxu0 0.0
        %1190 = vmatpush1.msra.mxu0 %v534
        %1191 = vmatprep.subr.mxu0 0.0
        %1192 = vmatpush1.msra.mxu0 %v535
        %1193 = vmatprep.subr.mxu0 0.0
        %1194 = vmatpush1.msra.mxu0 %v536
        %1195 = vmatprep.subr.mxu0 0.0
        %1196 = vmatpush1.msra.mxu0 %v537
        %1197 = vmatprep.subr.mxu0 0.0
        %1198 = vmatpush1.msra.mxu0 %v538
        %1199 = vmatprep.subr.mxu0 0.0
        %1200 = vmatpush1.msra.mxu0 %v539
        %1201 = vmatprep.subr.mxu0 0.0
        %1202 = vmatpush1.msra.mxu0 %v540
        %1203 = vmatprep.subr.mxu0 0.0
        %1204 = vmatpush1.msra.mxu0 %v541
        %1205 = vmatprep.subr.mxu0 0.0
        %1206 = vmatpush1.msra.mxu0 %v542
        %1207 = vmatprep.subr.mxu0 0.0
        %1208 = vmatpush1.msra.mxu0 %v543
        %1209 = vmatprep.subr.mxu0 0.0
        %1210 = vmatpush1.msra.mxu0 %v544
        %1211 = vmatprep.subr.mxu0 0.0
        %1212 = vmatpush1.msra.mxu0 %v545
        %1213 = vmatprep.subr.mxu0 0.0
        %1214 = vmatpush1.msra.mxu0 0.0
        %1215 = vmatprep.subr.mxu0 0.0
        %1216 = vmatpush1.msra.mxu0 0.0
        %1217 = vmatprep.subr.mxu0 0.0
        %1218 = vmatpush1.msra.mxu0 0.0
        %1219 = vmatprep.subr.mxu0 0.0
        %1220 = vmatpush1.msra.mxu0 0.0
        %1221 = vmatprep.subr.mxu0 0.0
        %1222 = vmatpush1.msra.mxu0 0.0
        %1223 = vmatprep.subr.mxu0 0.0
        %1224 = vmatpush1.msra.mxu0 0.0
        %1225 = vmatprep.subr.mxu0 0.0
        %1226 = vmatpush1.msra.mxu0 0.0
        %1227 = vmatprep.subr.mxu0 0.0
        %1228 = vmatpush1.msra.mxu0 0.0
        %1229 = vmatprep.subr.mxu0 0.0
        %1230 = vmatpush1.msra.mxu0 0.0
        %1231 = vmatprep.subr.mxu0 0.0
        %1232 = vmatpush1.msra.mxu0 0.0
        %1233 = vmatprep.subr.mxu0 0.0
        %1234 = vmatpush1.msra.mxu0 0.0
        %1235 = vmatprep.subr.mxu0 0.0
        %1236 = vmatpush1.msra.mxu0 0.0
        %1237 = vmatprep.subr.mxu0 0.0
        %1238 = vmatpush1.msra.mxu0 0.0
        %1239 = vmatprep.subr.mxu0 0.0
        %1240 = vmatpush1.msra.mxu0 0.0
        %1241 = vmatprep.subr.mxu0 0.0
        %1242 = vmatpush1.msra.mxu0 0.0
        %1243 = vmatprep.subr.mxu0 0.0
        %1244 = vmatpush1.msra.mxu0 0.0
        %1245 = vmatprep.mubr.f32.mxu0 0.0
        %1246 = vmatmul.mubr.f32.gmra.mrb[0].mxu0 %v1180
        %v1247 = vpop.f32.mrb[0].mxu0
        %v1248 = vadd.f32 0.0, %v1247
        %v1249 = vpop.f32.mrb[0].mxu0
        %1250 = vdwg.mxu0
        %vm1251 = vcmp.lt.f32.partialorder %v1248, 0.5
        %v1252 = vsel %vm1251, 1, 0
        %v1253 = vcvt.s32.f32 %v1252
        %v1254 = vmul.f32 %v1180, %v1253
        %vm1255 = vcmp.gt.f32.partialorder %v1254, 0.0
        %v1256 = vsel %vm1255, -1e+30, %v1174
        %v1257 = vadd.f32 %v1175, %v1254
        %1258 = vmax.xlane.f32.xlu0 %v1256
        %v1259 = vpop.xlane.xlu0 %1258
        %vm1260 = vcmp.eq.f32.partialorder %v1256, %v1259
        %v1261 = vsel %vm1260, 1, 0
        %v1262 = vcvt.s32.f32 %v1261
        %1263 = vmatprep.subr.mxu0 0.0
        %1264 = vmatpush1.msra.mxu0 %v530
        %1265 = vmatprep.subr.mxu0 0.0
        %1266 = vmatpush1.msra.mxu0 %v531
        %1267 = vmatprep.subr.mxu0 0.0
        %1268 = vmatpush1.msra.mxu0 %v532
        %1269 = vmatprep.subr.mxu0 0.0
        %1270 = vmatpush1.msra.mxu0 %v533
        %1271 = vmatprep.subr.mxu0 0.0
        %1272 = vmatpush1.msra.mxu0 %v534
        %1273 = vmatprep.subr.mxu0 0.0
        %1274 = vmatpush1.msra.mxu0 %v535
        %1275 = vmatprep.subr.mxu0 0.0
        %1276 = vmatpush1.msra.mxu0 %v536
        %1277 = vmatprep.subr.mxu0 0.0
        %1278 = vmatpush1.msra.mxu0 %v537
        %1279 = vmatprep.subr.mxu0 0.0
        %1280 = vmatpush1.msra.mxu0 %v538
        %1281 = vmatprep.subr.mxu0 0.0
        %1282 = vmatpush1.msra.mxu0 %v539
        %1283 = vmatprep.subr.mxu0 0.0
        %1284 = vmatpush1.msra.mxu0 %v540
        %1285 = vmatprep.subr.mxu0 0.0
        %1286 = vmatpush1.msra.mxu0 %v541
        %1287 = vmatprep.subr.mxu0 0.0
        %1288 = vmatpush1.msra.mxu0 %v542
        %1289 = vmatprep.subr.mxu0 0.0
        %1290 = vmatpush1.msra.mxu0 %v543
        %1291 = vmatprep.subr.mxu0 0.0
        %1292 = vmatpush1.msra.mxu0 %v544
        %1293 = vmatprep.subr.mxu0 0.0
        %1294 = vmatpush1.msra.mxu0 %v545
        %1295 = vmatprep.subr.mxu0 0.0
        %1296 = vmatpush1.msra.mxu0 0.0
        %1297 = vmatprep.subr.mxu0 0.0
        %1298 = vmatpush1.msra.mxu0 0.0
        %1299 = vmatprep.subr.mxu0 0.0
        %1300 = vmatpush1.msra.mxu0 0.0
        %1301 = vmatprep.subr.mxu0 0.0
        %1302 = vmatpush1.msra.mxu0 0.0
        %1303 = vmatprep.subr.mxu0 0.0
        %1304 = vmatpush1.msra.mxu0 0.0
        %1305 = vmatprep.subr.mxu0 0.0
        %1306 = vmatpush1.msra.mxu0 0.0
        %1307 = vmatprep.subr.mxu0 0.0
        %1308 = vmatpush1.msra.mxu0 0.0
        %1309 = vmatprep.subr.mxu0 0.0
        %1310 = vmatpush1.msra.mxu0 0.0
        %1311 = vmatprep.subr.mxu0 0.0
        %1312 = vmatpush1.msra.mxu0 0.0
        %1313 = vmatprep.subr.mxu0 0.0
        %1314 = vmatpush1.msra.mxu0 0.0
        %1315 = vmatprep.subr.mxu0 0.0
        %1316 = vmatpush1.msra.mxu0 0.0
        %1317 = vmatprep.subr.mxu0 0.0
        %1318 = vmatpush1.msra.mxu0 0.0
        %1319 = vmatprep.subr.mxu0 0.0
        %1320 = vmatpush1.msra.mxu0 0.0
        %1321 = vmatprep.subr.mxu0 0.0
        %1322 = vmatpush1.msra.mxu0 0.0
        %1323 = vmatprep.subr.mxu0 0.0
        %1324 = vmatpush1.msra.mxu0 0.0
        %1325 = vmatprep.subr.mxu0 0.0
        %1326 = vmatpush1.msra.mxu0 0.0
        %1327 = vmatprep.mubr.f32.mxu0 0.0
        %1328 = vmatmul.mubr.f32.gmra.mrb[0].mxu0 %v1262
        %v1329 = vpop.f32.mrb[0].mxu0
        %v1330 = vadd.f32 0.0, %v1329
        %v1331 = vpop.f32.mrb[0].mxu0
        %1332 = vdwg.mxu0
        %vm1333 = vcmp.lt.f32.partialorder %v1330, 0.5
        %v1334 = vsel %vm1333, 1, 0
        %v1335 = vcvt.s32.f32 %v1334
        %v1336 = vmul.f32 %v1262, %v1335
        %vm1337 = vcmp.gt.f32.partialorder %v1336, 0.0
        %v1338 = vsel %vm1337, -1e+30, %v1256
        %v1339 = vadd.f32 %v1257, %v1336
        %1340 = vmax.xlane.f32.xlu0 %v1338
        %v1341 = vpop.xlane.xlu0 %1340
        %vm1342 = vcmp.eq.f32.partialorder %v1338, %v1341
        %v1343 = vsel %vm1342, 1, 0
        %v1344 = vcvt.s32.f32 %v1343
        %1345 = vmatprep.subr.mxu0 0.0
        %1346 = vmatpush1.msra.mxu0 %v530
        %1347 = vmatprep.subr.mxu0 0.0
        %1348 = vmatpush1.msra.mxu0 %v531
        %1349 = vmatprep.subr.mxu0 0.0
        %1350 = vmatpush1.msra.mxu0 %v532
        %1351 = vmatprep.subr.mxu0 0.0
        %1352 = vmatpush1.msra.mxu0 %v533
        %1353 = vmatprep.subr.mxu0 0.0
        %1354 = vmatpush1.msra.mxu0 %v534
        %1355 = vmatprep.subr.mxu0 0.0
        %1356 = vmatpush1.msra.mxu0 %v535
        %1357 = vmatprep.subr.mxu0 0.0
        %1358 = vmatpush1.msra.mxu0 %v536
        %1359 = vmatprep.subr.mxu0 0.0
        %1360 = vmatpush1.msra.mxu0 %v537
        %1361 = vmatprep.subr.mxu0 0.0
        %1362 = vmatpush1.msra.mxu0 %v538
        %1363 = vmatprep.subr.mxu0 0.0
        %1364 = vmatpush1.msra.mxu0 %v539
        %1365 = vmatprep.subr.mxu0 0.0
        %1366 = vmatpush1.msra.mxu0 %v540
        %1367 = vmatprep.subr.mxu0 0.0
        %1368 = vmatpush1.msra.mxu0 %v541
        %1369 = vmatprep.subr.mxu0 0.0
        %1370 = vmatpush1.msra.mxu0 %v542
        %1371 = vmatprep.subr.mxu0 0.0
        %1372 = vmatpush1.msra.mxu0 %v543
        %1373 = vmatprep.subr.mxu0 0.0
        %1374 = vmatpush1.msra.mxu0 %v544
        %1375 = vmatprep.subr.mxu0 0.0
        %1376 = vmatpush1.msra.mxu0 %v545
        %1377 = vmatprep.subr.mxu0 0.0
        %1378 = vmatpush1.msra.mxu0 0.0
        %1379 = vmatprep.subr.mxu0 0.0
        %1380 = vmatpush1.msra.mxu0 0.0
        %1381 = vmatprep.subr.mxu0 0.0
        %1382 = vmatpush1.msra.mxu0 0.0
        %1383 = vmatprep.subr.mxu0 0.0
        %1384 = vmatpush1.msra.mxu0 0.0
        %1385 = vmatprep.subr.mxu0 0.0
        %1386 = vmatpush1.msra.mxu0 0.0
        %1387 = vmatprep.subr.mxu0 0.0
        %1388 = vmatpush1.msra.mxu0 0.0
        %1389 = vmatprep.subr.mxu0 0.0
        %1390 = vmatpush1.msra.mxu0 0.0
        %1391 = vmatprep.subr.mxu0 0.0
        %1392 = vmatpush1.msra.mxu0 0.0
        %1393 = vmatprep.subr.mxu0 0.0
        %1394 = vmatpush1.msra.mxu0 0.0
        %1395 = vmatprep.subr.mxu0 0.0
        %1396 = vmatpush1.msra.mxu0 0.0
        %1397 = vmatprep.subr.mxu0 0.0
        %1398 = vmatpush1.msra.mxu0 0.0
        %1399 = vmatprep.subr.mxu0 0.0
        %1400 = vmatpush1.msra.mxu0 0.0
        %1401 = vmatprep.subr.mxu0 0.0
        %1402 = vmatpush1.msra.mxu0 0.0
        %1403 = vmatprep.subr.mxu0 0.0
        %1404 = vmatpush1.msra.mxu0 0.0
        %1405 = vmatprep.subr.mxu0 0.0
        %1406 = vmatpush1.msra.mxu0 0.0
        %1407 = vmatprep.subr.mxu0 0.0
        %1408 = vmatpush1.msra.mxu0 0.0
        %1409 = vmatprep.mubr.f32.mxu0 0.0
        %1410 = vmatmul.mubr.f32.gmra.mrb[0].mxu0 %v1344
        %v1411 = vpop.f32.mrb[0].mxu0
        %v1412 = vadd.f32 0.0, %v1411
        %v1413 = vpop.f32.mrb[0].mxu0
        %1414 = vdwg.mxu0
        %vm1415 = vcmp.lt.f32.partialorder %v1412, 0.5
        %v1416 = vsel %vm1415, 1, 0
        %v1417 = vcvt.s32.f32 %v1416
        %v1418 = vmul.f32 %v1344, %v1417
        %vm1419 = vcmp.gt.f32.partialorder %v1418, 0.0
        %v1420 = vsel %vm1419, -1e+30, %v1338
        %v1421 = vadd.f32 %v1339, %v1418
        %1422 = vmax.xlane.f32.xlu0 %v1420
        %v1423 = vpop.xlane.xlu0 %1422
        %vm1424 = vcmp.eq.f32.partialorder %v1420, %v1423
        %v1425 = vsel %vm1424, 1, 0
        %v1426 = vcvt.s32.f32 %v1425
        %1427 = vmatprep.subr.mxu0 0.0
        %1428 = vmatpush1.msra.mxu0 %v530
        %1429 = vmatprep.subr.mxu0 0.0
        %1430 = vmatpush1.msra.mxu0 %v531
        %1431 = vmatprep.subr.mxu0 0.0
        %1432 = vmatpush1.msra.mxu0 %v532
        %1433 = vmatprep.subr.mxu0 0.0
        %1434 = vmatpush1.msra.mxu0 %v533
        %1435 = vmatprep.subr.mxu0 0.0
        %1436 = vmatpush1.msra.mxu0 %v534
        %1437 = vmatprep.subr.mxu0 0.0
        %1438 = vmatpush1.msra.mxu0 %v535
        %1439 = vmatprep.subr.mxu0 0.0
        %1440 = vmatpush1.msra.mxu0 %v536
        %1441 = vmatprep.subr.mxu0 0.0
        %1442 = vmatpush1.msra.mxu0 %v537
        %1443 = vmatprep.subr.mxu0 0.0
        %1444 = vmatpush1.msra.mxu0 %v538
        %1445 = vmatprep.subr.mxu0 0.0
        %1446 = vmatpush1.msra.mxu0 %v539
        %1447 = vmatprep.subr.mxu0 0.0
        %1448 = vmatpush1.msra.mxu0 %v540
        %1449 = vmatprep.subr.mxu0 0.0
        %1450 = vmatpush1.msra.mxu0 %v541
        %1451 = vmatprep.subr.mxu0 0.0
        %1452 = vmatpush1.msra.mxu0 %v542
        %1453 = vmatprep.subr.mxu0 0.0
        %1454 = vmatpush1.msra.mxu0 %v543
        %1455 = vmatprep.subr.mxu0 0.0
        %1456 = vmatpush1.msra.mxu0 %v544
        %1457 = vmatprep.subr.mxu0 0.0
        %1458 = vmatpush1.msra.mxu0 %v545
        %1459 = vmatprep.subr.mxu0 0.0
        %1460 = vmatpush1.msra.mxu0 0.0
        %1461 = vmatprep.subr.mxu0 0.0
        %1462 = vmatpush1.msra.mxu0 0.0
        %1463 = vmatprep.subr.mxu0 0.0
        %1464 = vmatpush1.msra.mxu0 0.0
        %1465 = vmatprep.subr.mxu0 0.0
        %1466 = vmatpush1.msra.mxu0 0.0
        %1467 = vmatprep.subr.mxu0 0.0
        %1468 = vmatpush1.msra.mxu0 0.0
        %1469 = vmatprep.subr.mxu0 0.0
        %1470 = vmatpush1.msra.mxu0 0.0
        %1471 = vmatprep.subr.mxu0 0.0
        %1472 = vmatpush1.msra.mxu0 0.0
        %1473 = vmatprep.subr.mxu0 0.0
        %1474 = vmatpush1.msra.mxu0 0.0
        %1475 = vmatprep.subr.mxu0 0.0
        %1476 = vmatpush1.msra.mxu0 0.0
        %1477 = vmatprep.subr.mxu0 0.0
        %1478 = vmatpush1.msra.mxu0 0.0
        %1479 = vmatprep.subr.mxu0 0.0
        %1480 = vmatpush1.msra.mxu0 0.0
        %1481 = vmatprep.subr.mxu0 0.0
        %1482 = vmatpush1.msra.mxu0 0.0
        %1483 = vmatprep.subr.mxu0 0.0
        %1484 = vmatpush1.msra.mxu0 0.0
        %1485 = vmatprep.subr.mxu0 0.0
        %1486 = vmatpush1.msra.mxu0 0.0
        %1487 = vmatprep.subr.mxu0 0.0
        %1488 = vmatpush1.msra.mxu0 0.0
        %1489 = vmatprep.subr.mxu0 0.0
        %1490 = vmatpush1.msra.mxu0 0.0
        %1491 = vmatprep.mubr.f32.mxu0 0.0
        %1492 = vmatmul.mubr.f32.gmra.mrb[0].mxu0 %v1426
        %v1493 = vpop.f32.mrb[0].mxu0
        %v1494 = vadd.f32 0.0, %v1493
        %v1495 = vpop.f32.mrb[0].mxu0
        %1496 = vdwg.mxu0
        %vm1497 = vcmp.lt.f32.partialorder %v1494, 0.5
        %v1498 = vsel %vm1497, 1, 0
        %v1499 = vcvt.s32.f32 %v1498
        %v1500 = vmul.f32 %v1426, %v1499
        %vm1501 = vcmp.gt.f32.partialorder %v1500, 0.0
        %v1502 = vsel %vm1501, -1e+30, %v1420
        %v1503 = vadd.f32 %v1421, %v1500
        %1504 = vmax.xlane.f32.xlu0 %v1502
        %v1505 = vpop.xlane.xlu0 %1504
        %vm1506 = vcmp.eq.f32.partialorder %v1502, %v1505
        %v1507 = vsel %vm1506, 1, 0
        %v1508 = vcvt.s32.f32 %v1507
        %1509 = vmatprep.subr.mxu0 0.0
        %1510 = vmatpush1.msra.mxu0 %v530
        %1511 = vmatprep.subr.mxu0 0.0
        %1512 = vmatpush1.msra.mxu0 %v531
        %1513 = vmatprep.subr.mxu0 0.0
        %1514 = vmatpush1.msra.mxu0 %v532
        %1515 = vmatprep.subr.mxu0 0.0
        %1516 = vmatpush1.msra.mxu0 %v533
        %1517 = vmatprep.subr.mxu0 0.0
        %1518 = vmatpush1.msra.mxu0 %v534
        %1519 = vmatprep.subr.mxu0 0.0
        %1520 = vmatpush1.msra.mxu0 %v535
        %1521 = vmatprep.subr.mxu0 0.0
        %1522 = vmatpush1.msra.mxu0 %v536
        %1523 = vmatprep.subr.mxu0 0.0
        %1524 = vmatpush1.msra.mxu0 %v537
        %1525 = vmatprep.subr.mxu0 0.0
        %1526 = vmatpush1.msra.mxu0 %v538
        %1527 = vmatprep.subr.mxu0 0.0
        %1528 = vmatpush1.msra.mxu0 %v539
        %1529 = vmatprep.subr.mxu0 0.0
        %1530 = vmatpush1.msra.mxu0 %v540
        %1531 = vmatprep.subr.mxu0 0.0
        %1532 = vmatpush1.msra.mxu0 %v541
        %1533 = vmatprep.subr.mxu0 0.0
        %1534 = vmatpush1.msra.mxu0 %v542
        %1535 = vmatprep.subr.mxu0 0.0
        %1536 = vmatpush1.msra.mxu0 %v543
        %1537 = vmatprep.subr.mxu0 0.0
        %1538 = vmatpush1.msra.mxu0 %v544
        %1539 = vmatprep.subr.mxu0 0.0
        %1540 = vmatpush1.msra.mxu0 %v545
        %1541 = vmatprep.subr.mxu0 0.0
        %1542 = vmatpush1.msra.mxu0 0.0
        %1543 = vmatprep.subr.mxu0 0.0
        %1544 = vmatpush1.msra.mxu0 0.0
        %1545 = vmatprep.subr.mxu0 0.0
        %1546 = vmatpush1.msra.mxu0 0.0
        %1547 = vmatprep.subr.mxu0 0.0
        %1548 = vmatpush1.msra.mxu0 0.0
        %1549 = vmatprep.subr.mxu0 0.0
        %1550 = vmatpush1.msra.mxu0 0.0
        %1551 = vmatprep.subr.mxu0 0.0
        %1552 = vmatpush1.msra.mxu0 0.0
        %1553 = vmatprep.subr.mxu0 0.0
        %1554 = vmatpush1.msra.mxu0 0.0
        %1555 = vmatprep.subr.mxu0 0.0
        %1556 = vmatpush1.msra.mxu0 0.0
        %1557 = vmatprep.subr.mxu0 0.0
        %1558 = vmatpush1.msra.mxu0 0.0
        %1559 = vmatprep.subr.mxu0 0.0
        %1560 = vmatpush1.msra.mxu0 0.0
        %1561 = vmatprep.subr.mxu0 0.0
        %1562 = vmatpush1.msra.mxu0 0.0
        %1563 = vmatprep.subr.mxu0 0.0
        %1564 = vmatpush1.msra.mxu0 0.0
        %1565 = vmatprep.subr.mxu0 0.0
        %1566 = vmatpush1.msra.mxu0 0.0
        %1567 = vmatprep.subr.mxu0 0.0
        %1568 = vmatpush1.msra.mxu0 0.0
        %1569 = vmatprep.subr.mxu0 0.0
        %1570 = vmatpush1.msra.mxu0 0.0
        %1571 = vmatprep.subr.mxu0 0.0
        %1572 = vmatpush1.msra.mxu0 0.0
        %1573 = vmatprep.mubr.f32.mxu0 0.0
        %1574 = vmatmul.mubr.f32.gmra.mrb[0].mxu0 %v1508
        %v1575 = vpop.f32.mrb[0].mxu0
        %v1576 = vadd.f32 0.0, %v1575
        %v1577 = vpop.f32.mrb[0].mxu0
        %1578 = vdwg.mxu0
        %vm1579 = vcmp.lt.f32.partialorder %v1576, 0.5
        %v1580 = vsel %vm1579, 1, 0
        %v1581 = vcvt.s32.f32 %v1580
        %v1582 = vmul.f32 %v1508, %v1581
        %vm1583 = vcmp.gt.f32.partialorder %v1582, 0.0
        %v1584 = vsel %vm1583, -1e+30, %v1502
        %v1585 = vadd.f32 %v1503, %v1582
        %1586 = vmax.xlane.f32.xlu0 %v1584
        %v1587 = vpop.xlane.xlu0 %1586
        %vm1588 = vcmp.eq.f32.partialorder %v1584, %v1587
        %v1589 = vsel %vm1588, 1, 0
        %v1590 = vcvt.s32.f32 %v1589
        %1591 = vmatprep.subr.mxu0 0.0
        %1592 = vmatpush1.msra.mxu0 %v530
        %1593 = vmatprep.subr.mxu0 0.0
        %1594 = vmatpush1.msra.mxu0 %v531
        %1595 = vmatprep.subr.mxu0 0.0
        %1596 = vmatpush1.msra.mxu0 %v532
        %1597 = vmatprep.subr.mxu0 0.0
        %1598 = vmatpush1.msra.mxu0 %v533
        %1599 = vmatprep.subr.mxu0 0.0
        %1600 = vmatpush1.msra.mxu0 %v534
        %1601 = vmatprep.subr.mxu0 0.0
        %1602 = vmatpush1.msra.mxu0 %v535
        %1603 = vmatprep.subr.mxu0 0.0
        %1604 = vmatpush1.msra.mxu0 %v536
        %1605 = vmatprep.subr.mxu0 0.0
        %1606 = vmatpush1.msra.mxu0 %v537
        %1607 = vmatprep.subr.mxu0 0.0
        %1608 = vmatpush1.msra.mxu0 %v538
        %1609 = vmatprep.subr.mxu0 0.0
        %1610 = vmatpush1.msra.mxu0 %v539
        %1611 = vmatprep.subr.mxu0 0.0
        %1612 = vmatpush1.msra.mxu0 %v540
        %1613 = vmatprep.subr.mxu0 0.0
        %1614 = vmatpush1.msra.mxu0 %v541
        %1615 = vmatprep.subr.mxu0 0.0
        %1616 = vmatpush1.msra.mxu0 %v542
        %1617 = vmatprep.subr.mxu0 0.0
        %1618 = vmatpush1.msra.mxu0 %v543
        %1619 = vmatprep.subr.mxu0 0.0
        %1620 = vmatpush1.msra.mxu0 %v544
        %1621 = vmatprep.subr.mxu0 0.0
        %1622 = vmatpush1.msra.mxu0 %v545
        %1623 = vmatprep.subr.mxu0 0.0
        %1624 = vmatpush1.msra.mxu0 0.0
        %1625 = vmatprep.subr.mxu0 0.0
        %1626 = vmatpush1.msra.mxu0 0.0
        %1627 = vmatprep.subr.mxu0 0.0
        %1628 = vmatpush1.msra.mxu0 0.0
        %1629 = vmatprep.subr.mxu0 0.0
        %1630 = vmatpush1.msra.mxu0 0.0
        %1631 = vmatprep.subr.mxu0 0.0
        %1632 = vmatpush1.msra.mxu0 0.0
        %1633 = vmatprep.subr.mxu0 0.0
        %1634 = vmatpush1.msra.mxu0 0.0
        %1635 = vmatprep.subr.mxu0 0.0
        %1636 = vmatpush1.msra.mxu0 0.0
        %1637 = vmatprep.subr.mxu0 0.0
        %1638 = vmatpush1.msra.mxu0 0.0
        %1639 = vmatprep.subr.mxu0 0.0
        %1640 = vmatpush1.msra.mxu0 0.0
        %1641 = vmatprep.subr.mxu0 0.0
        %1642 = vmatpush1.msra.mxu0 0.0
        %1643 = vmatprep.subr.mxu0 0.0
        %1644 = vmatpush1.msra.mxu0 0.0
        %1645 = vmatprep.subr.mxu0 0.0
        %1646 = vmatpush1.msra.mxu0 0.0
        %1647 = vmatprep.subr.mxu0 0.0
        %1648 = vmatpush1.msra.mxu0 0.0
        %1649 = vmatprep.subr.mxu0 0.0
        %1650 = vmatpush1.msra.mxu0 0.0
        %1651 = vmatprep.subr.mxu0 0.0
        %1652 = vmatpush1.msra.mxu0 0.0
        %1653 = vmatprep.subr.mxu0 0.0
        %1654 = vmatpush1.msra.mxu0 0.0
        %1655 = vmatprep.mubr.f32.mxu0 0.0
        %1656 = vmatmul.mubr.f32.gmra.mrb[0].mxu0 %v1590
        %v1657 = vpop.f32.mrb[0].mxu0
        %v1658 = vadd.f32 0.0, %v1657
        %v1659 = vpop.f32.mrb[0].mxu0
        %1660 = vdwg.mxu0
        %vm1661 = vcmp.lt.f32.partialorder %v1658, 0.5
        %v1662 = vsel %vm1661, 1, 0
        %v1663 = vcvt.s32.f32 %v1662
        %v1664 = vmul.f32 %v1590, %v1663
        %vm1665 = vcmp.gt.f32.partialorder %v1664, 0.0
        %v1666 = vsel %vm1665, -1e+30, %v1584
        %v1667 = vadd.f32 %v1585, %v1664
        %1668 = vmax.xlane.f32.xlu0 %v1666
        %v1669 = vpop.xlane.xlu0 %1668
        %vm1670 = vcmp.eq.f32.partialorder %v1666, %v1669
        %v1671 = vsel %vm1670, 1, 0
        %v1672 = vcvt.s32.f32 %v1671
        %1673 = vmatprep.subr.mxu0 0.0
        %1674 = vmatpush1.msra.mxu0 %v530
        %1675 = vmatprep.subr.mxu0 0.0
        %1676 = vmatpush1.msra.mxu0 %v531
        %1677 = vmatprep.subr.mxu0 0.0
        %1678 = vmatpush1.msra.mxu0 %v532
        %1679 = vmatprep.subr.mxu0 0.0
        %1680 = vmatpush1.msra.mxu0 %v533
        %1681 = vmatprep.subr.mxu0 0.0
        %1682 = vmatpush1.msra.mxu0 %v534
        %1683 = vmatprep.subr.mxu0 0.0
        %1684 = vmatpush1.msra.mxu0 %v535
        %1685 = vmatprep.subr.mxu0 0.0
        %1686 = vmatpush1.msra.mxu0 %v536
        %1687 = vmatprep.subr.mxu0 0.0
        %1688 = vmatpush1.msra.mxu0 %v537
        %1689 = vmatprep.subr.mxu0 0.0
        %1690 = vmatpush1.msra.mxu0 %v538
        %1691 = vmatprep.subr.mxu0 0.0
        %1692 = vmatpush1.msra.mxu0 %v539
        %1693 = vmatprep.subr.mxu0 0.0
        %1694 = vmatpush1.msra.mxu0 %v540
        %1695 = vmatprep.subr.mxu0 0.0
        %1696 = vmatpush1.msra.mxu0 %v541
        %1697 = vmatprep.subr.mxu0 0.0
        %1698 = vmatpush1.msra.mxu0 %v542
        %1699 = vmatprep.subr.mxu0 0.0
        %1700 = vmatpush1.msra.mxu0 %v543
        %1701 = vmatprep.subr.mxu0 0.0
        %1702 = vmatpush1.msra.mxu0 %v544
        %1703 = vmatprep.subr.mxu0 0.0
        %1704 = vmatpush1.msra.mxu0 %v545
        %1705 = vmatprep.subr.mxu0 0.0
        %1706 = vmatpush1.msra.mxu0 0.0
        %1707 = vmatprep.subr.mxu0 0.0
        %1708 = vmatpush1.msra.mxu0 0.0
        %1709 = vmatprep.subr.mxu0 0.0
        %1710 = vmatpush1.msra.mxu0 0.0
        %1711 = vmatprep.subr.mxu0 0.0
        %1712 = vmatpush1.msra.mxu0 0.0
        %1713 = vmatprep.subr.mxu0 0.0
        %1714 = vmatpush1.msra.mxu0 0.0
        %1715 = vmatprep.subr.mxu0 0.0
        %1716 = vmatpush1.msra.mxu0 0.0
        %1717 = vmatprep.subr.mxu0 0.0
        %1718 = vmatpush1.msra.mxu0 0.0
        %1719 = vmatprep.subr.mxu0 0.0
        %1720 = vmatpush1.msra.mxu0 0.0
        %1721 = vmatprep.subr.mxu0 0.0
        %1722 = vmatpush1.msra.mxu0 0.0
        %1723 = vmatprep.subr.mxu0 0.0
        %1724 = vmatpush1.msra.mxu0 0.0
        %1725 = vmatprep.subr.mxu0 0.0
        %1726 = vmatpush1.msra.mxu0 0.0
        %1727 = vmatprep.subr.mxu0 0.0
        %1728 = vmatpush1.msra.mxu0 0.0
        %1729 = vmatprep.subr.mxu0 0.0
        %1730 = vmatpush1.msra.mxu0 0.0
        %1731 = vmatprep.subr.mxu0 0.0
        %1732 = vmatpush1.msra.mxu0 0.0
        %1733 = vmatprep.subr.mxu0 0.0
        %1734 = vmatpush1.msra.mxu0 0.0
        %1735 = vmatprep.subr.mxu0 0.0
        %1736 = vmatpush1.msra.mxu0 0.0
        %1737 = vmatprep.mubr.f32.mxu0 0.0
        %1738 = vmatmul.mubr.f32.gmra.mrb[0].mxu0 %v1672
        %v1739 = vpop.f32.mrb[0].mxu0
        %v1740 = vadd.f32 0.0, %v1739
        %v1741 = vpop.f32.mrb[0].mxu0
        %1742 = vdwg.mxu0
        %vm1743 = vcmp.lt.f32.partialorder %v1740, 0.5
        %v1744 = vsel %vm1743, 1, 0
        %v1745 = vcvt.s32.f32 %v1744
        %v1746 = vmul.f32 %v1672, %v1745
        %vm1747 = vcmp.gt.f32.partialorder %v1746, 0.0
        %v1748 = vsel %vm1747, -1e+30, %v1666
        %v1749 = vadd.f32 %v1667, %v1746
        %1750 = vmax.xlane.f32.xlu0 %v1748
        %v1751 = vpop.xlane.xlu0 %1750
        %vm1752 = vcmp.eq.f32.partialorder %v1748, %v1751
        %v1753 = vsel %vm1752, 1, 0
        %v1754 = vcvt.s32.f32 %v1753
        %1755 = vmatprep.subr.mxu0 0.0
        %1756 = vmatpush1.msra.mxu0 %v530
        %1757 = vmatprep.subr.mxu0 0.0
        %1758 = vmatpush1.msra.mxu0 %v531
        %1759 = vmatprep.subr.mxu0 0.0
        %1760 = vmatpush1.msra.mxu0 %v532
        %1761 = vmatprep.subr.mxu0 0.0
        %1762 = vmatpush1.msra.mxu0 %v533
        %1763 = vmatprep.subr.mxu0 0.0
        %1764 = vmatpush1.msra.mxu0 %v534
        %1765 = vmatprep.subr.mxu0 0.0
        %1766 = vmatpush1.msra.mxu0 %v535
        %1767 = vmatprep.subr.mxu0 0.0
        %1768 = vmatpush1.msra.mxu0 %v536
        %1769 = vmatprep.subr.mxu0 0.0
        %1770 = vmatpush1.msra.mxu0 %v537
        %1771 = vmatprep.subr.mxu0 0.0
        %1772 = vmatpush1.msra.mxu0 %v538
        %1773 = vmatprep.subr.mxu0 0.0
        %1774 = vmatpush1.msra.mxu0 %v539
        %1775 = vmatprep.subr.mxu0 0.0
        %1776 = vmatpush1.msra.mxu0 %v540
        %1777 = vmatprep.subr.mxu0 0.0
        %1778 = vmatpush1.msra.mxu0 %v541
        %1779 = vmatprep.subr.mxu0 0.0
        %1780 = vmatpush1.msra.mxu0 %v542
        %1781 = vmatprep.subr.mxu0 0.0
        %1782 = vmatpush1.msra.mxu0 %v543
        %1783 = vmatprep.subr.mxu0 0.0
        %1784 = vmatpush1.msra.mxu0 %v544
        %1785 = vmatprep.subr.mxu0 0.0
        %1786 = vmatpush1.msra.mxu0 %v545
        %1787 = vmatprep.subr.mxu0 0.0
        %1788 = vmatpush1.msra.mxu0 0.0
        %1789 = vmatprep.subr.mxu0 0.0
        %1790 = vmatpush1.msra.mxu0 0.0
        %1791 = vmatprep.subr.mxu0 0.0
        %1792 = vmatpush1.msra.mxu0 0.0
        %1793 = vmatprep.subr.mxu0 0.0
        %1794 = vmatpush1.msra.mxu0 0.0
        %1795 = vmatprep.subr.mxu0 0.0
        %1796 = vmatpush1.msra.mxu0 0.0
        %1797 = vmatprep.subr.mxu0 0.0
        %1798 = vmatpush1.msra.mxu0 0.0
        %1799 = vmatprep.subr.mxu0 0.0
        %1800 = vmatpush1.msra.mxu0 0.0
        %1801 = vmatprep.subr.mxu0 0.0
        %1802 = vmatpush1.msra.mxu0 0.0
        %1803 = vmatprep.subr.mxu0 0.0
        %1804 = vmatpush1.msra.mxu0 0.0
        %1805 = vmatprep.subr.mxu0 0.0
        %1806 = vmatpush1.msra.mxu0 0.0
        %1807 = vmatprep.subr.mxu0 0.0
        %1808 = vmatpush1.msra.mxu0 0.0
        %1809 = vmatprep.subr.mxu0 0.0
        %1810 = vmatpush1.msra.mxu0 0.0
        %1811 = vmatprep.subr.mxu0 0.0
        %1812 = vmatpush1.msra.mxu0 0.0
        %1813 = vmatprep.subr.mxu0 0.0
        %1814 = vmatpush1.msra.mxu0 0.0
        %1815 = vmatprep.subr.mxu0 0.0
        %1816 = vmatpush1.msra.mxu0 0.0
        %1817 = vmatprep.subr.mxu0 0.0
        %1818 = vmatpush1.msra.mxu0 0.0
        %1819 = vmatprep.mubr.f32.mxu0 0.0
        %1820 = vmatmul.mubr.f32.gmra.mrb[0].mxu0 %v1754
        %v1821 = vpop.f32.mrb[0].mxu0
        %v1822 = vadd.f32 0.0, %v1821
        %v1823 = vpop.f32.mrb[0].mxu0
        %1824 = vdwg.mxu0
        %vm1825 = vcmp.lt.f32.partialorder %v1822, 0.5
        %v1826 = vsel %vm1825, 1, 0
        %v1827 = vcvt.s32.f32 %v1826
        %v1828 = vmul.f32 %v1754, %v1827
        %vm1829 = vcmp.gt.f32.partialorder %v1828, 0.0
        %v1830 = vsel %vm1829, -1e+30, %v1748
        %v1831 = vadd.f32 %v1749, %v1828
        %1832 = vmax.xlane.f32.xlu0 %v1830
        %v1833 = vpop.xlane.xlu0 %1832
        %vm1834 = vcmp.eq.f32.partialorder %v1830, %v1833
        %v1835 = vsel %vm1834, 1, 0
        %v1836 = vcvt.s32.f32 %v1835
        %1837 = vmatprep.subr.mxu0 0.0
        %1838 = vmatpush1.msra.mxu0 %v530
        %1839 = vmatprep.subr.mxu0 0.0
        %1840 = vmatpush1.msra.mxu0 %v531
        %1841 = vmatprep.subr.mxu0 0.0
        %1842 = vmatpush1.msra.mxu0 %v532
        %1843 = vmatprep.subr.mxu0 0.0
        %1844 = vmatpush1.msra.mxu0 %v533
        %1845 = vmatprep.subr.mxu0 0.0
        %1846 = vmatpush1.msra.mxu0 %v534
        %1847 = vmatprep.subr.mxu0 0.0
        %1848 = vmatpush1.msra.mxu0 %v535
        %1849 = vmatprep.subr.mxu0 0.0
        %1850 = vmatpush1.msra.mxu0 %v536
        %1851 = vmatprep.subr.mxu0 0.0
        %1852 = vmatpush1.msra.mxu0 %v537
        %1853 = vmatprep.subr.mxu0 0.0
        %1854 = vmatpush1.msra.mxu0 %v538
        %1855 = vmatprep.subr.mxu0 0.0
        %1856 = vmatpush1.msra.mxu0 %v539
        %1857 = vmatprep.subr.mxu0 0.0
        %1858 = vmatpush1.msra.mxu0 %v540
        %1859 = vmatprep.subr.mxu0 0.0
        %1860 = vmatpush1.msra.mxu0 %v541
        %1861 = vmatprep.subr.mxu0 0.0
        %1862 = vmatpush1.msra.mxu0 %v542
        %1863 = vmatprep.subr.mxu0 0.0
        %1864 = vmatpush1.msra.mxu0 %v543
        %1865 = vmatprep.subr.mxu0 0.0
        %1866 = vmatpush1.msra.mxu0 %v544
        %1867 = vmatprep.subr.mxu0 0.0
        %1868 = vmatpush1.msra.mxu0 %v545
        %1869 = vmatprep.subr.mxu0 0.0
        %1870 = vmatpush1.msra.mxu0 0.0
        %1871 = vmatprep.subr.mxu0 0.0
        %1872 = vmatpush1.msra.mxu0 0.0
        %1873 = vmatprep.subr.mxu0 0.0
        %1874 = vmatpush1.msra.mxu0 0.0
        %1875 = vmatprep.subr.mxu0 0.0
        %1876 = vmatpush1.msra.mxu0 0.0
        %1877 = vmatprep.subr.mxu0 0.0
        %1878 = vmatpush1.msra.mxu0 0.0
        %1879 = vmatprep.subr.mxu0 0.0
        %1880 = vmatpush1.msra.mxu0 0.0
        %1881 = vmatprep.subr.mxu0 0.0
        %1882 = vmatpush1.msra.mxu0 0.0
        %1883 = vmatprep.subr.mxu0 0.0
        %1884 = vmatpush1.msra.mxu0 0.0
        %1885 = vmatprep.subr.mxu0 0.0
        %1886 = vmatpush1.msra.mxu0 0.0
        %1887 = vmatprep.subr.mxu0 0.0
        %1888 = vmatpush1.msra.mxu0 0.0
        %1889 = vmatprep.subr.mxu0 0.0
        %1890 = vmatpush1.msra.mxu0 0.0
        %1891 = vmatprep.subr.mxu0 0.0
        %1892 = vmatpush1.msra.mxu0 0.0
        %1893 = vmatprep.subr.mxu0 0.0
        %1894 = vmatpush1.msra.mxu0 0.0
        %1895 = vmatprep.subr.mxu0 0.0
        %1896 = vmatpush1.msra.mxu0 0.0
        %1897 = vmatprep.subr.mxu0 0.0
        %1898 = vmatpush1.msra.mxu0 0.0
        %1899 = vmatprep.subr.mxu0 0.0
        %1900 = vmatpush1.msra.mxu0 0.0
        %1901 = vmatprep.mubr.f32.mxu0 0.0
        %1902 = vmatmul.mubr.f32.gmra.mrb[0].mxu0 %v1836
        %v1903 = vpop.f32.mrb[0].mxu0
        %v1904 = vadd.f32 0.0, %v1903
        %v1905 = vpop.f32.mrb[0].mxu0
        %1906 = vdwg.mxu0
        %vm1907 = vcmp.lt.f32.partialorder %v1904, 0.5
        %v1908 = vsel %vm1907, 1, 0
        %v1909 = vcvt.s32.f32 %v1908
        %v1910 = vmul.f32 %v1836, %v1909
        %v1911 = vadd.f32 %v1831, %v1910
        %vm1912 = vcmp.ne.f32.partialorder %v565, 0.0
        %v1913 = vsel %vm1912, 1, 0
        %v1914 = vcvt.s32.f32 %v1913
        %1916 = vset.pattern.permute.xlu0 0
        %1917 = vperm.xlu0 %1916, %v1914
        %v1918 = vpop.permute.xlu0 %1917
        %v1920 = vmul.f32 %v1911, %v1918
        %v1921 = vmul.f32 %v1920, %v846
        %1923 = vset.pattern.permute.xlu0 0
        %1924 = vperm.xlu0 %1923, %v565
        %v1925 = vpop.permute.xlu0 %1924
        %v1927 = vmul.f32 %v1921, %v1925
        %v1928 = vrot.slane %v1927, 4
        %v1929 = vadd.f32 %v1927, %v1928
        %v1930 = vrot.slane %v1929, 2
        %v1931 = vadd.f32 %v1929, %v1930
        %v1932 = vrot.slane %v1931, 1
        %v1933 = vadd.f32 %v1931, %v1932
        %v1934 = vrot.slane %v824, 4
        %v1935 = vmax.f32 %v824, %v1934
        %v1936 = vrot.slane %v1935, 2
        %v1937 = vmax.f32 %v1935, %v1936
        %v1938 = vrot.slane %v1937, 1
        %v1939 = vmax.f32 %v1937, %v1938
        %vm1940 = vcmp.eq.f32.partialorder %v824, %v1939
        %v1941 = vsel %vm1940, %v480, 8
        %v1942 = vrot.slane %v1941, 4
        %vm1943 = vcmp.lt.s32.totalorder %v1941, %v1942
        %v1944 = vsel %vm1943, %v1941, %v1942
        %v1945 = vrot.slane %v1944, 2
        %vm1946 = vcmp.lt.s32.totalorder %v1944, %v1945
        %v1947 = vsel %vm1946, %v1944, %v1945
        %v1948 = vrot.slane %v1947, 1
        %vm1949 = vcmp.lt.s32.totalorder %v1947, %v1948
        %v1950 = vsel %vm1949, %v1947, %v1948
        %vm1951 = vcmp.eq.s32.totalorder %v480, %v1950
        %v1952 = vsel %vm1951, 1, 0
        %v1953 = vcvt.s32.f32 %v1952
        %vm1954 = vcmp.gt.f32.partialorder %v1933, 1.0
        %v1955 = vsel %vm1954, 1, 0
        %vm1956 = vcmp.eq.s32.totalorder %v1955, 1
        %v1957 = vsel %vm1956, %v1953, %v1927
        %v1958 = vrot.slane %v1957, 4
        %v1959 = vadd.f32 %v1957, %v1958
        %v1960 = vrot.slane %v1959, 2
        %v1961 = vadd.f32 %v1959, %v1960
        %v1962 = vrot.slane %v1961, 1
        %v1963 = vadd.f32 %v1961, %v1962
        %v1964 = vrot.slane %v1957, 4
        %v1965 = vmax.f32 %v1957, %v1964
        %v1966 = vrot.slane %v1965, 2
        %v1967 = vmax.f32 %v1965, %v1966
        %v1968 = vrot.slane %v1967, 1
        %v1969 = vmax.f32 %v1967, %v1968
        %vm1970 = vcmp.eq.f32.partialorder %v1957, %v1969
        %v1971 = vsel %vm1970, %v480, 8
        %v1972 = vrot.slane %v1971, 4
        %vm1973 = vcmp.lt.s32.totalorder %v1971, %v1972
        %v1974 = vsel %vm1973, %v1971, %v1972
        %v1975 = vrot.slane %v1974, 2
        %vm1976 = vcmp.lt.s32.totalorder %v1974, %v1975
        %v1977 = vsel %vm1976, %v1974, %v1975
        %v1978 = vrot.slane %v1977, 1
        %vm1979 = vcmp.lt.s32.totalorder %v1977, %v1978
        %v1980 = vsel %vm1979, %v1977, %v1978
        %vm1981 = vcmp.eq.s32.totalorder %v480, %v1980
        %v1982 = vsel %vm1981, 1, 0
        %v1983 = vcvt.s32.f32 %v1982
        %v1984 = vcvt.s32.f32 %v563
        %1986 = vset.pattern.permute.xlu0 0
        %1987 = vperm.xlu0 %1986, %v1984
        %v1988 = vpop.permute.xlu0 %1987
        %v1990 = vmul.f32 %v1983, %v1988
        %v1991 = vrot.slane %v1990, 4
        %v1992 = vadd.f32 %v1990, %v1991
        %v1993 = vrot.slane %v1992, 2
        %v1994 = vadd.f32 %v1992, %v1993
        %v1995 = vrot.slane %v1994, 1
        %v1996 = vadd.f32 %v1994, %v1995
        %1997 = vxpose.xlu0.b32.start [1/16] %v564, 128
        %1998 = vxpose.xlu0.b32.cont [2/16] 0.0, 128
        %1999 = vxpose.xlu0.b32.cont [3/16] 0.0, 128
        %2000 = vxpose.xlu0.b32.cont [4/16] 0.0, 128
        %2001 = vxpose.xlu0.b32.cont [5/16] 0.0, 128
        %2002 = vxpose.xlu0.b32.cont [6/16] 0.0, 128
        %2003 = vxpose.xlu0.b32.cont [7/16] 0.0, 128
        %2004 = vxpose.xlu0.b32.cont [8/16] 0.0, 128
        %2005 = vxpose.xlu0.b32.cont [9/16] 0.0, 128
        %2006 = vxpose.xlu0.b32.cont [10/16] 0.0, 128
        %2007 = vxpose.xlu0.b32.cont [11/16] 0.0, 128
        %2008 = vxpose.xlu0.b32.cont [12/16] 0.0, 128
        %2009 = vxpose.xlu0.b32.cont [13/16] 0.0, 128
        %2010 = vxpose.xlu0.b32.cont [14/16] 0.0, 128
        %2011 = vxpose.xlu0.b32.cont [15/16] 0.0, 128
        %2012 = vxpose.xlu0.b32.end [16/16] 0.0, 128
        %v2013 = vpop.trf.xlu0
        %v2014 = vpop.trf.xlu0
        %v2015 = vpop.trf.xlu0
        %v2016 = vpop.trf.xlu0
        %v2017 = vpop.trf.xlu0
        %v2018 = vpop.trf.xlu0
        %v2019 = vpop.trf.xlu0
        %v2020 = vpop.trf.xlu0
        %v2021 = vpop.trf.xlu0
        %v2022 = vpop.trf.xlu0
        %v2023 = vpop.trf.xlu0
        %v2024 = vpop.trf.xlu0
        %v2025 = vpop.trf.xlu0
        %v2026 = vpop.trf.xlu0
        %v2027 = vpop.trf.xlu0
        %v2028 = vpop.trf.xlu0
        %vm2029 = vcmask 64512
        %v2031 = vsel %vm2029, %v2013, 0
        %2033 = vmatprep.subr.mxu0 0.0
        %2034 = vmatpush1.msra.mxu0 %v1983
        %2035 = vmatprep.subr.mxu0 0.0
        %2036 = vmatpush1.msra.mxu0 0.0
        %2037 = vmatprep.subr.mxu0 0.0
        %2038 = vmatpush1.msra.mxu0 0.0
        %2039 = vmatprep.subr.mxu0 0.0
        %2040 = vmatpush1.msra.mxu0 0.0
        %2041 = vmatprep.subr.mxu0 0.0
        %2042 = vmatpush1.msra.mxu0 0.0
        %2043 = vmatprep.subr.mxu0 0.0
        %2044 = vmatpush1.msra.mxu0 0.0
        %2045 = vmatprep.subr.mxu0 0.0
        %2046 = vmatpush1.msra.mxu0 0.0
        %2047 = vmatprep.subr.mxu0 0.0
        %2048 = vmatpush1.msra.mxu0 0.0
        %2049 = vmatprep.subr.mxu0 0.0
        %2050 = vmatpush1.msra.mxu0 0.0
        %2051 = vmatprep.subr.mxu0 0.0
        %2052 = vmatpush1.msra.mxu0 0.0
        %2053 = vmatprep.subr.mxu0 0.0
        %2054 = vmatpush1.msra.mxu0 0.0
        %2055 = vmatprep.subr.mxu0 0.0
        %2056 = vmatpush1.msra.mxu0 0.0
        %2057 = vmatprep.subr.mxu0 0.0
        %2058 = vmatpush1.msra.mxu0 0.0
        %2059 = vmatprep.subr.mxu0 0.0
        %2060 = vmatpush1.msra.mxu0 0.0
        %2061 = vmatprep.subr.mxu0 0.0
        %2062 = vmatpush1.msra.mxu0 0.0
        %2063 = vmatprep.subr.mxu0 0.0
        %2064 = vmatpush1.msra.mxu0 0.0
        %2065 = vmatprep.subr.mxu0 0.0
        %2066 = vmatpush1.msra.mxu0 0.0
        %2067 = vmatprep.subr.mxu0 0.0
        %2068 = vmatpush1.msra.mxu0 0.0
        %2069 = vmatprep.subr.mxu0 0.0
        %2070 = vmatpush1.msra.mxu0 0.0
        %2071 = vmatprep.subr.mxu0 0.0
        %2072 = vmatpush1.msra.mxu0 0.0
        %2073 = vmatprep.subr.mxu0 0.0
        %2074 = vmatpush1.msra.mxu0 0.0
        %2075 = vmatprep.subr.mxu0 0.0
        %2076 = vmatpush1.msra.mxu0 0.0
        %2077 = vmatprep.subr.mxu0 0.0
        %2078 = vmatpush1.msra.mxu0 0.0
        %2079 = vmatprep.subr.mxu0 0.0
        %2080 = vmatpush1.msra.mxu0 0.0
        %2081 = vmatprep.subr.mxu0 0.0
        %2082 = vmatpush1.msra.mxu0 0.0
        %2083 = vmatprep.subr.mxu0 0.0
        %2084 = vmatpush1.msra.mxu0 0.0
        %2085 = vmatprep.subr.mxu0 0.0
        %2086 = vmatpush1.msra.mxu0 0.0
        %2087 = vmatprep.subr.mxu0 0.0
        %2088 = vmatpush1.msra.mxu0 0.0
        %2089 = vmatprep.subr.mxu0 0.0
        %2090 = vmatpush1.msra.mxu0 0.0
        %2091 = vmatprep.subr.mxu0 0.0
        %2092 = vmatpush1.msra.mxu0 0.0
        %2093 = vmatprep.subr.mxu0 0.0
        %2094 = vmatpush1.msra.mxu0 0.0
        %2095 = vmatprep.subr.mxu0 0.0
        %2096 = vmatpush1.msra.mxu0 0.0
        %2097 = vmatprep.mubr.f32.mxu0 0.0
        %2098 = vmatmul.mubr.f32.gmra.mrb[0].mxu0 %v2031
        %v2099 = vpop.f32.mrb[0].mxu0
        %v2100 = vadd.f32 0.0, %v2099
        %v2101 = vpop.f32.mrb[0].mxu0
        %2102 = vdwg.mxu0
        %2103 = vst [vmem:[%s432] sm:$0xf] %v2100
        %v2104 = vmul.f32 %v828, %v1957
        %2105 = vmax.xlane.f32.xlu0 %v2104
        %v2106 = vpop.xlane.xlu0 %2105
        %v2107 = vmul.f32 %v824, %v1957
        %2108 = vmax.xlane.f32.xlu0 %v2107
        %v2109 = vpop.xlane.xlu0 %2108
        %v2110 = vmul.f32 %v2104, %v2109
        %v2111 = vadd.f32 %v2106, 1e-09
        %v2112 = vrcp.pop %v2111
        %v2113 = vmul.f32 %v2110, %v2112
        %v2114 = vrot.slane %v2113, 4
        %v2115 = vmax.f32 %v2113, %v2114
        %v2116 = vrot.slane %v2115, 2
        %v2117 = vmax.f32 %v2115, %v2116
        %v2118 = vrot.slane %v2117, 1
        %v2119 = vmax.f32 %v2117, %v2118
        %vm2120 = vcmp.gt.f32.partialorder %v1963, 0.0
        %v2121 = vsel %vm2120, 1.0, 0.0
        %v2122 = vmul.f32 %v1983, %v2121
        %v2123 = vmul.f32 %v2122, %v2119
        %2124 = vxpose.xlu0.b32.start [1/16] %v573, 128
        %2125 = vxpose.xlu0.b32.cont [2/16] 0.0, 128
        %2126 = vxpose.xlu0.b32.cont [3/16] 0.0, 128
        %2127 = vxpose.xlu0.b32.cont [4/16] 0.0, 128
        %2128 = vxpose.xlu0.b32.cont [5/16] 0.0, 128
        %2129 = vxpose.xlu0.b32.cont [6/16] 0.0, 128
        %2130 = vxpose.xlu0.b32.cont [7/16] 0.0, 128
        %2131 = vxpose.xlu0.b32.cont [8/16] 0.0, 128
        %2132 = vxpose.xlu0.b32.cont [9/16] 0.0, 128
        %2133 = vxpose.xlu0.b32.cont [10/16] 0.0, 128
        %2134 = vxpose.xlu0.b32.cont [11/16] 0.0, 128
        %2135 = vxpose.xlu0.b32.cont [12/16] 0.0, 128
        %2136 = vxpose.xlu0.b32.cont [13/16] 0.0, 128
        %2137 = vxpose.xlu0.b32.cont [14/16] 0.0, 128
        %2138 = vxpose.xlu0.b32.cont [15/16] 0.0, 128
        %2139 = vxpose.xlu0.b32.end [16/16] 0.0, 128
        %v2140 = vpop.trf.xlu0
        %v2141 = vpop.trf.xlu0
        %v2142 = vpop.trf.xlu0
        %v2143 = vpop.trf.xlu0
        %v2144 = vpop.trf.xlu0
        %v2145 = vpop.trf.xlu0
        %v2146 = vpop.trf.xlu0
        %v2147 = vpop.trf.xlu0
        %v2148 = vpop.trf.xlu0
        %v2149 = vpop.trf.xlu0
        %v2150 = vpop.trf.xlu0
        %v2151 = vpop.trf.xlu0
        %v2152 = vpop.trf.xlu0
        %v2153 = vpop.trf.xlu0
        %v2154 = vpop.trf.xlu0
        %v2155 = vpop.trf.xlu0
        %v2157 = vsel %vm2029, %v2140, 0
        %v2160 = vsel %vm2029, %v2141, 0
        %v2163 = vsel %vm2029, %v2142, 0
        %v2166 = vsel %vm2029, %v2143, 0
        %v2169 = vsel %vm2029, %v2144, 0
        %v2172 = vsel %vm2029, %v2145, 0
        %v2175 = vsel %vm2029, %v2146, 0
        %v2178 = vsel %vm2029, %v2147, 0
        %v2181 = vsel %vm2029, %v2148, 0
        %v2184 = vsel %vm2029, %v2149, 0
        %2186 = vmatprep.subr.mxu0 0.0
        %2187 = vmatpush1.msra.mxu0 %v2123
        %2188 = vmatprep.subr.mxu0 0.0
        %2189 = vmatpush1.msra.mxu0 0.0
        %2190 = vmatprep.subr.mxu0 0.0
        %2191 = vmatpush1.msra.mxu0 0.0
        %2192 = vmatprep.subr.mxu0 0.0
        %2193 = vmatpush1.msra.mxu0 0.0
        %2194 = vmatprep.subr.mxu0 0.0
        %2195 = vmatpush1.msra.mxu0 0.0
        %2196 = vmatprep.subr.mxu0 0.0
        %2197 = vmatpush1.msra.mxu0 0.0
        %2198 = vmatprep.subr.mxu0 0.0
        %2199 = vmatpush1.msra.mxu0 0.0
        %2200 = vmatprep.subr.mxu0 0.0
        %2201 = vmatpush1.msra.mxu0 0.0
        %2202 = vmatprep.subr.mxu0 0.0
        %2203 = vmatpush1.msra.mxu0 0.0
        %2204 = vmatprep.subr.mxu0 0.0
        %2205 = vmatpush1.msra.mxu0 0.0
        %2206 = vmatprep.subr.mxu0 0.0
        %2207 = vmatpush1.msra.mxu0 0.0
        %2208 = vmatprep.subr.mxu0 0.0
        %2209 = vmatpush1.msra.mxu0 0.0
        %2210 = vmatprep.subr.mxu0 0.0
        %2211 = vmatpush1.msra.mxu0 0.0
        %2212 = vmatprep.subr.mxu0 0.0
        %2213 = vmatpush1.msra.mxu0 0.0
        %2214 = vmatprep.subr.mxu0 0.0
        %2215 = vmatpush1.msra.mxu0 0.0
        %2216 = vmatprep.subr.mxu0 0.0
        %2217 = vmatpush1.msra.mxu0 0.0
        %2218 = vmatprep.subr.mxu0 0.0
        %2219 = vmatpush1.msra.mxu0 0.0
        %2220 = vmatprep.subr.mxu0 0.0
        %2221 = vmatpush1.msra.mxu0 0.0
        %2222 = vmatprep.subr.mxu0 0.0
        %2223 = vmatpush1.msra.mxu0 0.0
        %2224 = vmatprep.subr.mxu0 0.0
        %2225 = vmatpush1.msra.mxu0 0.0
        %2226 = vmatprep.subr.mxu0 0.0
        %2227 = vmatpush1.msra.mxu0 0.0
        %2228 = vmatprep.subr.mxu0 0.0
        %2229 = vmatpush1.msra.mxu0 0.0
        %2230 = vmatprep.subr.mxu0 0.0
        %2231 = vmatpush1.msra.mxu0 0.0
        %2232 = vmatprep.subr.mxu0 0.0
        %2233 = vmatpush1.msra.mxu0 0.0
        %2234 = vmatprep.subr.mxu0 0.0
        %2235 = vmatpush1.msra.mxu0 0.0
        %2236 = vmatprep.subr.mxu0 0.0
        %2237 = vmatpush1.msra.mxu0 0.0
        %2238 = vmatprep.subr.mxu0 0.0
        %2239 = vmatpush1.msra.mxu0 0.0
        %2240 = vmatprep.subr.mxu0 0.0
        %2241 = vmatpush1.msra.mxu0 0.0
        %2242 = vmatprep.subr.mxu0 0.0
        %2243 = vmatpush1.msra.mxu0 0.0
        %2244 = vmatprep.subr.mxu0 0.0
        %2245 = vmatpush1.msra.mxu0 0.0
        %2246 = vmatprep.subr.mxu0 0.0
        %2247 = vmatpush1.msra.mxu0 0.0
        %2248 = vmatprep.subr.mxu0 0.0
        %2249 = vmatpush1.msra.mxu0 0.0
        %2250 = vmatprep.mubr.f32.mxu0 0.0
        %2251 = vmatmul.mubr.f32.gmra.mrb[0].mxu0 %v2157
        %v2252 = vpop.f32.mrb[0].mxu0
        %v2253 = vadd.f32 0.0, %v2252
        %v2254 = vpop.f32.mrb[0].mxu0
        %2255 = vmatprep.mubr.f32.mxu0 0.0
        %2256 = vmatmul.mubr.f32.gmra.mrb[0].mxu0 %v2160
        %v2257 = vpop.f32.mrb[0].mxu0
        %v2258 = vadd.f32 0.0, %v2257
        %v2259 = vpop.f32.mrb[0].mxu0
        %2260 = vmatprep.mubr.f32.mxu0 0.0
        %2261 = vmatmul.mubr.f32.gmra.mrb[0].mxu0 %v2163
        %v2262 = vpop.f32.mrb[0].mxu0
        %v2263 = vadd.f32 0.0, %v2262
        %v2264 = vpop.f32.mrb[0].mxu0
        %2265 = vmatprep.mubr.f32.mxu0 0.0
        %2266 = vmatmul.mubr.f32.gmra.mrb[0].mxu0 %v2166
        %v2267 = vpop.f32.mrb[0].mxu0
        %v2268 = vadd.f32 0.0, %v2267
        %v2269 = vpop.f32.mrb[0].mxu0
        %2270 = vmatprep.mubr.f32.mxu0 0.0
        %2271 = vmatmul.mubr.f32.gmra.mrb[0].mxu0 %v2169
        %v2272 = vpop.f32.mrb[0].mxu0
        %v2273 = vadd.f32 0.0, %v2272
        %v2274 = vpop.f32.mrb[0].mxu0
        %2275 = vmatprep.mubr.f32.mxu0 0.0
        %2276 = vmatmul.mubr.f32.gmra.mrb[0].mxu0 %v2172
        %v2277 = vpop.f32.mrb[0].mxu0
        %v2278 = vadd.f32 0.0, %v2277
        %v2279 = vpop.f32.mrb[0].mxu0
        %2280 = vmatprep.mubr.f32.mxu0 0.0
        %2281 = vmatmul.mubr.f32.gmra.mrb[0].mxu0 %v2175
        %v2282 = vpop.f32.mrb[0].mxu0
        %v2283 = vadd.f32 0.0, %v2282
        %v2284 = vpop.f32.mrb[0].mxu0
        %2285 = vmatprep.mubr.f32.mxu0 0.0
        %2286 = vmatmul.mubr.f32.gmra.mrb[0].mxu0 %v2178
        %v2287 = vpop.f32.mrb[0].mxu0
        %v2288 = vadd.f32 0.0, %v2287
        %v2289 = vpop.f32.mrb[0].mxu0
        %2290 = vmatprep.mubr.f32.mxu0 0.0
        %2291 = vmatmul.mubr.f32.gmra.mrb[0].mxu0 %v2181
        %v2292 = vpop.f32.mrb[0].mxu0
        %v2293 = vadd.f32 0.0, %v2292
        %v2294 = vpop.f32.mrb[0].mxu0
        %2295 = vmatprep.mubr.f32.mxu0 0.0
        %2296 = vmatmul.mubr.f32.gmra.mrb[0].mxu0 %v2184
        %v2297 = vpop.f32.mrb[0].mxu0
        %v2298 = vadd.f32 0.0, %v2297
        %v2299 = vpop.f32.mrb[0].mxu0
        %2300 = vdwg.mxu0
        %2301 = vst [vmem:[%s439] sm:$0xff] %v2253
        %2302 = vst [vmem:[%s439 + $0x8] sm:$0xff] %v2258
        %2303 = vst [vmem:[%s439 + $0x10] sm:$0xff] %v2263
        %2304 = vst [vmem:[%s439 + $0x18] sm:$0xff] %v2268
        %2305 = vst [vmem:[%s439 + $0x20] sm:$0xff] %v2273
        %2306 = vst [vmem:[%s439 + $0x28] sm:$0xff] %v2278
        %2307 = vst [vmem:[%s439 + $0x30] sm:$0xff] %v2283
        %2308 = vst [vmem:[%s439 + $0x38] sm:$0xff] %v2288
        %2309 = vst [vmem:[%s439 + $0x40] sm:$0xff] %v2293
        %2310 = vst [vmem:[%s439 + $0x48] sm:$0xff] %v2298
        %v2311 = vcvt.f32.s32.ties.to.even %v1996
        %v2312 = vcvt.f32.s32.ties.to.even %v1963
        %vm2313 = vcmp.eq.s32.totalorder %v480, 0
        %vm2314 = vcmp.eq.s32.totalorder %v480, 1
        %v2315 = vsel %vm2314, %v2312, %v1980
        %v2316 = vsel %vm2313, %v2311, %v2315
        %2317 = vst [vmem:[%s477] sm:$0x7] %v2316
        %s2318 = sand.u32 %s239, 1
        %s2319 = scalar_lea.sflag [#allocation3], %s2318
        %s2320 = sand.u32 %s239, 1
        %s2321 = smul.addr %s2320, 4
        %s2322 = scalar_lea.vmem [#allocation2], %s2321
        %s2323 = sand.u32 %s265, 1
        %s2324 = scalar_lea.sflag [#allocation5], %s2323
        %s2325 = sand.u32 %s265, 1
        %s2326 = smul.addr %s2325, 80
        %s2327 = scalar_lea.vmem [#allocation4], %s2326
        %p2328 = scmp.lt.s32.totalorder %s28, 1
        %s2329 = scalar_select %p2328, %s28, 1
        %s2330 = smul.addr %s2329, 4
        %s2331 = scalar_lea.vmem %s10, %s2330
        // Predicated region
        $region53: #{tpu_custom_call.1} parent=51 // pred_check
          %p2332 = pneg %p249
        $region54: #{tpu_custom_call.1} parent=51 // pred_check_branch
          %2334 = sbr.rel (%p2332) target = $region56
        $region55: #{tpu_custom_call.1} parent=51 // pred_region
          %s2336 = ssub.s32 64, 64
          %2337 = vsyncadd %s2319, %s2336
          %s2338 = smul.addr %s28, 64
          %s2339 = scalar_lea.hbm %s8, %s2338
          %s2341 = sshll.u32 %s2322, 4
          %s2342 = int_to_ptr.vmem [resolvable:$true] %s2341
          %2344 = dma.vmem_to_hbm [thread:$0]  %s2342, 64, %s2339, %s2319
        $region56: #{tpu_custom_call.1} parent=51 // pred_fallthru
          _
        // Predicated region
        $region57: #{tpu_custom_call.1} parent=51 // pred_check
          %p2345 = pneg %p275
        $region58: #{tpu_custom_call.1} parent=51 // pred_check_branch
          %2347 = sbr.rel (%p2345) target = $region60
        $region59: #{tpu_custom_call.1} parent=51 // pred_region
          %s2349 = ssub.s32 1280, 1280
          %2350 = vsyncadd %s2324, %s2349
          %s2351 = smul.addr %s28, 10
          %s2352 = smul.addr %s2351, 128
          %s2353 = scalar_lea.hbm %s9, %s2352
          %s2354 = sshll.u32 %s2327, 4
          %s2355 = int_to_ptr.vmem [resolvable:$true] %s2354
          %2360 = dma.vmem_to_hbm [thread:$0]  %s2355, 1280, %s2353, %s2324, 128, 128, 8
        $region60: #{tpu_custom_call.1} parent=51 // pred_fallthru
          _
        // Predicated region
        $region61: #{tpu_custom_call.1} parent=51 // pred_check
          %p2361 = pneg %p301
        $region62: #{tpu_custom_call.1} parent=51 // pred_check_branch
          %2363 = sbr.rel (%p2361) target = $region64
        $region63: #{tpu_custom_call.1} parent=51 // pred_region
          _
        $region64: #{tpu_custom_call.1} parent=51 // pred_fallthru
          _
      $region52: #{tpu_custom_call.1} parent=5 // pred_fallthru
        _
      %p2364 = scmp.le.s32.totalorder 2, %s23
      // Predicated region
      $region65: #{tpu_custom_call.1} parent=5 // pred_check
        %p2365 = pneg %p2364
      $region66: #{tpu_custom_call.1} parent=5 // pred_check_branch
        %2367 = sbr.rel (%p2365) target = $region68
      $region67: #{tpu_custom_call.1} parent=5 // pred_region
        %s2368 = ssub.s32 %s23, 2
        // Predicated region
        $region69: #{tpu_custom_call.1} parent=67 // pred_check
          %p2369 = pneg %p255
        $region70: #{tpu_custom_call.1} parent=67 // pred_check_branch
          %2371 = sbr.rel (%p2369) target = $region72
        $region71: #{tpu_custom_call.1} parent=67 // pred_region
          %s2372 = sand.u32 %s240, 1
          %s2373 = scalar_lea.sflag [#allocation3], %s2372
          %s2374 = sand.u32 %s240, 1
          %s2375 = smul.addr %s2374, 4
          %s2376 = scalar_lea.vmem [#allocation2], %s2375
          %2377 = dma.done %s2373, 64
        $region72: #{tpu_custom_call.1} parent=67 // pred_fallthru
          _
        // Predicated region
        $region73: #{tpu_custom_call.1} parent=67 // pred_check
          %p2378 = pneg %p281
        $region74: #{tpu_custom_call.1} parent=67 // pred_check_branch
          %2380 = sbr.rel (%p2378) target = $region76
        $region75: #{tpu_custom_call.1} parent=67 // pred_region
          %s2381 = sand.u32 %s266, 1
          %s2382 = scalar_lea.sflag [#allocation5], %s2381
          %s2383 = sand.u32 %s266, 1
          %s2384 = smul.addr %s2383, 80
          %s2385 = scalar_lea.vmem [#allocation4], %s2384
          %2386 = dma.done %s2382, 1280
        $region76: #{tpu_custom_call.1} parent=67 // pred_fallthru
          _
        // Predicated region
        $region77: #{tpu_custom_call.1} parent=67 // pred_check
          %p2387 = pneg %p307
        $region78: #{tpu_custom_call.1} parent=67 // pred_check_branch
          %2389 = sbr.rel (%p2387) target = $region80
        $region79: #{tpu_custom_call.1} parent=67 // pred_region
          %p2390 = scmp.lt.s32.totalorder %s29, 1
          %s2391 = scalar_select %p2390, %s29, 1
          %s2392 = smul.addr %s2391, 4
          %s2393 = scalar_lea.vmem %s10, %s2392
        $region80: #{tpu_custom_call.1} parent=67 // pred_fallthru
          _
      $region68: #{tpu_custom_call.1} parent=5 // pred_fallthru
        _
    $region6: #{tpu_custom_call.1} parent=1 // loop_footer
      %s27 = sadd.s32 1, %s23
    $region7: #{tpu_custom_call.1} parent=1 // loop_footer_branch
      %22 = sbr.rel target = $region3
    $region8: #{tpu_custom_call.1} parent=1 // loop_exit
      _
    %2394 = vsyncpa [#allocation3], 1
    %s2395 = scalar_lea.sflag [#allocation3], 1
    %2396 = vsyncpa %s2395, 1
    %2397 = vsyncpa [#allocation5], 1
    %s2398 = scalar_lea.sflag [#allocation5], 1
    %2399 = vsyncpa %s2398, 1

</llo_original>
